<compile_context>
chip_gen: v7x
topology: tpu7x:2x2x1
jax: 0.10.0
libtpu: 0.0.40
codegen_flags: <defaults>
</compile_context>

<pallas_src>
import functools
import math

import jax
import jax.numpy as jnp
from jax import lax
from jax.experimental import pallas as pl
from jax.experimental.pallas import tpu as pltpu


# ----------------------------------------------------------------------------
# Fused encoder + heads kernel.  grid = (batch_blocks, n_layers)
# ----------------------------------------------------------------------------

def _encoder_kernel(
    # ---- inputs ----
    h0_ref,
    wqkv_ref, bqkv_ref, wo_ref, bo_ref,
    ln1_g_ref, ln1_b_ref, w1_ref, b1_ref, w2_ref, b2_ref, ln2_g_ref, ln2_b_ref,
    pred_w1_ref, pred_b1_ref, pred_w2_ref, pred_b2_ref,
    unc_w1_ref, unc_b1_ref, unc_w2_ref, unc_b2_ref,
    conf_w1_ref, conf_b1_ref, conf_w2_ref, conf_b2_ref,
    # ---- outputs ----
    out_ref,
    # ---- scratch ----
    h_scratch,
    *, tb, seq_len, d_model, n_heads, n_layers, n_out, out_pad, eps,
):
    li = pl.program_id(1)
    dk = d_model // n_heads
    scale = 1.0 / math.sqrt(dk)

    def mm(a, w, b):
        # bf16 operands into the MXU, f32 accumulation, f32 bias add.
        y = jnp.dot(a.astype(jnp.bfloat16), w.astype(jnp.bfloat16),
                    preferred_element_type=jnp.float32)
        return y + b

    def layernorm(z, g, b):
        mu = jnp.mean(z, axis=-1, keepdims=True)
        var = jnp.mean(jnp.square(z - mu), axis=-1, keepdims=True)
        return (z - mu) * lax.rsqrt(var + eps) * g + b

    # ---- layer 0: load (projected + PE'd) activation into the VMEM carry ----
    @pl.when(li == 0)
    def _():
        h_scratch[...] = h0_ref[...].reshape(tb * seq_len, d_model)

    h = h_scratch[...]                                        # (tb*S, D) f32

    # ---- fused Q/K/V projection (one MXU pass over a 3*D output) ----
    qkv = mm(h, wqkv_ref[...], bqkv_ref[...])                 # (tb*S, 3D)
    q = qkv[:, 0 * d_model:1 * d_model]
    k = qkv[:, 1 * d_model:2 * d_model]
    v = qkv[:, 2 * d_model:3 * d_model]

    # ---- multi-head attention: per-head loop, batched over tb via rank-3
    #      einsums (n_heads is small; tb*n_heads unroll eliminated). ----
    ctx_parts = []
    for hh in range(n_heads):
        c0 = hh * dk
        qh = q[:, c0:c0 + dk].reshape(tb, seq_len, dk)
        kh = k[:, c0:c0 + dk].reshape(tb, seq_len, dk)
        vh = v[:, c0:c0 + dk].reshape(tb, seq_len, dk)
        s = jnp.einsum('bqd,bkd->bqk',
                       qh.astype(jnp.bfloat16), kh.astype(jnp.bfloat16),
                       preferred_element_type=jnp.float32) * scale
        m = jnp.max(s, axis=-1, keepdims=True)
        p = jnp.exp(s - m)
        p = p * pl.reciprocal(jnp.sum(p, axis=-1, keepdims=True), approx=True)
        ch = jnp.einsum('bqk,bkd->bqd',
                        p.astype(jnp.bfloat16), vh.astype(jnp.bfloat16),
                        preferred_element_type=jnp.float32)
        ctx_parts.append(ch.reshape(tb * seq_len, dk))
    ctx = ctx_parts[0] if n_heads == 1 else jnp.concatenate(ctx_parts, axis=-1)

    attn_out = mm(ctx, wo_ref[...], bo_ref[...])              # (tb*S, D)

    # residual + LayerNorm 1
    h1 = layernorm(h + attn_out, ln1_g_ref[...], ln1_b_ref[...])

    # feed-forward: Linear -> ReLU -> Linear   (dropout = identity, eval mode)
    ff = jnp.maximum(mm(h1, w1_ref[...], b1_ref[...]), 0.0)
    ff = mm(ff, w2_ref[...], b2_ref[...])

    # residual + LayerNorm 2 -> carry to next layer
    h2 = layernorm(h1 + ff, ln2_g_ref[...], ln2_b_ref[...])
    h_scratch[...] = h2

    # ---- last layer: mean pool + three prediction heads, packed lane-dense --
    @pl.when(li == n_layers - 1)
    def _():
        pooled = jnp.mean(h2.reshape(tb, seq_len, d_model), axis=1)   # (tb, D)

        # prediction head: Linear -> ReLU -> Linear
        ph = jnp.maximum(mm(pooled, pred_w1_ref[...], pred_b1_ref[...]), 0.0)
        pred = mm(ph, pred_w2_ref[...], pred_b2_ref[...])

        # uncertainty head: Linear -> ReLU -> Linear -> Softplus(beta=1, thr=20)
        uh = jnp.maximum(mm(pooled, unc_w1_ref[...], unc_b1_ref[...]), 0.0)
        unc = mm(uh, unc_w2_ref[...], unc_b2_ref[...])
        unc = jnp.where(unc > 20.0, unc,
                        jnp.log(1.0 + jnp.exp(jnp.minimum(unc, 20.0))))

        # confidence head: Linear -> ReLU -> Linear -> Sigmoid
        chd = jnp.maximum(mm(pooled, conf_w1_ref[...], conf_b1_ref[...]), 0.0)
        cz = mm(chd, conf_w2_ref[...], conf_b2_ref[...])
        conf = 1.0 / (1.0 + jnp.exp(-cz))

        packed = jnp.concatenate([pred, unc, conf], axis=-1)  # (tb, 2*n_out+1)
        pad_w = out_pad - (2 * n_out + 1)
        if pad_w > 0:
            packed = jnp.concatenate(
                [packed, jnp.zeros((tb, pad_w), jnp.float32)], axis=-1)
        out_ref[...] = packed.reshape(tb, 1, out_pad)


# ----------------------------------------------------------------------------
# Wrapper: one pallas_call for the whole encoder + heads
# ----------------------------------------------------------------------------

def _pick_batch_block(batch, seq_len, target_rows=256):
    """Largest batch block keeping >=2 batch grid steps and <= ~target rows."""
    divisors = [t for t in range(1, batch + 1) if batch % t == 0]
    preferred = [t for t in divisors if batch // t >= 2] or divisors
    fitting = [t for t in preferred if t * seq_len <= max(target_rows, seq_len)]
    return max(fitting) if fitting else min(preferred)


def market_transformer_forward(params, x, cfg, batch_block=None):
    """x: (B, S, input_dim) float32 -> dict(predictions, uncertainty, confidence)."""
    B, S, _ = x.shape
    D = cfg["d_model"]
    F = cfg["d_ff"]
    H = cfg["n_heads"]
    L = cfg["n_layers"]
    n_out = cfg["n_outputs"]

    tb = batch_block if batch_block is not None else _pick_batch_block(B, S)
    assert B % tb == 0
    nb = B // tb

    out_w = 2 * n_out + 1
    out_pad = ((out_w + 127) // 128) * 128        # lane-dense packed output

    # Input projection (K = input_dim is tiny -> do it in XLA) + positional
    # encoding + dropout(identity).  Residual stream enters the kernel as f32.
    h0 = (jnp.dot(x, params["in_w"]) + params["in_b"]
          + params["pe"][None, :S, :]).astype(jnp.float32)    # (B, S, D)

    layer_params = [
        params["wqkv"], params["bqkv"], params["wo"], params["bo"],
        params["ln1_g"], params["ln1_b"],
        params["w1"], params["b1"], params["w2"], params["b2"],
        params["ln2_g"], params["ln2_b"],
    ]
    head_params = [
        params["pred_w1"], params["pred_b1"], params["pred_w2"], params["pred_b2"],
        params["unc_w1"], params["unc_b1"], params["unc_w2"], params["unc_b2"],
        params["conf_w1"], params["conf_b1"], params["conf_w2"], params["conf_b2"],
    ]

    in_specs = [pl.BlockSpec((tb, S, D), lambda i, li: (i, 0, 0))]
    # per-layer streamed weights: block (1, a, b) at layer index li
    in_specs += [pl.BlockSpec((None,) + p.shape[1:], lambda i, li: (li, 0, 0))
                 for p in layer_params]
    # head weights: full arrays, constant block index (fetched once, resident)
    in_specs += [pl.BlockSpec(p.shape, lambda i, li: (0, 0)) for p in head_params]

    out_shape = jax.ShapeDtypeStruct((B, 1, out_pad), jnp.float32)
    out_specs = pl.BlockSpec((tb, 1, out_pad), lambda i, li: (i, 0, 0))

    # --- VMEM budget (per-step working set, double-buffered streams) ---
    per_layer_bytes = sum(p.nbytes for p in layer_params) // L
    head_bytes = sum(p.nbytes for p in head_params)
    act_rows = tb * S
    act_bytes = 4 * act_rows * (6 * D + F) + 4 * tb * H * S * S
    io_bytes = 4 * tb * S * D + 4 * tb * out_pad
    est = (2 * per_layer_bytes + 2 * head_bytes + 2 * io_bytes
           + 4 * act_rows * D + act_bytes)
    vmem_limit = int(min(max(2 * est + (8 << 20), 32 << 20), 64 << 20))

    # --- advisory cost estimate for the XLA scheduler ---
    dk = D // H
    flops = (2 * B * S * L * (D * 3 * D + D * D + 2 * D * F)
             + 4 * B * L * H * S * S * dk
             + 2 * B * (2 * (D * (D // 2) + (D // 2) * n_out)
                        + D * (D // 4) + (D // 4)))
    transcendentals = B * L * H * S * S + 3 * B * max(n_out, 1)
    bytes_accessed = (sum(p.nbytes for p in layer_params) * nb
                      + head_bytes + h0.nbytes + B * out_pad * 4)
    cost = pl.CostEstimate(flops=int(flops),
                           transcendentals=int(transcendentals),
                           bytes_accessed=int(bytes_accessed))

    kernel = functools.partial(
        _encoder_kernel,
        tb=tb, seq_len=S, d_model=D, n_heads=H, n_layers=L,
        n_out=n_out, out_pad=out_pad, eps=1e-5,
    )

    packed = pl.pallas_call(
        kernel,
        grid=(nb, L),
        in_specs=in_specs,
        out_specs=out_specs,
        out_shape=out_shape,
        scratch_shapes=[pltpu.VMEM((tb * S, D), jnp.float32)],
        compiler_params=pltpu.CompilerParams(
            dimension_semantics=("parallel", "arbitrary"),
            vmem_limit_bytes=vmem_limit),
        cost_estimate=cost,
    )(h0, *layer_params, *head_params)

    packed = packed.reshape(B, out_pad)
    return {
        "predictions": packed[:, :n_out],
        "uncertainty": packed[:, n_out:2 * n_out],
        "confidence": packed[:, 2 * n_out:2 * n_out + 1],
    }


# ----------------------------------------------------------------------------
# Parameter init (deterministic, synthetic; layer weights stacked along L;
# matmul weights stored bf16, biases / LN / PE kept f32)
# ----------------------------------------------------------------------------

def make_positional_encoding(max_len, d_model):
    position = jnp.arange(max_len, dtype=jnp.float32)[:, None]
    div_term = jnp.exp(
        jnp.arange(0, d_model, 2, dtype=jnp.float32)
        * (-math.log(10000.0) / d_model))
    pe = jnp.zeros((max_len, d_model), jnp.float32)
    pe = pe.at[:, 0::2].set(jnp.sin(position * div_term))
    pe = pe.at[:, 1::2].set(jnp.cos(position * div_term))
    return pe


def init_params(key, cfg):
    D, F, L = cfg["d_model"], cfg["d_ff"], cfg["n_layers"]
    Din, n_out = cfg["input_dim"], cfg["n_outputs"]
    keys = jax.random.split(key, 2 + L)

    def lin(k, fi, fo, dtype=jnp.bfloat16):
        w = (jax.random.normal(k, (fi, fo), jnp.float32) * 0.02).astype(dtype)
        b = jnp.zeros((1, fo), jnp.float32)
        return w, b

    p = {}
    p["in_w"], p["in_b"] = lin(keys[0], Din, D, dtype=jnp.float32)  # XLA side
    p["pe"] = make_positional_encoding(cfg["max_seq_len"], D)

    wqkv, bqkv, wo, bo = [], [], [], []
    ln1g, ln1b, ln2g, ln2b = [], [], [], []
    w1, b1, w2, b2 = [], [], [], []
    for li in range(L):
        lk = jax.random.split(keys[1 + li], 6)
        wq, _ = lin(lk[0], D, D)
        wk, _ = lin(lk[1], D, D)
        wv, _ = lin(lk[2], D, D)
        wqkv.append(jnp.concatenate([wq, wk, wv], axis=1))          # (D, 3D)
        bqkv.append(jnp.zeros((1, 3 * D), jnp.float32))
        w, b = lin(lk[3], D, D); wo.append(w); bo.append(b)
        ln1g.append(jnp.ones((1, D), jnp.float32))
        ln1b.append(jnp.zeros((1, D), jnp.float32))
        ln2g.append(jnp.ones((1, D), jnp.float32))
        ln2b.append(jnp.zeros((1, D), jnp.float32))
        w, b = lin(lk[4], D, F); w1.append(w); b1.append(b)
        w, b = lin(lk[5], F, D); w2.append(w); b2.append(b)

    stack = lambda xs: jnp.stack(xs, axis=0)
    p["wqkv"], p["bqkv"] = stack(wqkv), stack(bqkv)
    p["wo"], p["bo"] = stack(wo), stack(bo)
    p["ln1_g"], p["ln1_b"] = stack(ln1g), stack(ln1b)
    p["ln2_g"], p["ln2_b"] = stack(ln2g), stack(ln2b)
    p["w1"], p["b1"] = stack(w1), stack(b1)
    p["w2"], p["b2"] = stack(w2), stack(b2)

    hk = jax.random.split(keys[-1], 6)
    p["pred_w1"], p["pred_b1"] = lin(hk[0], D, D // 2)
    p["pred_w2"], p["pred_b2"] = lin(hk[1], D // 2, n_out)
    p["unc_w1"], p["unc_b1"] = lin(hk[2], D, D // 2)
    p["unc_w2"], p["unc_b2"] = lin(hk[3], D // 2, n_out)
    p["conf_w1"], p["conf_b1"] = lin(hk[4], D, D // 4)
    p["conf_w2"], p["conf_b2"] = lin(hk[5], D // 4, 1)
    return p


# ----------------------------------------------------------------------------
# Main
# ----------------------------------------------------------------------------

if __name__ == "__main__":
    cfg = dict(
        input_dim=4,
        d_model=32,
        n_heads=4,
        n_layers=2,
        d_ff=64,
        max_seq_len=16,
        n_outputs=1,
    )
    B, S = 8, 8

    key = jax.random.PRNGKey(0)
    pkey, xkey = jax.random.split(key)
    params = init_params(pkey, cfg)
    x = jax.random.normal(xkey, (B, S, cfg["input_dim"]), jnp.float32)

    fwd = jax.jit(functools.partial(market_transformer_forward, cfg=cfg))
    out = fwd(params, x)
    jax.block_until_ready(out)

    assert out["predictions"].shape == (B, cfg["n_outputs"])
    assert out["uncertainty"].shape == (B, cfg["n_outputs"])
    assert out["confidence"].shape == (B, 1)
    assert bool(jnp.all(out["uncertainty"] >= 0.0))
    assert bool(jnp.all((out["confidence"] >= 0.0) & (out["confidence"] <= 1.0)))
    assert all(bool(jnp.all(jnp.isfinite(v))) for v in out.values())

    print("KERNEL_OK")
</pallas_src>

<mosaic_0001>
module attributes {stable_mosaic.version = 11 : i64} {
  func.func @_encoder_kernel(%arg0: i32, %arg1: i32, %arg2: memref<4x8x32xf32, #tpu.memory_space<vmem>>, %arg3: memref<1x32x96xbf16, #tpu.memory_space<vmem>>, %arg4: memref<1x1x96xf32, #tpu.memory_space<vmem>>, %arg5: memref<1x32x32xbf16, #tpu.memory_space<vmem>>, %arg6: memref<1x1x32xf32, #tpu.memory_space<vmem>>, %arg7: memref<1x1x32xf32, #tpu.memory_space<vmem>>, %arg8: memref<1x1x32xf32, #tpu.memory_space<vmem>>, %arg9: memref<1x32x64xbf16, #tpu.memory_space<vmem>>, %arg10: memref<1x1x64xf32, #tpu.memory_space<vmem>>, %arg11: memref<1x64x32xbf16, #tpu.memory_space<vmem>>, %arg12: memref<1x1x32xf32, #tpu.memory_space<vmem>>, %arg13: memref<1x1x32xf32, #tpu.memory_space<vmem>>, %arg14: memref<1x1x32xf32, #tpu.memory_space<vmem>>, %arg15: memref<32x16xbf16, #tpu.memory_space<vmem>>, %arg16: memref<1x16xf32, #tpu.memory_space<vmem>>, %arg17: memref<16x1xbf16, #tpu.memory_space<vmem>>, %arg18: memref<1x1xf32, #tpu.memory_space<vmem>>, %arg19: memref<32x16xbf16, #tpu.memory_space<vmem>>, %arg20: memref<1x16xf32, #tpu.memory_space<vmem>>, %arg21: memref<16x1xbf16, #tpu.memory_space<vmem>>, %arg22: memref<1x1xf32, #tpu.memory_space<vmem>>, %arg23: memref<32x8xbf16, #tpu.memory_space<vmem>>, %arg24: memref<1x8xf32, #tpu.memory_space<vmem>>, %arg25: memref<8x1xbf16, #tpu.memory_space<vmem>>, %arg26: memref<1x1xf32, #tpu.memory_space<vmem>>, %arg27: memref<4x1x128xf32, #tpu.memory_space<vmem>>, %arg28: memref<32x32xf32, #tpu.memory_space<vmem>>) attributes {dimension_semantics = [#tpu.dimension_semantics<parallel>, #tpu.dimension_semantics<arbitrary>], iteration_bounds = array<i64: 2, 2>, scalar_prefetch = 0 : i64, scratch_operands = 1 : i64, tpu.core_type = #tpu.core_type<tc>, window_params = [{transform_indices = @transform_0, window_bounds = array<i64: 4, 8, 32>}, {transform_indices = @transform_1, window_bounds = array<i64: 1, 32, 96>}, {transform_indices = @transform_2, window_bounds = array<i64: 1, 1, 96>}, {transform_indices = @transform_3, window_bounds = array<i64: 1, 32, 32>}, {transform_indices = @transform_4, window_bounds = array<i64: 1, 1, 32>}, {transform_indices = @transform_5, window_bounds = array<i64: 1, 1, 32>}, {transform_indices = @transform_6, window_bounds = array<i64: 1, 1, 32>}, {transform_indices = @transform_7, window_bounds = array<i64: 1, 32, 64>}, {transform_indices = @transform_8, window_bounds = array<i64: 1, 1, 64>}, {transform_indices = @transform_9, window_bounds = array<i64: 1, 64, 32>}, {transform_indices = @transform_10, window_bounds = array<i64: 1, 1, 32>}, {transform_indices = @transform_11, window_bounds = array<i64: 1, 1, 32>}, {transform_indices = @transform_12, window_bounds = array<i64: 1, 1, 32>}, {pipeline_mode = #tpu.pipeline_mode<synchronous>, transform_indices = @transform_13, window_bounds = array<i64: 32, 16>}, {pipeline_mode = #tpu.pipeline_mode<synchronous>, transform_indices = @transform_14, window_bounds = array<i64: 1, 16>}, {pipeline_mode = #tpu.pipeline_mode<synchronous>, transform_indices = @transform_15, window_bounds = array<i64: 16, 1>}, {pipeline_mode = #tpu.pipeline_mode<synchronous>, transform_indices = @transform_16, window_bounds = array<i64: 1, 1>}, {pipeline_mode = #tpu.pipeline_mode<synchronous>, transform_indices = @transform_17, window_bounds = array<i64: 32, 16>}, {pipeline_mode = #tpu.pipeline_mode<synchronous>, transform_indices = @transform_18, window_bounds = array<i64: 1, 16>}, {pipeline_mode = #tpu.pipeline_mode<synchronous>, transform_indices = @transform_19, window_bounds = array<i64: 16, 1>}, {pipeline_mode = #tpu.pipeline_mode<synchronous>, transform_indices = @transform_20, window_bounds = array<i64: 1, 1>}, {pipeline_mode = #tpu.pipeline_mode<synchronous>, transform_indices = @transform_21, window_bounds = array<i64: 32, 8>}, {pipeline_mode = #tpu.pipeline_mode<synchronous>, transform_indices = @transform_22, window_bounds = array<i64: 1, 8>}, {pipeline_mode = #tpu.pipeline_mode<synchronous>, transform_indices = @transform_23, window_bounds = array<i64: 8, 1>}, {pipeline_mode = #tpu.pipeline_mode<synchronous>, transform_indices = @transform_24, window_bounds = array<i64: 1, 1>}, {transform_indices = @transform_25, window_bounds = array<i64: 4, 1, 128>}]} {
    %c0_i32 = arith.constant 0 : i32
    %0 = arith.cmpi eq, %arg1, %c0_i32 : i32
    %1 = arith.extui %0 : i1 to i32
    %c0_i32_0 = arith.constant 0 : i32
    %2 = arith.cmpi ne, %1, %c0_i32_0 : i32
    scf.if %2 {
      %c0_75 = arith.constant 0 : index
      %c0_76 = arith.constant 0 : index
      %c0_77 = arith.constant 0 : index
      %200 = vector.load %arg2[%c0_75, %c0_76, %c0_77] : memref<4x8x32xf32, #tpu.memory_space<vmem>>, vector<4x8x32xf32>
      %201 = vector.shape_cast %200 : vector<4x8x32xf32> to vector<32x32xf32>
      %c0_78 = arith.constant 0 : index
      %c0_79 = arith.constant 0 : index
      %202 = vector.load %arg28[%c0_78, %c0_79] : memref<32x32xf32, #tpu.memory_space<vmem>>, vector<32x32xf32>
      tpu.vector_store %arg28[%c0_78, %c0_79], %201 {strides = array<i32>} : memref<32x32xf32, #tpu.memory_space<vmem>>, vector<32x32xf32>,
    } else {
    }
    %c0 = arith.constant 0 : index
    %c0_1 = arith.constant 0 : index
    %3 = vector.load %arg28[%c0, %c0_1] : memref<32x32xf32, #tpu.memory_space<vmem>>, vector<32x32xf32>
    %c0_2 = arith.constant 0 : index
    %c0_3 = arith.constant 0 : index
    %c0_4 = arith.constant 0 : index
    %4 = vector.load %arg3[%c0_2, %c0_3, %c0_4] : memref<1x32x96xbf16, #tpu.memory_space<vmem>>, vector<1x32x96xbf16>
    %5 = vector.shape_cast %4 : vector<1x32x96xbf16> to vector<32x96xbf16>
    %c0_5 = arith.constant 0 : index
    %c0_6 = arith.constant 0 : index
    %c0_7 = arith.constant 0 : index
    %6 = vector.load %arg4[%c0_5, %c0_6, %c0_7] : memref<1x1x96xf32, #tpu.memory_space<vmem>>, vector<1x1x96xf32>
    %7 = vector.shape_cast %6 : vector<1x1x96xf32> to vector<1x96xf32>
    %8 = arith.truncf %3 : vector<32x32xf32> to vector<32x32xbf16>
    %cst = arith.constant dense<0.000000e+00> : vector<32x96xf32>
    %9 = tpu.matmul %8, %5, %cst {dimension_numbers = #tpu.dot_dimension_numbers<[1], [0], [0], [1], [0, 0, 1, 1], [], []>} : vector<32x32xbf16>, vector<32x96xbf16>, vector<32x96xf32> -> vector<32x96xf32>
    %10 = vector.broadcast %7 : vector<1x96xf32> to vector<32x96xf32>
    %11 = arith.addf %9, %10 : vector<32x96xf32>
    %12 = vector.extract_strided_slice %11 {offsets = [0, 0], sizes = [32, 32], strides = [1, 1]} : vector<32x96xf32> to vector<32x32xf32>
    %13 = vector.extract_strided_slice %11 {offsets = [0, 32], sizes = [32, 32], strides = [1, 1]} : vector<32x96xf32> to vector<32x32xf32>
    %14 = vector.extract_strided_slice %11 {offsets = [0, 64], sizes = [32, 32], strides = [1, 1]} : vector<32x96xf32> to vector<32x32xf32>
    %15 = vector.extract_strided_slice %12 {offsets = [0, 0], sizes = [32, 8], strides = [1, 1]} : vector<32x32xf32> to vector<32x8xf32>
    %16 = vector.shape_cast %15 : vector<32x8xf32> to vector<4x8x8xf32>
    %17 = vector.extract_strided_slice %13 {offsets = [0, 0], sizes = [32, 8], strides = [1, 1]} : vector<32x32xf32> to vector<32x8xf32>
    %18 = vector.shape_cast %17 : vector<32x8xf32> to vector<4x8x8xf32>
    %19 = vector.extract_strided_slice %14 {offsets = [0, 0], sizes = [32, 8], strides = [1, 1]} : vector<32x32xf32> to vector<32x8xf32>
    %20 = vector.shape_cast %19 : vector<32x8xf32> to vector<4x8x8xf32>
    %21 = arith.truncf %16 : vector<4x8x8xf32> to vector<4x8x8xbf16>
    %22 = arith.truncf %18 : vector<4x8x8xf32> to vector<4x8x8xbf16>
    "tpu.trace_start"() <{level = 10 : i32, message = "bqd,bkd->bqk"}> : () -> ()
    %cst_8 = arith.constant dense<0.000000e+00> : vector<4x8x8xf32>
    %23 = tpu.matmul %21, %22, %cst_8 {dimension_numbers = #tpu.dot_dimension_numbers<[2], [2], [1], [1], [0, 0, 0, 1, 1, 1], [0], [0]>} : vector<4x8x8xbf16>, vector<4x8x8xbf16>, vector<4x8x8xf32> -> vector<4x8x8xf32>
    "tpu.trace_stop"() : () -> ()
    %cst_9 = arith.constant 0.353553385 : f32
    %24 = vector.broadcast %cst_9 : f32 to vector<4x8x8xf32>
    %25 = arith.mulf %23, %24 : vector<4x8x8xf32>
    %cst_10 = arith.constant dense<0xFF800000> : vector<4x8xf32>
    %26 = vector.multi_reduction <maximumf>, %25, %cst_10 [2] : vector<4x8x8xf32> to vector<4x8xf32>
    %27 = vector.shape_cast %26 : vector<4x8xf32> to vector<4x8x1xf32>
    %28 = vector.broadcast %27 : vector<4x8x1xf32> to vector<4x8x8xf32>
    %29 = arith.subf %25, %28 : vector<4x8x8xf32>
    %30 = math.exp %29 : vector<4x8x8xf32>
    %cst_11 = arith.constant dense<0.000000e+00> : vector<4x8xf32>
    %31 = vector.multi_reduction <add>, %30, %cst_11 [2] : vector<4x8x8xf32> to vector<4x8xf32>
    %32 = vector.shape_cast %31 : vector<4x8xf32> to vector<4x8x1xf32>
    %33 = tpu.reciprocal %32 {approx = true} : vector<4x8x1xf32> -> vector<4x8x1xf32>
    %34 = vector.broadcast %33 : vector<4x8x1xf32> to vector<4x8x8xf32>
    %35 = arith.mulf %30, %34 : vector<4x8x8xf32>
    %36 = arith.truncf %35 : vector<4x8x8xf32> to vector<4x8x8xbf16>
    %37 = arith.truncf %20 : vector<4x8x8xf32> to vector<4x8x8xbf16>
    "tpu.trace_start"() <{level = 10 : i32, message = "bqk,bkd->bqd"}> : () -> ()
    %cst_12 = arith.constant dense<0.000000e+00> : vector<4x8x8xf32>
    %38 = tpu.matmul %36, %37, %cst_12 {dimension_numbers = #tpu.dot_dimension_numbers<[2], [1], [1], [2], [0, 0, 0, 1, 1, 2], [0], [0]>} : vector<4x8x8xbf16>, vector<4x8x8xbf16>, vector<4x8x8xf32> -> vector<4x8x8xf32>
    "tpu.trace_stop"() : () -> ()
    %39 = vector.shape_cast %38 : vector<4x8x8xf32> to vector<32x8xf32>
    %40 = vector.extract_strided_slice %12 {offsets = [0, 8], sizes = [32, 8], strides = [1, 1]} : vector<32x32xf32> to vector<32x8xf32>
    %41 = vector.shape_cast %40 : vector<32x8xf32> to vector<4x8x8xf32>
    %42 = vector.extract_strided_slice %13 {offsets = [0, 8], sizes = [32, 8], strides = [1, 1]} : vector<32x32xf32> to vector<32x8xf32>
    %43 = vector.shape_cast %42 : vector<32x8xf32> to vector<4x8x8xf32>
    %44 = vector.extract_strided_slice %14 {offsets = [0, 8], sizes = [32, 8], strides = [1, 1]} : vector<32x32xf32> to vector<32x8xf32>
    %45 = vector.shape_cast %44 : vector<32x8xf32> to vector<4x8x8xf32>
    %46 = arith.truncf %41 : vector<4x8x8xf32> to vector<4x8x8xbf16>
    %47 = arith.truncf %43 : vector<4x8x8xf32> to vector<4x8x8xbf16>
    "tpu.trace_start"() <{level = 10 : i32, message = "bqd,bkd->bqk"}> : () -> ()
    %cst_13 = arith.constant dense<0.000000e+00> : vector<4x8x8xf32>
    %48 = tpu.matmul %46, %47, %cst_13 {dimension_numbers = #tpu.dot_dimension_numbers<[2], [2], [1], [1], [0, 0, 0, 1, 1, 1], [0], [0]>} : vector<4x8x8xbf16>, vector<4x8x8xbf16>, vector<4x8x8xf32> -> vector<4x8x8xf32>
    "tpu.trace_stop"() : () -> ()
    %cst_14 = arith.constant 0.353553385 : f32
    %49 = vector.broadcast %cst_14 : f32 to vector<4x8x8xf32>
    %50 = arith.mulf %48, %49 : vector<4x8x8xf32>
    %cst_15 = arith.constant dense<0xFF800000> : vector<4x8xf32>
    %51 = vector.multi_reduction <maximumf>, %50, %cst_15 [2] : vector<4x8x8xf32> to vector<4x8xf32>
    %52 = vector.shape_cast %51 : vector<4x8xf32> to vector<4x8x1xf32>
    %53 = vector.broadcast %52 : vector<4x8x1xf32> to vector<4x8x8xf32>
    %54 = arith.subf %50, %53 : vector<4x8x8xf32>
    %55 = math.exp %54 : vector<4x8x8xf32>
    %cst_16 = arith.constant dense<0.000000e+00> : vector<4x8xf32>
    %56 = vector.multi_reduction <add>, %55, %cst_16 [2] : vector<4x8x8xf32> to vector<4x8xf32>
    %57 = vector.shape_cast %56 : vector<4x8xf32> to vector<4x8x1xf32>
    %58 = tpu.reciprocal %57 {approx = true} : vector<4x8x1xf32> -> vector<4x8x1xf32>
    %59 = vector.broadcast %58 : vector<4x8x1xf32> to vector<4x8x8xf32>
    %60 = arith.mulf %55, %59 : vector<4x8x8xf32>
    %61 = arith.truncf %60 : vector<4x8x8xf32> to vector<4x8x8xbf16>
    %62 = arith.truncf %45 : vector<4x8x8xf32> to vector<4x8x8xbf16>
    "tpu.trace_start"() <{level = 10 : i32, message = "bqk,bkd->bqd"}> : () -> ()
    %cst_17 = arith.constant dense<0.000000e+00> : vector<4x8x8xf32>
    %63 = tpu.matmul %61, %62, %cst_17 {dimension_numbers = #tpu.dot_dimension_numbers<[2], [1], [1], [2], [0, 0, 0, 1, 1, 2], [0], [0]>} : vector<4x8x8xbf16>, vector<4x8x8xbf16>, vector<4x8x8xf32> -> vector<4x8x8xf32>
    "tpu.trace_stop"() : () -> ()
    %64 = vector.shape_cast %63 : vector<4x8x8xf32> to vector<32x8xf32>
    %65 = vector.extract_strided_slice %12 {offsets = [0, 16], sizes = [32, 8], strides = [1, 1]} : vector<32x32xf32> to vector<32x8xf32>
    %66 = vector.shape_cast %65 : vector<32x8xf32> to vector<4x8x8xf32>
    %67 = vector.extract_strided_slice %13 {offsets = [0, 16], sizes = [32, 8], strides = [1, 1]} : vector<32x32xf32> to vector<32x8xf32>
    %68 = vector.shape_cast %67 : vector<32x8xf32> to vector<4x8x8xf32>
    %69 = vector.extract_strided_slice %14 {offsets = [0, 16], sizes = [32, 8], strides = [1, 1]} : vector<32x32xf32> to vector<32x8xf32>
    %70 = vector.shape_cast %69 : vector<32x8xf32> to vector<4x8x8xf32>
    %71 = arith.truncf %66 : vector<4x8x8xf32> to vector<4x8x8xbf16>
    %72 = arith.truncf %68 : vector<4x8x8xf32> to vector<4x8x8xbf16>
    "tpu.trace_start"() <{level = 10 : i32, message = "bqd,bkd->bqk"}> : () -> ()
    %cst_18 = arith.constant dense<0.000000e+00> : vector<4x8x8xf32>
    %73 = tpu.matmul %71, %72, %cst_18 {dimension_numbers = #tpu.dot_dimension_numbers<[2], [2], [1], [1], [0, 0, 0, 1, 1, 1], [0], [0]>} : vector<4x8x8xbf16>, vector<4x8x8xbf16>, vector<4x8x8xf32> -> vector<4x8x8xf32>
    "tpu.trace_stop"() : () -> ()
    %cst_19 = arith.constant 0.353553385 : f32
    %74 = vector.broadcast %cst_19 : f32 to vector<4x8x8xf32>
    %75 = arith.mulf %73, %74 : vector<4x8x8xf32>
    %cst_20 = arith.constant dense<0xFF800000> : vector<4x8xf32>
    %76 = vector.multi_reduction <maximumf>, %75, %cst_20 [2] : vector<4x8x8xf32> to vector<4x8xf32>
    %77 = vector.shape_cast %76 : vector<4x8xf32> to vector<4x8x1xf32>
    %78 = vector.broadcast %77 : vector<4x8x1xf32> to vector<4x8x8xf32>
    %79 = arith.subf %75, %78 : vector<4x8x8xf32>
    %80 = math.exp %79 : vector<4x8x8xf32>
    %cst_21 = arith.constant dense<0.000000e+00> : vector<4x8xf32>
    %81 = vector.multi_reduction <add>, %80, %cst_21 [2] : vector<4x8x8xf32> to vector<4x8xf32>
    %82 = vector.shape_cast %81 : vector<4x8xf32> to vector<4x8x1xf32>
    %83 = tpu.reciprocal %82 {approx = true} : vector<4x8x1xf32> -> vector<4x8x1xf32>
    %84 = vector.broadcast %83 : vector<4x8x1xf32> to vector<4x8x8xf32>
    %85 = arith.mulf %80, %84 : vector<4x8x8xf32>
    %86 = arith.truncf %85 : vector<4x8x8xf32> to vector<4x8x8xbf16>
    %87 = arith.truncf %70 : vector<4x8x8xf32> to vector<4x8x8xbf16>
    "tpu.trace_start"() <{level = 10 : i32, message = "bqk,bkd->bqd"}> : () -> ()
    %cst_22 = arith.constant dense<0.000000e+00> : vector<4x8x8xf32>
    %88 = tpu.matmul %86, %87, %cst_22 {dimension_numbers = #tpu.dot_dimension_numbers<[2], [1], [1], [2], [0, 0, 0, 1, 1, 2], [0], [0]>} : vector<4x8x8xbf16>, vector<4x8x8xbf16>, vector<4x8x8xf32> -> vector<4x8x8xf32>
    "tpu.trace_stop"() : () -> ()
    %89 = vector.shape_cast %88 : vector<4x8x8xf32> to vector<32x8xf32>
    %90 = vector.extract_strided_slice %12 {offsets = [0, 24], sizes = [32, 8], strides = [1, 1]} : vector<32x32xf32> to vector<32x8xf32>
    %91 = vector.shape_cast %90 : vector<32x8xf32> to vector<4x8x8xf32>
    %92 = vector.extract_strided_slice %13 {offsets = [0, 24], sizes = [32, 8], strides = [1, 1]} : vector<32x32xf32> to vector<32x8xf32>
    %93 = vector.shape_cast %92 : vector<32x8xf32> to vector<4x8x8xf32>
    %94 = vector.extract_strided_slice %14 {offsets = [0, 24], sizes = [32, 8], strides = [1, 1]} : vector<32x32xf32> to vector<32x8xf32>
    %95 = vector.shape_cast %94 : vector<32x8xf32> to vector<4x8x8xf32>
    %96 = arith.truncf %91 : vector<4x8x8xf32> to vector<4x8x8xbf16>
    %97 = arith.truncf %93 : vector<4x8x8xf32> to vector<4x8x8xbf16>
    "tpu.trace_start"() <{level = 10 : i32, message = "bqd,bkd->bqk"}> : () -> ()
    %cst_23 = arith.constant dense<0.000000e+00> : vector<4x8x8xf32>
    %98 = tpu.matmul %96, %97, %cst_23 {dimension_numbers = #tpu.dot_dimension_numbers<[2], [2], [1], [1], [0, 0, 0, 1, 1, 1], [0], [0]>} : vector<4x8x8xbf16>, vector<4x8x8xbf16>, vector<4x8x8xf32> -> vector<4x8x8xf32>
    "tpu.trace_stop"() : () -> ()
    %cst_24 = arith.constant 0.353553385 : f32
    %99 = vector.broadcast %cst_24 : f32 to vector<4x8x8xf32>
    %100 = arith.mulf %98, %99 : vector<4x8x8xf32>
    %cst_25 = arith.constant dense<0xFF800000> : vector<4x8xf32>
    %101 = vector.multi_reduction <maximumf>, %100, %cst_25 [2] : vector<4x8x8xf32> to vector<4x8xf32>
    %102 = vector.shape_cast %101 : vector<4x8xf32> to vector<4x8x1xf32>
    %103 = vector.broadcast %102 : vector<4x8x1xf32> to vector<4x8x8xf32>
    %104 = arith.subf %100, %103 : vector<4x8x8xf32>
    %105 = math.exp %104 : vector<4x8x8xf32>
    %cst_26 = arith.constant dense<0.000000e+00> : vector<4x8xf32>
    %106 = vector.multi_reduction <add>, %105, %cst_26 [2] : vector<4x8x8xf32> to vector<4x8xf32>
    %107 = vector.shape_cast %106 : vector<4x8xf32> to vector<4x8x1xf32>
    %108 = tpu.reciprocal %107 {approx = true} : vector<4x8x1xf32> -> vector<4x8x1xf32>
    %109 = vector.broadcast %108 : vector<4x8x1xf32> to vector<4x8x8xf32>
    %110 = arith.mulf %105, %109 : vector<4x8x8xf32>
    %111 = arith.truncf %110 : vector<4x8x8xf32> to vector<4x8x8xbf16>
    %112 = arith.truncf %95 : vector<4x8x8xf32> to vector<4x8x8xbf16>
    "tpu.trace_start"() <{level = 10 : i32, message = "bqk,bkd->bqd"}> : () -> ()
    %cst_27 = arith.constant dense<0.000000e+00> : vector<4x8x8xf32>
    %113 = tpu.matmul %111, %112, %cst_27 {dimension_numbers = #tpu.dot_dimension_numbers<[2], [1], [1], [2], [0, 0, 0, 1, 1, 2], [0], [0]>} : vector<4x8x8xbf16>, vector<4x8x8xbf16>, vector<4x8x8xf32> -> vector<4x8x8xf32>
    "tpu.trace_stop"() : () -> ()
    %114 = vector.shape_cast %113 : vector<4x8x8xf32> to vector<32x8xf32>
    %115 = tpu.concatenate %39, %64, %89, %114 in 1 : vector<32x8xf32>, vector<32x8xf32>, vector<32x8xf32>, vector<32x8xf32> -> vector<32x32xf32>
    %c0_28 = arith.constant 0 : index
    %c0_29 = arith.constant 0 : index
    %c0_30 = arith.constant 0 : index
    %116 = vector.load %arg5[%c0_28, %c0_29, %c0_30] : memref<1x32x32xbf16, #tpu.memory_space<vmem>>, vector<1x32x32xbf16>
    %117 = vector.shape_cast %116 : vector<1x32x32xbf16> to vector<32x32xbf16>
    %c0_31 = arith.constant 0 : index
    %c0_32 = arith.constant 0 : index
    %c0_33 = arith.constant 0 : index
    %118 = vector.load %arg6[%c0_31, %c0_32, %c0_33] : memref<1x1x32xf32, #tpu.memory_space<vmem>>, vector<1x1x32xf32>
    %119 = vector.shape_cast %118 : vector<1x1x32xf32> to vector<1x32xf32>
    %120 = arith.truncf %115 : vector<32x32xf32> to vector<32x32xbf16>
    %cst_34 = arith.constant dense<0.000000e+00> : vector<32x32xf32>
    %121 = tpu.matmul %120, %117, %cst_34 {dimension_numbers = #tpu.dot_dimension_numbers<[1], [0], [0], [1], [0, 0, 1, 1], [], []>} : vector<32x32xbf16>, vector<32x32xbf16>, vector<32x32xf32> -> vector<32x32xf32>
    %122 = vector.broadcast %119 : vector<1x32xf32> to vector<32x32xf32>
    %123 = arith.addf %121, %122 : vector<32x32xf32>
    %124 = arith.addf %3, %123 : vector<32x32xf32>
    %c0_35 = arith.constant 0 : index
    %c0_36 = arith.constant 0 : index
    %c0_37 = arith.constant 0 : index
    %125 = vector.load %arg7[%c0_35, %c0_36, %c0_37] : memref<1x1x32xf32, #tpu.memory_space<vmem>>, vector<1x1x32xf32>
    %126 = vector.shape_cast %125 : vector<1x1x32xf32> to vector<1x32xf32>
    %c0_38 = arith.constant 0 : index
    %c0_39 = arith.constant 0 : index
    %c0_40 = arith.constant 0 : index
    %127 = vector.load %arg8[%c0_38, %c0_39, %c0_40] : memref<1x1x32xf32, #tpu.memory_space<vmem>>, vector<1x1x32xf32>
    %128 = vector.shape_cast %127 : vector<1x1x32xf32> to vector<1x32xf32>
    %cst_41 = arith.constant dense<0.000000e+00> : vector<32xf32>
    %129 = vector.multi_reduction <add>, %124, %cst_41 [1] : vector<32x32xf32> to vector<32xf32>
    %130 = vector.shape_cast %129 : vector<32xf32> to vector<32x1xf32>
    %cst_42 = arith.constant 3.200000e+01 : f32
    %131 = vector.broadcast %cst_42 : f32 to vector<32x1xf32>
    %132 = arith.divf %130, %131 : vector<32x1xf32>
    %133 = vector.broadcast %132 : vector<32x1xf32> to vector<32x32xf32>
    %134 = arith.subf %124, %133 : vector<32x32xf32>
    %135 = arith.mulf %134, %134 : vector<32x32xf32>
    %cst_43 = arith.constant dense<0.000000e+00> : vector<32xf32>
    %136 = vector.multi_reduction <add>, %135, %cst_43 [1] : vector<32x32xf32> to vector<32xf32>
    %137 = vector.shape_cast %136 : vector<32xf32> to vector<32x1xf32>
    %cst_44 = arith.constant 3.200000e+01 : f32
    %138 = vector.broadcast %cst_44 : f32 to vector<32x1xf32>
    %139 = arith.divf %137, %138 : vector<32x1xf32>
    %140 = vector.broadcast %132 : vector<32x1xf32> to vector<32x32xf32>
    %141 = arith.subf %124, %140 : vector<32x32xf32>
    %cst_45 = arith.constant 9.99999974E-6 : f32
    %142 = vector.broadcast %cst_45 : f32 to vector<32x1xf32>
    %143 = arith.addf %139, %142 : vector<32x1xf32>
    %144 = math.rsqrt %143 : vector<32x1xf32>
    %145 = vector.broadcast %144 : vector<32x1xf32> to vector<32x32xf32>
    %146 = arith.mulf %141, %145 : vector<32x32xf32>
    %147 = vector.broadcast %126 : vector<1x32xf32> to vector<32x32xf32>
    %148 = arith.mulf %146, %147 : vector<32x32xf32>
    %149 = vector.broadcast %128 : vector<1x32xf32> to vector<32x32xf32>
    %150 = arith.addf %148, %149 : vector<32x32xf32>
    %c0_46 = arith.constant 0 : index
    %c0_47 = arith.constant 0 : index
    %c0_48 = arith.constant 0 : index
    %151 = vector.load %arg9[%c0_46, %c0_47, %c0_48] : memref<1x32x64xbf16, #tpu.memory_space<vmem>>, vector<1x32x64xbf16>
    %152 = vector.shape_cast %151 : vector<1x32x64xbf16> to vector<32x64xbf16>
    %c0_49 = arith.constant 0 : index
    %c0_50 = arith.constant 0 : index
    %c0_51 = arith.constant 0 : index
    %153 = vector.load %arg10[%c0_49, %c0_50, %c0_51] : memref<1x1x64xf32, #tpu.memory_space<vmem>>, vector<1x1x64xf32>
    %154 = vector.shape_cast %153 : vector<1x1x64xf32> to vector<1x64xf32>
    %155 = arith.truncf %150 : vector<32x32xf32> to vector<32x32xbf16>
    %cst_52 = arith.constant dense<0.000000e+00> : vector<32x64xf32>
    %156 = tpu.matmul %155, %152, %cst_52 {dimension_numbers = #tpu.dot_dimension_numbers<[1], [0], [0], [1], [0, 0, 1, 1], [], []>} : vector<32x32xbf16>, vector<32x64xbf16>, vector<32x64xf32> -> vector<32x64xf32>
    %157 = vector.broadcast %154 : vector<1x64xf32> to vector<32x64xf32>
    %158 = arith.addf %156, %157 : vector<32x64xf32>
    %cst_53 = arith.constant 0.000000e+00 : f32
    %159 = vector.broadcast %cst_53 : f32 to vector<32x64xf32>
    %160 = arith.maximumf %158, %159 : vector<32x64xf32>
    %c0_54 = arith.constant 0 : index
    %c0_55 = arith.constant 0 : index
    %c0_56 = arith.constant 0 : index
    %161 = vector.load %arg11[%c0_54, %c0_55, %c0_56] : memref<1x64x32xbf16, #tpu.memory_space<vmem>>, vector<1x64x32xbf16>
    %162 = vector.shape_cast %161 : vector<1x64x32xbf16> to vector<64x32xbf16>
    %c0_57 = arith.constant 0 : index
    %c0_58 = arith.constant 0 : index
    %c0_59 = arith.constant 0 : index
    %163 = vector.load %arg12[%c0_57, %c0_58, %c0_59] : memref<1x1x32xf32, #tpu.memory_space<vmem>>, vector<1x1x32xf32>
    %164 = vector.shape_cast %163 : vector<1x1x32xf32> to vector<1x32xf32>
    %165 = arith.truncf %160 : vector<32x64xf32> to vector<32x64xbf16>
    %cst_60 = arith.constant dense<0.000000e+00> : vector<32x32xf32>
    %166 = tpu.matmul %165, %162, %cst_60 {dimension_numbers = #tpu.dot_dimension_numbers<[1], [0], [0], [1], [0, 0, 1, 1], [], []>} : vector<32x64xbf16>, vector<64x32xbf16>, vector<32x32xf32> -> vector<32x32xf32>
    %167 = vector.broadcast %164 : vector<1x32xf32> to vector<32x32xf32>
    %168 = arith.addf %166, %167 : vector<32x32xf32>
    %169 = arith.addf %150, %168 : vector<32x32xf32>
    %c0_61 = arith.constant 0 : index
    %c0_62 = arith.constant 0 : index
    %c0_63 = arith.constant 0 : index
    %170 = vector.load %arg13[%c0_61, %c0_62, %c0_63] : memref<1x1x32xf32, #tpu.memory_space<vmem>>, vector<1x1x32xf32>
    %171 = vector.shape_cast %170 : vector<1x1x32xf32> to vector<1x32xf32>
    %c0_64 = arith.constant 0 : index
    %c0_65 = arith.constant 0 : index
    %c0_66 = arith.constant 0 : index
    %172 = vector.load %arg14[%c0_64, %c0_65, %c0_66] : memref<1x1x32xf32, #tpu.memory_space<vmem>>, vector<1x1x32xf32>
    %173 = vector.shape_cast %172 : vector<1x1x32xf32> to vector<1x32xf32>
    %cst_67 = arith.constant dense<0.000000e+00> : vector<32xf32>
    %174 = vector.multi_reduction <add>, %169, %cst_67 [1] : vector<32x32xf32> to vector<32xf32>
    %175 = vector.shape_cast %174 : vector<32xf32> to vector<32x1xf32>
    %cst_68 = arith.constant 3.200000e+01 : f32
    %176 = vector.broadcast %cst_68 : f32 to vector<32x1xf32>
    %177 = arith.divf %175, %176 : vector<32x1xf32>
    %178 = vector.broadcast %177 : vector<32x1xf32> to vector<32x32xf32>
    %179 = arith.subf %169, %178 : vector<32x32xf32>
    %180 = arith.mulf %179, %179 : vector<32x32xf32>
    %cst_69 = arith.constant dense<0.000000e+00> : vector<32xf32>
    %181 = vector.multi_reduction <add>, %180, %cst_69 [1] : vector<32x32xf32> to vector<32xf32>
    %182 = vector.shape_cast %181 : vector<32xf32> to vector<32x1xf32>
    %cst_70 = arith.constant 3.200000e+01 : f32
    %183 = vector.broadcast %cst_70 : f32 to vector<32x1xf32>
    %184 = arith.divf %182, %183 : vector<32x1xf32>
    %185 = vector.broadcast %177 : vector<32x1xf32> to vector<32x32xf32>
    %186 = arith.subf %169, %185 : vector<32x32xf32>
    %cst_71 = arith.constant 9.99999974E-6 : f32
    %187 = vector.broadcast %cst_71 : f32 to vector<32x1xf32>
    %188 = arith.addf %184, %187 : vector<32x1xf32>
    %189 = math.rsqrt %188 : vector<32x1xf32>
    %190 = vector.broadcast %189 : vector<32x1xf32> to vector<32x32xf32>
    %191 = arith.mulf %186, %190 : vector<32x32xf32>
    %192 = vector.broadcast %171 : vector<1x32xf32> to vector<32x32xf32>
    %193 = arith.mulf %191, %192 : vector<32x32xf32>
    %194 = vector.broadcast %173 : vector<1x32xf32> to vector<32x32xf32>
    %195 = arith.addf %193, %194 : vector<32x32xf32>
    %c0_72 = arith.constant 0 : index
    %c0_73 = arith.constant 0 : index
    %196 = vector.load %arg28[%c0_72, %c0_73] : memref<32x32xf32, #tpu.memory_space<vmem>>, vector<32x32xf32>
    tpu.vector_store %arg28[%c0_72, %c0_73], %195 {strides = array<i32>} : memref<32x32xf32, #tpu.memory_space<vmem>>, vector<32x32xf32>,
    %c1_i32 = arith.constant 1 : i32
    %197 = arith.cmpi eq, %arg1, %c1_i32 : i32
    %198 = arith.extui %197 : i1 to i32
    %c0_i32_74 = arith.constant 0 : i32
    %199 = arith.cmpi ne, %198, %c0_i32_74 : i32
    scf.if %199 {
      %200 = vector.shape_cast %195 : vector<32x32xf32> to vector<4x8x32xf32>
      %cst_75 = arith.constant dense<0.000000e+00> : vector<4x32xf32>
      %201 = vector.multi_reduction <add>, %200, %cst_75 [1] : vector<4x8x32xf32> to vector<4x32xf32>
      %cst_76 = arith.constant 8.000000e+00 : f32
      %202 = vector.broadcast %cst_76 : f32 to vector<4x32xf32>
      %203 = arith.divf %201, %202 : vector<4x32xf32>
      %c0_77 = arith.constant 0 : index
      %c0_78 = arith.constant 0 : index
      %204 = vector.load %arg15[%c0_77, %c0_78] : memref<32x16xbf16, #tpu.memory_space<vmem>>, vector<32x16xbf16>
      %c0_79 = arith.constant 0 : index
      %c0_80 = arith.constant 0 : index
      %205 = vector.load %arg16[%c0_79, %c0_80] : memref<1x16xf32, #tpu.memory_space<vmem>>, vector<1x16xf32>
      %206 = arith.truncf %203 : vector<4x32xf32> to vector<4x32xbf16>
      %cst_81 = arith.constant dense<0.000000e+00> : vector<4x16xf32>
      %207 = tpu.matmul %206, %204, %cst_81 {dimension_numbers = #tpu.dot_dimension_numbers<[1], [0], [0], [1], [0, 0, 1, 1], [], []>} : vector<4x32xbf16>, vector<32x16xbf16>, vector<4x16xf32> -> vector<4x16xf32>
      %208 = vector.broadcast %205 : vector<1x16xf32> to vector<4x16xf32>
      %209 = arith.addf %207, %208 : vector<4x16xf32>
      %cst_82 = arith.constant 0.000000e+00 : f32
      %210 = vector.broadcast %cst_82 : f32 to vector<4x16xf32>
      %211 = arith.maximumf %209, %210 : vector<4x16xf32>
      %c0_83 = arith.constant 0 : index
      %c0_84 = arith.constant 0 : index
      %212 = vector.load %arg17[%c0_83, %c0_84] : memref<16x1xbf16, #tpu.memory_space<vmem>>, vector<16x1xbf16>
      %c0_85 = arith.constant 0 : index
      %c0_86 = arith.constant 0 : index
      %213 = vector.load %arg18[%c0_85, %c0_86] : memref<1x1xf32, #tpu.memory_space<vmem>>, vector<1x1xf32>
      %214 = arith.truncf %211 : vector<4x16xf32> to vector<4x16xbf16>
      %cst_87 = arith.constant dense<0.000000e+00> : vector<4x1xf32>
      %215 = tpu.matmul %214, %212, %cst_87 {dimension_numbers = #tpu.dot_dimension_numbers<[1], [0], [0], [1], [0, 0, 1, 1], [], []>} : vector<4x16xbf16>, vector<16x1xbf16>, vector<4x1xf32> -> vector<4x1xf32>
      %216 = vector.broadcast %213 : vector<1x1xf32> to vector<4x1xf32>
      %217 = arith.addf %215, %216 : vector<4x1xf32>
      %c0_88 = arith.constant 0 : index
      %c0_89 = arith.constant 0 : index
      %218 = vector.load %arg19[%c0_88, %c0_89] : memref<32x16xbf16, #tpu.memory_space<vmem>>, vector<32x16xbf16>
      %c0_90 = arith.constant 0 : index
      %c0_91 = arith.constant 0 : index
      %219 = vector.load %arg20[%c0_90, %c0_91] : memref<1x16xf32, #tpu.memory_space<vmem>>, vector<1x16xf32>
      %220 = arith.truncf %203 : vector<4x32xf32> to vector<4x32xbf16>
      %cst_92 = arith.constant dense<0.000000e+00> : vector<4x16xf32>
      %221 = tpu.matmul %220, %218, %cst_92 {dimension_numbers = #tpu.dot_dimension_numbers<[1], [0], [0], [1], [0, 0, 1, 1], [], []>} : vector<4x32xbf16>, vector<32x16xbf16>, vector<4x16xf32> -> vector<4x16xf32>
      %222 = vector.broadcast %219 : vector<1x16xf32> to vector<4x16xf32>
      %223 = arith.addf %221, %222 : vector<4x16xf32>
      %cst_93 = arith.constant 0.000000e+00 : f32
      %224 = vector.broadcast %cst_93 : f32 to vector<4x16xf32>
      %225 = arith.maximumf %223, %224 : vector<4x16xf32>
      %c0_94 = arith.constant 0 : index
      %c0_95 = arith.constant 0 : index
      %226 = vector.load %arg21[%c0_94, %c0_95] : memref<16x1xbf16, #tpu.memory_space<vmem>>, vector<16x1xbf16>
      %c0_96 = arith.constant 0 : index
      %c0_97 = arith.constant 0 : index
      %227 = vector.load %arg22[%c0_96, %c0_97] : memref<1x1xf32, #tpu.memory_space<vmem>>, vector<1x1xf32>
      %228 = arith.truncf %225 : vector<4x16xf32> to vector<4x16xbf16>
      %cst_98 = arith.constant dense<0.000000e+00> : vector<4x1xf32>
      %229 = tpu.matmul %228, %226, %cst_98 {dimension_numbers = #tpu.dot_dimension_numbers<[1], [0], [0], [1], [0, 0, 1, 1], [], []>} : vector<4x16xbf16>, vector<16x1xbf16>, vector<4x1xf32> -> vector<4x1xf32>
      %230 = vector.broadcast %227 : vector<1x1xf32> to vector<4x1xf32>
      %231 = arith.addf %229, %230 : vector<4x1xf32>
      %cst_99 = arith.constant 2.000000e+01 : f32
      %232 = vector.broadcast %cst_99 : f32 to vector<4x1xf32>
      %233 = arith.cmpf ogt, %231, %232 : vector<4x1xf32>
      %cst_100 = arith.constant 2.000000e+01 : f32
      %234 = vector.broadcast %cst_100 : f32 to vector<4x1xf32>
      %235 = arith.minimumf %231, %234 : vector<4x1xf32>
      %236 = math.exp %235 : vector<4x1xf32>
      %cst_101 = arith.constant 1.000000e+00 : f32
      %237 = vector.broadcast %cst_101 : f32 to vector<4x1xf32>
      %238 = arith.addf %237, %236 : vector<4x1xf32>
      %239 = math.log %238 : vector<4x1xf32>
      %240 = arith.select %233, %231, %239 : vector<4x1xi1>, vector<4x1xf32>
      %c0_102 = arith.constant 0 : index
      %c0_103 = arith.constant 0 : index
      %241 = vector.load %arg23[%c0_102, %c0_103] : memref<32x8xbf16, #tpu.memory_space<vmem>>, vector<32x8xbf16>
      %c0_104 = arith.constant 0 : index
      %c0_105 = arith.constant 0 : index
      %242 = vector.load %arg24[%c0_104, %c0_105] : memref<1x8xf32, #tpu.memory_space<vmem>>, vector<1x8xf32>
      %243 = arith.truncf %203 : vector<4x32xf32> to vector<4x32xbf16>
      %cst_106 = arith.constant dense<0.000000e+00> : vector<4x8xf32>
      %244 = tpu.matmul %243, %241, %cst_106 {dimension_numbers = #tpu.dot_dimension_numbers<[1], [0], [0], [1], [0, 0, 1, 1], [], []>} : vector<4x32xbf16>, vector<32x8xbf16>, vector<4x8xf32> -> vector<4x8xf32>
      %245 = vector.broadcast %242 : vector<1x8xf32> to vector<4x8xf32>
      %246 = arith.addf %244, %245 : vector<4x8xf32>
      %cst_107 = arith.constant 0.000000e+00 : f32
      %247 = vector.broadcast %cst_107 : f32 to vector<4x8xf32>
      %248 = arith.maximumf %246, %247 : vector<4x8xf32>
      %c0_108 = arith.constant 0 : index
      %c0_109 = arith.constant 0 : index
      %249 = vector.load %arg25[%c0_108, %c0_109] : memref<8x1xbf16, #tpu.memory_space<vmem>>, vector<8x1xbf16>
      %c0_110 = arith.constant 0 : index
      %c0_111 = arith.constant 0 : index
      %250 = vector.load %arg26[%c0_110, %c0_111] : memref<1x1xf32, #tpu.memory_space<vmem>>, vector<1x1xf32>
      %251 = arith.truncf %248 : vector<4x8xf32> to vector<4x8xbf16>
      %cst_112 = arith.constant dense<0.000000e+00> : vector<4x1xf32>
      %252 = tpu.matmul %251, %249, %cst_112 {dimension_numbers = #tpu.dot_dimension_numbers<[1], [0], [0], [1], [0, 0, 1, 1], [], []>} : vector<4x8xbf16>, vector<8x1xbf16>, vector<4x1xf32> -> vector<4x1xf32>
      %253 = vector.broadcast %250 : vector<1x1xf32> to vector<4x1xf32>
      %254 = arith.addf %252, %253 : vector<4x1xf32>
      %cst_113 = arith.constant 0.000000e+00 : f32
      %255 = vector.broadcast %cst_113 : f32 to vector<4x1xf32>
      %256 = arith.subf %255, %254 : vector<4x1xf32>
      %257 = math.exp %256 : vector<4x1xf32>
      %cst_114 = arith.constant 1.000000e+00 : f32
      %258 = vector.broadcast %cst_114 : f32 to vector<4x1xf32>
      %259 = arith.addf %258, %257 : vector<4x1xf32>
      %cst_115 = arith.constant 1.000000e+00 : f32
      %260 = vector.broadcast %cst_115 : f32 to vector<4x1xf32>
      %261 = arith.divf %260, %259 : vector<4x1xf32>
      %262 = tpu.concatenate %217, %240, %261 in 1 : vector<4x1xf32>, vector<4x1xf32>, vector<4x1xf32> -> vector<4x3xf32>
      %cst_116 = arith.constant 0.000000e+00 : f32
      %263 = vector.broadcast %cst_116 : f32 to vector<4x125xf32>
      %264 = tpu.concatenate %262, %263 in 1 : vector<4x3xf32>, vector<4x125xf32> -> vector<4x128xf32>
      %265 = vector.shape_cast %264 : vector<4x128xf32> to vector<4x1x128xf32>
      %c0_117 = arith.constant 0 : index
      %c0_118 = arith.constant 0 : index
      %c0_119 = arith.constant 0 : index
      %266 = vector.load %arg27[%c0_117, %c0_118, %c0_119] : memref<4x1x128xf32, #tpu.memory_space<vmem>>, vector<4x1x128xf32>
      tpu.vector_store %arg27[%c0_117, %c0_118, %c0_119], %265 {strides = array<i32>} : memref<4x1x128xf32, #tpu.memory_space<vmem>>, vector<4x1x128xf32>,
    } else {
    }
    return
  }
  func.func @transform_0(%arg0: i32, %arg1: i32) -> (i32, i32, i32) {
    %c0_i32 = arith.constant 0 : i32
    %c0_i32_0 = arith.constant 0 : i32
    %c0_i32_1 = arith.constant 0 : i32
    return %arg0, %c0_i32, %c0_i32_0 : i32, i32, i32
  }
  func.func @transform_1(%arg0: i32, %arg1: i32) -> (i32, i32, i32) {
    %c0_i32 = arith.constant 0 : i32
    %c0_i32_0 = arith.constant 0 : i32
    %c0_i32_1 = arith.constant 0 : i32
    return %arg1, %c0_i32, %c0_i32_0 : i32, i32, i32
  }
  func.func @transform_2(%arg0: i32, %arg1: i32) -> (i32, i32, i32) {
    %c0_i32 = arith.constant 0 : i32
    %c0_i32_0 = arith.constant 0 : i32
    %c0_i32_1 = arith.constant 0 : i32
    return %arg1, %c0_i32, %c0_i32_0 : i32, i32, i32
  }
  func.func @transform_3(%arg0: i32, %arg1: i32) -> (i32, i32, i32) {
    %c0_i32 = arith.constant 0 : i32
    %c0_i32_0 = arith.constant 0 : i32
    %c0_i32_1 = arith.constant 0 : i32
    return %arg1, %c0_i32, %c0_i32_0 : i32, i32, i32
  }
  func.func @transform_4(%arg0: i32, %arg1: i32) -> (i32, i32, i32) {
    %c0_i32 = arith.constant 0 : i32
    %c0_i32_0 = arith.constant 0 : i32
    %c0_i32_1 = arith.constant 0 : i32
    return %arg1, %c0_i32, %c0_i32_0 : i32, i32, i32
  }
  func.func @transform_5(%arg0: i32, %arg1: i32) -> (i32, i32, i32) {
    %c0_i32 = arith.constant 0 : i32
    %c0_i32_0 = arith.constant 0 : i32
    %c0_i32_1 = arith.constant 0 : i32
    return %arg1, %c0_i32, %c0_i32_0 : i32, i32, i32
  }
  func.func @transform_6(%arg0: i32, %arg1: i32) -> (i32, i32, i32) {
    %c0_i32 = arith.constant 0 : i32
    %c0_i32_0 = arith.constant 0 : i32
    %c0_i32_1 = arith.constant 0 : i32
    return %arg1, %c0_i32, %c0_i32_0 : i32, i32, i32
  }
  func.func @transform_7(%arg0: i32, %arg1: i32) -> (i32, i32, i32) {
    %c0_i32 = arith.constant 0 : i32
    %c0_i32_0 = arith.constant 0 : i32
    %c0_i32_1 = arith.constant 0 : i32
    return %arg1, %c0_i32, %c0_i32_0 : i32, i32, i32
  }
  func.func @transform_8(%arg0: i32, %arg1: i32) -> (i32, i32, i32) {
    %c0_i32 = arith.constant 0 : i32
    %c0_i32_0 = arith.constant 0 : i32
    %c0_i32_1 = arith.constant 0 : i32
    return %arg1, %c0_i32, %c0_i32_0 : i32, i32, i32
  }
  func.func @transform_9(%arg0: i32, %arg1: i32) -> (i32, i32, i32) {
    %c0_i32 = arith.constant 0 : i32
    %c0_i32_0 = arith.constant 0 : i32
    %c0_i32_1 = arith.constant 0 : i32
    return %arg1, %c0_i32, %c0_i32_0 : i32, i32, i32
  }
  func.func @transform_10(%arg0: i32, %arg1: i32) -> (i32, i32, i32) {
    %c0_i32 = arith.constant 0 : i32
    %c0_i32_0 = arith.constant 0 : i32
    %c0_i32_1 = arith.constant 0 : i32
    return %arg1, %c0_i32, %c0_i32_0 : i32, i32, i32
  }
  func.func @transform_11(%arg0: i32, %arg1: i32) -> (i32, i32, i32) {
    %c0_i32 = arith.constant 0 : i32
    %c0_i32_0 = arith.constant 0 : i32
    %c0_i32_1 = arith.constant 0 : i32
    return %arg1, %c0_i32, %c0_i32_0 : i32, i32, i32
  }
  func.func @transform_12(%arg0: i32, %arg1: i32) -> (i32, i32, i32) {
    %c0_i32 = arith.constant 0 : i32
    %c0_i32_0 = arith.constant 0 : i32
    %c0_i32_1 = arith.constant 0 : i32
    return %arg1, %c0_i32, %c0_i32_0 : i32, i32, i32
  }
  func.func @transform_13(%arg0: i32, %arg1: i32) -> (i32, i32) {
    %c0_i32 = arith.constant 0 : i32
    %c0_i32_0 = arith.constant 0 : i32
    %c0_i32_1 = arith.constant 0 : i32
    return %c0_i32, %c0_i32_0 : i32, i32
  }
  func.func @transform_14(%arg0: i32, %arg1: i32) -> (i32, i32) {
    %c0_i32 = arith.constant 0 : i32
    %c0_i32_0 = arith.constant 0 : i32
    %c0_i32_1 = arith.constant 0 : i32
    return %c0_i32, %c0_i32_0 : i32, i32
  }
  func.func @transform_15(%arg0: i32, %arg1: i32) -> (i32, i32) {
    %c0_i32 = arith.constant 0 : i32
    %c0_i32_0 = arith.constant 0 : i32
    %c0_i32_1 = arith.constant 0 : i32
    return %c0_i32, %c0_i32_0 : i32, i32
  }
  func.func @transform_16(%arg0: i32, %arg1: i32) -> (i32, i32) {
    %c0_i32 = arith.constant 0 : i32
    %c0_i32_0 = arith.constant 0 : i32
    %c0_i32_1 = arith.constant 0 : i32
    return %c0_i32, %c0_i32_0 : i32, i32
  }
  func.func @transform_17(%arg0: i32, %arg1: i32) -> (i32, i32) {
    %c0_i32 = arith.constant 0 : i32
    %c0_i32_0 = arith.constant 0 : i32
    %c0_i32_1 = arith.constant 0 : i32
    return %c0_i32, %c0_i32_0 : i32, i32
  }
  func.func @transform_18(%arg0: i32, %arg1: i32) -> (i32, i32) {
    %c0_i32 = arith.constant 0 : i32
    %c0_i32_0 = arith.constant 0 : i32
    %c0_i32_1 = arith.constant 0 : i32
    return %c0_i32, %c0_i32_0 : i32, i32
  }
  func.func @transform_19(%arg0: i32, %arg1: i32) -> (i32, i32) {
    %c0_i32 = arith.constant 0 : i32
    %c0_i32_0 = arith.constant 0 : i32
    %c0_i32_1 = arith.constant 0 : i32
    return %c0_i32, %c0_i32_0 : i32, i32
  }
  func.func @transform_20(%arg0: i32, %arg1: i32) -> (i32, i32) {
    %c0_i32 = arith.constant 0 : i32
    %c0_i32_0 = arith.constant 0 : i32
    %c0_i32_1 = arith.constant 0 : i32
    return %c0_i32, %c0_i32_0 : i32, i32
  }
  func.func @transform_21(%arg0: i32, %arg1: i32) -> (i32, i32) {
    %c0_i32 = arith.constant 0 : i32
    %c0_i32_0 = arith.constant 0 : i32
    %c0_i32_1 = arith.constant 0 : i32
    return %c0_i32, %c0_i32_0 : i32, i32
  }
  func.func @transform_22(%arg0: i32, %arg1: i32) -> (i32, i32) {
    %c0_i32 = arith.constant 0 : i32
    %c0_i32_0 = arith.constant 0 : i32
    %c0_i32_1 = arith.constant 0 : i32
    return %c0_i32, %c0_i32_0 : i32, i32
  }
  func.func @transform_23(%arg0: i32, %arg1: i32) -> (i32, i32) {
    %c0_i32 = arith.constant 0 : i32
    %c0_i32_0 = arith.constant 0 : i32
    %c0_i32_1 = arith.constant 0 : i32
    return %c0_i32, %c0_i32_0 : i32, i32
  }
  func.func @transform_24(%arg0: i32, %arg1: i32) -> (i32, i32) {
    %c0_i32 = arith.constant 0 : i32
    %c0_i32_0 = arith.constant 0 : i32
    %c0_i32_1 = arith.constant 0 : i32
    return %c0_i32, %c0_i32_0 : i32, i32
  }
  func.func @transform_25(%arg0: i32, %arg1: i32) -> (i32, i32, i32) {
    %c0_i32 = arith.constant 0 : i32
    %c0_i32_0 = arith.constant 0 : i32
    %c0_i32_1 = arith.constant 0 : i32
    return %arg0, %c0_i32, %c0_i32_0 : i32, i32, i32
  }
}

</mosaic_0001>

<llo_original>
// kernel: market_transformer_forward.1
$region0: #{market_transformer_forward.1}
  #allocation0 [shape = 'u32[]', space=smem, size = 0x4, offset = 0x4, fixed_abs, tag = 'smem constant byte address 0x4 - core index']
  #allocation1 [shape = 'u32[144,128]{1,0:T(1,128)}', space=vmem, size = 0x12000, scoped, tag = 'internal scratch']
  #allocation2 [shape = 'f32[32,32]{1,0:T(8,128)}', space=vmem, size = 0x4000, scoped, tag = 'scratch operand']
  #allocation3 [shape = 'f32[1,1]{1,0:T(1,128)S(1)}', space=vmem, size = 0x200, scoped, tag = 'scoped memory for market_transformer_forward.1']
  #allocation4 [shape = 'f32[1,1]{1,0:T(1,128)S(1)}', space=vmem, size = 0x200, scoped, tag = 'scoped memory for market_transformer_forward.1']
  #allocation5 [shape = 'f32[1,1]{1,0:T(1,128)S(1)}', space=vmem, size = 0x200, scoped, tag = 'scoped memory for market_transformer_forward.1']
  %s0 = inlined_call_operand.vmem [shape: f32[8,8,32], index: 0, kind: input, shape index: {}]
  %s1 = inlined_call_operand.vmem [shape: bf16[2,32,96], index: 1, kind: input, shape index: {}]
  %s2 = inlined_call_operand.vmem [shape: f32[2,1,96], index: 2, kind: input, shape index: {}]
  %s3 = inlined_call_operand.vmem [shape: bf16[2,32,32], index: 3, kind: input, shape index: {}]
  %s4 = inlined_call_operand.vmem [shape: f32[2,1,32], index: 4, kind: input, shape index: {}]
  %s5 = inlined_call_operand.vmem [shape: f32[2,1,32], index: 5, kind: input, shape index: {}]
  %s6 = inlined_call_operand.vmem [shape: f32[2,1,32], index: 6, kind: input, shape index: {}]
  %s7 = inlined_call_operand.vmem [shape: bf16[2,32,64], index: 7, kind: input, shape index: {}]
  %s8 = inlined_call_operand.vmem [shape: f32[2,1,64], index: 8, kind: input, shape index: {}]
  %s9 = inlined_call_operand.vmem [shape: bf16[2,64,32], index: 9, kind: input, shape index: {}]
  %s10 = inlined_call_operand.vmem [shape: f32[2,1,32], index: 10, kind: input, shape index: {}]
  %s11 = inlined_call_operand.vmem [shape: f32[2,1,32], index: 11, kind: input, shape index: {}]
  %s12 = inlined_call_operand.vmem [shape: f32[2,1,32], index: 12, kind: input, shape index: {}]
  %s13 = inlined_call_operand.vmem [shape: bf16[32,16], index: 13, kind: input, shape index: {}]
  %s14 = inlined_call_operand.vmem [shape: f32[1,16], index: 14, kind: input, shape index: {}]
  %s15 = inlined_call_operand.vmem [shape: bf16[16,1], index: 15, kind: input, shape index: {}]
  %s16 = inlined_call_operand.<no memory space> [shape: f32[1,1], index: 16, kind: input, shape index: {}]
  %s17 = inlined_call_operand.vmem [shape: bf16[32,16], index: 17, kind: input, shape index: {}]
  %s18 = inlined_call_operand.vmem [shape: f32[1,16], index: 18, kind: input, shape index: {}]
  %s19 = inlined_call_operand.vmem [shape: bf16[16,1], index: 19, kind: input, shape index: {}]
  %s20 = inlined_call_operand.<no memory space> [shape: f32[1,1], index: 20, kind: input, shape index: {}]
  %s21 = inlined_call_operand.vmem [shape: bf16[32,8], index: 21, kind: input, shape index: {}]
  %s22 = inlined_call_operand.vmem [shape: f32[1,8], index: 22, kind: input, shape index: {}]
  %s23 = inlined_call_operand.vmem [shape: bf16[8,1], index: 23, kind: input, shape index: {}]
  %s24 = inlined_call_operand.<no memory space> [shape: f32[1,1], index: 24, kind: input, shape index: {}]
  %s25 = inlined_call_operand.vmem [shape: f32[8,1,128], index: 25, kind: output, shape index: {}]
  %s26 = sld [smem:[#allocation0]]
  $region141: #{market_transformer_forward.1} parent=0
    _
  %s28 = ssub.s32 1, %s26
  %s29 = scalar_select 0, %s28, %s26
  %v30 = vstv %s16
  %31 = vst [vmem:[#allocation3] sm:$0x1] %v30
  %v32 = vstv %s20
  %33 = vst [vmem:[#allocation4] sm:$0x1] %v32
  %v34 = vstv %s24
  %35 = vst [vmem:[#allocation5] sm:$0x1] %v34
  loop: start=0, step=1, limit=6
  $region2: #{market_transformer_forward.1} parent=0 // loop_pre_header
    _
  $region3: #{market_transformer_forward.1} parent=0 // loop_header
    %s37 = sphi 0, %s41
    %p38 = scmp.ge.s32.totalorder %s37, 6
    %s44 = sphi 0, %s56
    %s45 = sphi 0, %s52
    %s46 = sphi 0, %s44
    %s47 = sphi 0, %s45
    %s48 = sphi 0, %s46
    %s49 = sphi 0, %s47
    %s59 = sphi 0, %s61
    %s62 = sphi 0, %s59
    %s63 = sphi 0, %s62
    %s79 = sphi 0, %s63
    %s85 = sphi 0, %s87
    %s88 = sphi 0, %s85
    %s89 = sphi 0, %s88
    %s105 = sphi 0, %s89
    %s111 = sphi 0, %s113
    %s114 = sphi 0, %s111
    %s115 = sphi 0, %s114
    %s131 = sphi 0, %s115
    %s137 = sphi 0, %s139
    %s140 = sphi 0, %s137
    %s141 = sphi 0, %s140
    %s157 = sphi 0, %s141
    %s163 = sphi 0, %s165
    %s166 = sphi 0, %s163
    %s167 = sphi 0, %s166
    %s183 = sphi 0, %s167
    %s189 = sphi 0, %s191
    %s192 = sphi 0, %s189
    %s193 = sphi 0, %s192
    %s209 = sphi 0, %s193
    %s215 = sphi 0, %s217
    %s218 = sphi 0, %s215
    %s219 = sphi 0, %s218
    %s235 = sphi 0, %s219
    %s241 = sphi 0, %s243
    %s244 = sphi 0, %s241
    %s245 = sphi 0, %s244
    %s261 = sphi 0, %s245
    %s267 = sphi 0, %s269
    %s270 = sphi 0, %s267
    %s271 = sphi 0, %s270
    %s287 = sphi 0, %s271
    %s293 = sphi 0, %s295
    %s296 = sphi 0, %s293
    %s297 = sphi 0, %s296
    %s313 = sphi 0, %s297
    %s319 = sphi 0, %s321
    %s322 = sphi 0, %s319
    %s323 = sphi 0, %s322
    %s339 = sphi 0, %s323
    %s345 = sphi 0, %s347
    %s348 = sphi 0, %s345
    %s349 = sphi 0, %s348
    %s365 = sphi 0, %s349
    %s371 = sphi 0, %s373
    %s374 = sphi 0, %s371
    %s375 = sphi 0, %s374
    %s391 = sphi 0, %s375
    %s395 = sphi 0, %s395
    %s397 = sphi 0, %s395
    %s398 = sphi 0, %s397
    %s412 = sphi 0, %s398
    %s416 = sphi 0, %s416
    %s418 = sphi 0, %s416
    %s419 = sphi 0, %s418
    %s433 = sphi 0, %s419
    %s437 = sphi 0, %s437
    %s439 = sphi 0, %s437
    %s440 = sphi 0, %s439
    %s454 = sphi 0, %s440
    %s458 = sphi 0, %s458
    %s460 = sphi 0, %s458
    %s461 = sphi 0, %s460
    %s475 = sphi 0, %s461
    %s479 = sphi 0, %s479
    %s481 = sphi 0, %s479
    %s482 = sphi 0, %s481
    %s496 = sphi 0, %s482
    %s500 = sphi 0, %s500
    %s502 = sphi 0, %s500
    %s503 = sphi 0, %s502
    %s517 = sphi 0, %s503
    %s521 = sphi 0, %s521
    %s523 = sphi 0, %s521
    %s524 = sphi 0, %s523
    %s538 = sphi 0, %s524
    %s542 = sphi 0, %s542
    %s544 = sphi 0, %s542
    %s545 = sphi 0, %s544
    %s559 = sphi 0, %s545
    %s563 = sphi 0, %s563
    %s565 = sphi 0, %s563
    %s566 = sphi 0, %s565
    %s580 = sphi 0, %s566
    %s584 = sphi 0, %s584
    %s586 = sphi 0, %s584
    %s587 = sphi 0, %s586
    %s601 = sphi 0, %s587
    %s605 = sphi 0, %s605
    %s607 = sphi 0, %s605
    %s608 = sphi 0, %s607
    %s622 = sphi 0, %s608
    %s626 = sphi 0, %s626
    %s628 = sphi 0, %s626
    %s629 = sphi 0, %s628
    %s643 = sphi 0, %s629
    %s649 = sphi 0, %s651
    %s652 = sphi 0, %s649
    %s653 = sphi 0, %s652
    %s669 = sphi 0, %s653
  $region4: #{market_transformer_forward.1} parent=0 // loop_header_branch
    %40 = sbr.rel (%p38) target = $region8
  $region5: #{market_transformer_forward.1} parent=0 // loop_body
    %s42 = ssub.s32 %s37, 1
    %s43 = ssub.s32 %s37, 2
    %s50 = sadd.s32 1, %s45
    %p51 = scmp.ge.s32.totalorder %s50, 2
    %s52 = scalar_select %p51, 0, %s50
    %s53 = sadd.s32 1, %s44
    %s54 = scalar_select %p51, %s53, %s44
    %p55 = scmp.ge.s32.totalorder %s54, 2
    %s56 = scalar_select %p55, 0, %s54
    %s57 = ssub.s32 %s44, %s56
    %p58 = scmp.eq.s32.totalorder %s57, 0
    %s60 = sadd.s32 %s59, 1
    %s61 = scalar_select %p58, %s59, %s60
    %p64 = pneg %p58
    %p65 = scmp.eq.s32.totalorder %s37, 3
    %p66 = por %p64, %p65
    %p67 = scmp.ne.s32.totalorder %s59, %s62
    %p68 = scmp.eq.s32.totalorder %s37, 0
    %p69 = por %p67, %p68
    %p70 = scmp.ne.s32.totalorder %s59, %s62
    %p71 = scmp.eq.s32.totalorder %s42, 3
    %p72 = por %p70, %p71
    %p73 = scmp.ne.s32.totalorder %s62, %s63
    %p74 = scmp.eq.s32.totalorder %s42, 0
    %p75 = por %p73, %p74
    %p76 = scmp.ne.s32.totalorder %s62, %s63
    %p77 = scmp.eq.s32.totalorder %s43, 3
    %p78 = por %p76, %p77
    %p80 = scmp.ne.s32.totalorder %s63, %s79
    %p81 = scmp.eq.s32.totalorder %s43, 0
    %p82 = por %p80, %p81
    %s83 = ssub.s32 %s45, %s52
    %p84 = scmp.eq.s32.totalorder %s83, 0
    %s86 = sadd.s32 %s85, 1
    %s87 = scalar_select %p84, %s85, %s86
    %p90 = pneg %p84
    %p91 = scmp.eq.s32.totalorder %s37, 3
    %p92 = por %p90, %p91
    %p93 = scmp.ne.s32.totalorder %s85, %s88
    %p94 = scmp.eq.s32.totalorder %s37, 0
    %p95 = por %p93, %p94
    %p96 = scmp.ne.s32.totalorder %s85, %s88
    %p97 = scmp.eq.s32.totalorder %s42, 3
    %p98 = por %p96, %p97
    %p99 = scmp.ne.s32.totalorder %s88, %s89
    %p100 = scmp.eq.s32.totalorder %s42, 0
    %p101 = por %p99, %p100
    %p102 = scmp.ne.s32.totalorder %s88, %s89
    %p103 = scmp.eq.s32.totalorder %s43, 3
    %p104 = por %p102, %p103
    %p106 = scmp.ne.s32.totalorder %s89, %s105
    %p107 = scmp.eq.s32.totalorder %s43, 0
    %p108 = por %p106, %p107
    %s109 = ssub.s32 %s45, %s52
    %p110 = scmp.eq.s32.totalorder %s109, 0
    %s112 = sadd.s32 %s111, 1
    %s113 = scalar_select %p110, %s111, %s112
    %p116 = pneg %p110
    %p117 = scmp.eq.s32.totalorder %s37, 3
    %p118 = por %p116, %p117
    %p119 = scmp.ne.s32.totalorder %s111, %s114
    %p120 = scmp.eq.s32.totalorder %s37, 0
    %p121 = por %p119, %p120
    %p122 = scmp.ne.s32.totalorder %s111, %s114
    %p123 = scmp.eq.s32.totalorder %s42, 3
    %p124 = por %p122, %p123
    %p125 = scmp.ne.s32.totalorder %s114, %s115
    %p126 = scmp.eq.s32.totalorder %s42, 0
    %p127 = por %p125, %p126
    %p128 = scmp.ne.s32.totalorder %s114, %s115
    %p129 = scmp.eq.s32.totalorder %s43, 3
    %p130 = por %p128, %p129
    %p132 = scmp.ne.s32.totalorder %s115, %s131
    %p133 = scmp.eq.s32.totalorder %s43, 0
    %p134 = por %p132, %p133
    %s135 = ssub.s32 %s45, %s52
    %p136 = scmp.eq.s32.totalorder %s135, 0
    %s138 = sadd.s32 %s137, 1
    %s139 = scalar_select %p136, %s137, %s138
    %p142 = pneg %p136
    %p143 = scmp.eq.s32.totalorder %s37, 3
    %p144 = por %p142, %p143
    %p145 = scmp.ne.s32.totalorder %s137, %s140
    %p146 = scmp.eq.s32.totalorder %s37, 0
    %p147 = por %p145, %p146
    %p148 = scmp.ne.s32.totalorder %s137, %s140
    %p149 = scmp.eq.s32.totalorder %s42, 3
    %p150 = por %p148, %p149
    %p151 = scmp.ne.s32.totalorder %s140, %s141
    %p152 = scmp.eq.s32.totalorder %s42, 0
    %p153 = por %p151, %p152
    %p154 = scmp.ne.s32.totalorder %s140, %s141
    %p155 = scmp.eq.s32.totalorder %s43, 3
    %p156 = por %p154, %p155
    %p158 = scmp.ne.s32.totalorder %s141, %s157
    %p159 = scmp.eq.s32.totalorder %s43, 0
    %p160 = por %p158, %p159
    %s161 = ssub.s32 %s45, %s52
    %p162 = scmp.eq.s32.totalorder %s161, 0
    %s164 = sadd.s32 %s163, 1
    %s165 = scalar_select %p162, %s163, %s164
    %p168 = pneg %p162
    %p169 = scmp.eq.s32.totalorder %s37, 3
    %p170 = por %p168, %p169
    %p171 = scmp.ne.s32.totalorder %s163, %s166
    %p172 = scmp.eq.s32.totalorder %s37, 0
    %p173 = por %p171, %p172
    %p174 = scmp.ne.s32.totalorder %s163, %s166
    %p175 = scmp.eq.s32.totalorder %s42, 3
    %p176 = por %p174, %p175
    %p177 = scmp.ne.s32.totalorder %s166, %s167
    %p178 = scmp.eq.s32.totalorder %s42, 0
    %p179 = por %p177, %p178
    %p180 = scmp.ne.s32.totalorder %s166, %s167
    %p181 = scmp.eq.s32.totalorder %s43, 3
    %p182 = por %p180, %p181
    %p184 = scmp.ne.s32.totalorder %s167, %s183
    %p185 = scmp.eq.s32.totalorder %s43, 0
    %p186 = por %p184, %p185
    %s187 = ssub.s32 %s45, %s52
    %p188 = scmp.eq.s32.totalorder %s187, 0
    %s190 = sadd.s32 %s189, 1
    %s191 = scalar_select %p188, %s189, %s190
    %p194 = pneg %p188
    %p195 = scmp.eq.s32.totalorder %s37, 3
    %p196 = por %p194, %p195
    %p197 = scmp.ne.s32.totalorder %s189, %s192
    %p198 = scmp.eq.s32.totalorder %s37, 0
    %p199 = por %p197, %p198
    %p200 = scmp.ne.s32.totalorder %s189, %s192
    %p201 = scmp.eq.s32.totalorder %s42, 3
    %p202 = por %p200, %p201
    %p203 = scmp.ne.s32.totalorder %s192, %s193
    %p204 = scmp.eq.s32.totalorder %s42, 0
    %p205 = por %p203, %p204
    %p206 = scmp.ne.s32.totalorder %s192, %s193
    %p207 = scmp.eq.s32.totalorder %s43, 3
    %p208 = por %p206, %p207
    %p210 = scmp.ne.s32.totalorder %s193, %s209
    %p211 = scmp.eq.s32.totalorder %s43, 0
    %p212 = por %p210, %p211
    %s213 = ssub.s32 %s45, %s52
    %p214 = scmp.eq.s32.totalorder %s213, 0
    %s216 = sadd.s32 %s215, 1
    %s217 = scalar_select %p214, %s215, %s216
    %p220 = pneg %p214
    %p221 = scmp.eq.s32.totalorder %s37, 3
    %p222 = por %p220, %p221
    %p223 = scmp.ne.s32.totalorder %s215, %s218
    %p224 = scmp.eq.s32.totalorder %s37, 0
    %p225 = por %p223, %p224
    %p226 = scmp.ne.s32.totalorder %s215, %s218
    %p227 = scmp.eq.s32.totalorder %s42, 3
    %p228 = por %p226, %p227
    %p229 = scmp.ne.s32.totalorder %s218, %s219
    %p230 = scmp.eq.s32.totalorder %s42, 0
    %p231 = por %p229, %p230
    %p232 = scmp.ne.s32.totalorder %s218, %s219
    %p233 = scmp.eq.s32.totalorder %s43, 3
    %p234 = por %p232, %p233
    %p236 = scmp.ne.s32.totalorder %s219, %s235
    %p237 = scmp.eq.s32.totalorder %s43, 0
    %p238 = por %p236, %p237
    %s239 = ssub.s32 %s45, %s52
    %p240 = scmp.eq.s32.totalorder %s239, 0
    %s242 = sadd.s32 %s241, 1
    %s243 = scalar_select %p240, %s241, %s242
    %p246 = pneg %p240
    %p247 = scmp.eq.s32.totalorder %s37, 3
    %p248 = por %p246, %p247
    %p249 = scmp.ne.s32.totalorder %s241, %s244
    %p250 = scmp.eq.s32.totalorder %s37, 0
    %p251 = por %p249, %p250
    %p252 = scmp.ne.s32.totalorder %s241, %s244
    %p253 = scmp.eq.s32.totalorder %s42, 3
    %p254 = por %p252, %p253
    %p255 = scmp.ne.s32.totalorder %s244, %s245
    %p256 = scmp.eq.s32.totalorder %s42, 0
    %p257 = por %p255, %p256
    %p258 = scmp.ne.s32.totalorder %s244, %s245
    %p259 = scmp.eq.s32.totalorder %s43, 3
    %p260 = por %p258, %p259
    %p262 = scmp.ne.s32.totalorder %s245, %s261
    %p263 = scmp.eq.s32.totalorder %s43, 0
    %p264 = por %p262, %p263
    %s265 = ssub.s32 %s45, %s52
    %p266 = scmp.eq.s32.totalorder %s265, 0
    %s268 = sadd.s32 %s267, 1
    %s269 = scalar_select %p266, %s267, %s268
    %p272 = pneg %p266
    %p273 = scmp.eq.s32.totalorder %s37, 3
    %p274 = por %p272, %p273
    %p275 = scmp.ne.s32.totalorder %s267, %s270
    %p276 = scmp.eq.s32.totalorder %s37, 0
    %p277 = por %p275, %p276
    %p278 = scmp.ne.s32.totalorder %s267, %s270
    %p279 = scmp.eq.s32.totalorder %s42, 3
    %p280 = por %p278, %p279
    %p281 = scmp.ne.s32.totalorder %s270, %s271
    %p282 = scmp.eq.s32.totalorder %s42, 0
    %p283 = por %p281, %p282
    %p284 = scmp.ne.s32.totalorder %s270, %s271
    %p285 = scmp.eq.s32.totalorder %s43, 3
    %p286 = por %p284, %p285
    %p288 = scmp.ne.s32.totalorder %s271, %s287
    %p289 = scmp.eq.s32.totalorder %s43, 0
    %p290 = por %p288, %p289
    %s291 = ssub.s32 %s45, %s52
    %p292 = scmp.eq.s32.totalorder %s291, 0
    %s294 = sadd.s32 %s293, 1
    %s295 = scalar_select %p292, %s293, %s294
    %p298 = pneg %p292
    %p299 = scmp.eq.s32.totalorder %s37, 3
    %p300 = por %p298, %p299
    %p301 = scmp.ne.s32.totalorder %s293, %s296
    %p302 = scmp.eq.s32.totalorder %s37, 0
    %p303 = por %p301, %p302
    %p304 = scmp.ne.s32.totalorder %s293, %s296
    %p305 = scmp.eq.s32.totalorder %s42, 3
    %p306 = por %p304, %p305
    %p307 = scmp.ne.s32.totalorder %s296, %s297
    %p308 = scmp.eq.s32.totalorder %s42, 0
    %p309 = por %p307, %p308
    %p310 = scmp.ne.s32.totalorder %s296, %s297
    %p311 = scmp.eq.s32.totalorder %s43, 3
    %p312 = por %p310, %p311
    %p314 = scmp.ne.s32.totalorder %s297, %s313
    %p315 = scmp.eq.s32.totalorder %s43, 0
    %p316 = por %p314, %p315
    %s317 = ssub.s32 %s45, %s52
    %p318 = scmp.eq.s32.totalorder %s317, 0
    %s320 = sadd.s32 %s319, 1
    %s321 = scalar_select %p318, %s319, %s320
    %p324 = pneg %p318
    %p325 = scmp.eq.s32.totalorder %s37, 3
    %p326 = por %p324, %p325
    %p327 = scmp.ne.s32.totalorder %s319, %s322
    %p328 = scmp.eq.s32.totalorder %s37, 0
    %p329 = por %p327, %p328
    %p330 = scmp.ne.s32.totalorder %s319, %s322
    %p331 = scmp.eq.s32.totalorder %s42, 3
    %p332 = por %p330, %p331
    %p333 = scmp.ne.s32.totalorder %s322, %s323
    %p334 = scmp.eq.s32.totalorder %s42, 0
    %p335 = por %p333, %p334
    %p336 = scmp.ne.s32.totalorder %s322, %s323
    %p337 = scmp.eq.s32.totalorder %s43, 3
    %p338 = por %p336, %p337
    %p340 = scmp.ne.s32.totalorder %s323, %s339
    %p341 = scmp.eq.s32.totalorder %s43, 0
    %p342 = por %p340, %p341
    %s343 = ssub.s32 %s45, %s52
    %p344 = scmp.eq.s32.totalorder %s343, 0
    %s346 = sadd.s32 %s345, 1
    %s347 = scalar_select %p344, %s345, %s346
    %p350 = pneg %p344
    %p351 = scmp.eq.s32.totalorder %s37, 3
    %p352 = por %p350, %p351
    %p353 = scmp.ne.s32.totalorder %s345, %s348
    %p354 = scmp.eq.s32.totalorder %s37, 0
    %p355 = por %p353, %p354
    %p356 = scmp.ne.s32.totalorder %s345, %s348
    %p357 = scmp.eq.s32.totalorder %s42, 3
    %p358 = por %p356, %p357
    %p359 = scmp.ne.s32.totalorder %s348, %s349
    %p360 = scmp.eq.s32.totalorder %s42, 0
    %p361 = por %p359, %p360
    %p362 = scmp.ne.s32.totalorder %s348, %s349
    %p363 = scmp.eq.s32.totalorder %s43, 3
    %p364 = por %p362, %p363
    %p366 = scmp.ne.s32.totalorder %s349, %s365
    %p367 = scmp.eq.s32.totalorder %s43, 0
    %p368 = por %p366, %p367
    %s369 = ssub.s32 %s45, %s52
    %p370 = scmp.eq.s32.totalorder %s369, 0
    %s372 = sadd.s32 %s371, 1
    %s373 = scalar_select %p370, %s371, %s372
    %p376 = pneg %p370
    %p377 = scmp.eq.s32.totalorder %s37, 3
    %p378 = por %p376, %p377
    %p379 = scmp.ne.s32.totalorder %s371, %s374
    %p380 = scmp.eq.s32.totalorder %s37, 0
    %p381 = por %p379, %p380
    %p382 = scmp.ne.s32.totalorder %s371, %s374
    %p383 = scmp.eq.s32.totalorder %s42, 3
    %p384 = por %p382, %p383
    %p385 = scmp.ne.s32.totalorder %s374, %s375
    %p386 = scmp.eq.s32.totalorder %s42, 0
    %p387 = por %p385, %p386
    %p388 = scmp.ne.s32.totalorder %s374, %s375
    %p389 = scmp.eq.s32.totalorder %s43, 3
    %p390 = por %p388, %p389
    %p392 = scmp.ne.s32.totalorder %s375, %s391
    %p393 = scmp.eq.s32.totalorder %s43, 0
    %p394 = por %p392, %p393
    %s396 = sadd.s32 %s395, 1
    %p399 = scmp.eq.s32.totalorder %s37, 3
    %p400 = scmp.ne.s32.totalorder %s395, %s397
    %p401 = scmp.eq.s32.totalorder %s37, 0
    %p402 = por %p400, %p401
    %p403 = scmp.ne.s32.totalorder %s395, %s397
    %p404 = scmp.eq.s32.totalorder %s42, 3
    %p405 = por %p403, %p404
    %p406 = scmp.ne.s32.totalorder %s397, %s398
    %p407 = scmp.eq.s32.totalorder %s42, 0
    %p408 = por %p406, %p407
    %p409 = scmp.ne.s32.totalorder %s397, %s398
    %p410 = scmp.eq.s32.totalorder %s43, 3
    %p411 = por %p409, %p410
    %p413 = scmp.ne.s32.totalorder %s398, %s412
    %p414 = scmp.eq.s32.totalorder %s43, 0
    %p415 = por %p413, %p414
    %s417 = sadd.s32 %s416, 1
    %p420 = scmp.eq.s32.totalorder %s37, 3
    %p421 = scmp.ne.s32.totalorder %s416, %s418
    %p422 = scmp.eq.s32.totalorder %s37, 0
    %p423 = por %p421, %p422
    %p424 = scmp.ne.s32.totalorder %s416, %s418
    %p425 = scmp.eq.s32.totalorder %s42, 3
    %p426 = por %p424, %p425
    %p427 = scmp.ne.s32.totalorder %s418, %s419
    %p428 = scmp.eq.s32.totalorder %s42, 0
    %p429 = por %p427, %p428
    %p430 = scmp.ne.s32.totalorder %s418, %s419
    %p431 = scmp.eq.s32.totalorder %s43, 3
    %p432 = por %p430, %p431
    %p434 = scmp.ne.s32.totalorder %s419, %s433
    %p435 = scmp.eq.s32.totalorder %s43, 0
    %p436 = por %p434, %p435
    %s438 = sadd.s32 %s437, 1
    %p441 = scmp.eq.s32.totalorder %s37, 3
    %p442 = scmp.ne.s32.totalorder %s437, %s439
    %p443 = scmp.eq.s32.totalorder %s37, 0
    %p444 = por %p442, %p443
    %p445 = scmp.ne.s32.totalorder %s437, %s439
    %p446 = scmp.eq.s32.totalorder %s42, 3
    %p447 = por %p445, %p446
    %p448 = scmp.ne.s32.totalorder %s439, %s440
    %p449 = scmp.eq.s32.totalorder %s42, 0
    %p450 = por %p448, %p449
    %p451 = scmp.ne.s32.totalorder %s439, %s440
    %p452 = scmp.eq.s32.totalorder %s43, 3
    %p453 = por %p451, %p452
    %p455 = scmp.ne.s32.totalorder %s440, %s454
    %p456 = scmp.eq.s32.totalorder %s43, 0
    %p457 = por %p455, %p456
    %s459 = sadd.s32 %s458, 1
    %p462 = scmp.eq.s32.totalorder %s37, 3
    %p463 = scmp.ne.s32.totalorder %s458, %s460
    %p464 = scmp.eq.s32.totalorder %s37, 0
    %p465 = por %p463, %p464
    %p466 = scmp.ne.s32.totalorder %s458, %s460
    %p467 = scmp.eq.s32.totalorder %s42, 3
    %p468 = por %p466, %p467
    %p469 = scmp.ne.s32.totalorder %s460, %s461
    %p470 = scmp.eq.s32.totalorder %s42, 0
    %p471 = por %p469, %p470
    %p472 = scmp.ne.s32.totalorder %s460, %s461
    %p473 = scmp.eq.s32.totalorder %s43, 3
    %p474 = por %p472, %p473
    %p476 = scmp.ne.s32.totalorder %s461, %s475
    %p477 = scmp.eq.s32.totalorder %s43, 0
    %p478 = por %p476, %p477
    %s480 = sadd.s32 %s479, 1
    %p483 = scmp.eq.s32.totalorder %s37, 3
    %p484 = scmp.ne.s32.totalorder %s479, %s481
    %p485 = scmp.eq.s32.totalorder %s37, 0
    %p486 = por %p484, %p485
    %p487 = scmp.ne.s32.totalorder %s479, %s481
    %p488 = scmp.eq.s32.totalorder %s42, 3
    %p489 = por %p487, %p488
    %p490 = scmp.ne.s32.totalorder %s481, %s482
    %p491 = scmp.eq.s32.totalorder %s42, 0
    %p492 = por %p490, %p491
    %p493 = scmp.ne.s32.totalorder %s481, %s482
    %p494 = scmp.eq.s32.totalorder %s43, 3
    %p495 = por %p493, %p494
    %p497 = scmp.ne.s32.totalorder %s482, %s496
    %p498 = scmp.eq.s32.totalorder %s43, 0
    %p499 = por %p497, %p498
    %s501 = sadd.s32 %s500, 1
    %p504 = scmp.eq.s32.totalorder %s37, 3
    %p505 = scmp.ne.s32.totalorder %s500, %s502
    %p506 = scmp.eq.s32.totalorder %s37, 0
    %p507 = por %p505, %p506
    %p508 = scmp.ne.s32.totalorder %s500, %s502
    %p509 = scmp.eq.s32.totalorder %s42, 3
    %p510 = por %p508, %p509
    %p511 = scmp.ne.s32.totalorder %s502, %s503
    %p512 = scmp.eq.s32.totalorder %s42, 0
    %p513 = por %p511, %p512
    %p514 = scmp.ne.s32.totalorder %s502, %s503
    %p515 = scmp.eq.s32.totalorder %s43, 3
    %p516 = por %p514, %p515
    %p518 = scmp.ne.s32.totalorder %s503, %s517
    %p519 = scmp.eq.s32.totalorder %s43, 0
    %p520 = por %p518, %p519
    %s522 = sadd.s32 %s521, 1
    %p525 = scmp.eq.s32.totalorder %s37, 3
    %p526 = scmp.ne.s32.totalorder %s521, %s523
    %p527 = scmp.eq.s32.totalorder %s37, 0
    %p528 = por %p526, %p527
    %p529 = scmp.ne.s32.totalorder %s521, %s523
    %p530 = scmp.eq.s32.totalorder %s42, 3
    %p531 = por %p529, %p530
    %p532 = scmp.ne.s32.totalorder %s523, %s524
    %p533 = scmp.eq.s32.totalorder %s42, 0
    %p534 = por %p532, %p533
    %p535 = scmp.ne.s32.totalorder %s523, %s524
    %p536 = scmp.eq.s32.totalorder %s43, 3
    %p537 = por %p535, %p536
    %p539 = scmp.ne.s32.totalorder %s524, %s538
    %p540 = scmp.eq.s32.totalorder %s43, 0
    %p541 = por %p539, %p540
    %s543 = sadd.s32 %s542, 1
    %p546 = scmp.eq.s32.totalorder %s37, 3
    %p547 = scmp.ne.s32.totalorder %s542, %s544
    %p548 = scmp.eq.s32.totalorder %s37, 0
    %p549 = por %p547, %p548
    %p550 = scmp.ne.s32.totalorder %s542, %s544
    %p551 = scmp.eq.s32.totalorder %s42, 3
    %p552 = por %p550, %p551
    %p553 = scmp.ne.s32.totalorder %s544, %s545
    %p554 = scmp.eq.s32.totalorder %s42, 0
    %p555 = por %p553, %p554
    %p556 = scmp.ne.s32.totalorder %s544, %s545
    %p557 = scmp.eq.s32.totalorder %s43, 3
    %p558 = por %p556, %p557
    %p560 = scmp.ne.s32.totalorder %s545, %s559
    %p561 = scmp.eq.s32.totalorder %s43, 0
    %p562 = por %p560, %p561
    %s564 = sadd.s32 %s563, 1
    %p567 = scmp.eq.s32.totalorder %s37, 3
    %p568 = scmp.ne.s32.totalorder %s563, %s565
    %p569 = scmp.eq.s32.totalorder %s37, 0
    %p570 = por %p568, %p569
    %p571 = scmp.ne.s32.totalorder %s563, %s565
    %p572 = scmp.eq.s32.totalorder %s42, 3
    %p573 = por %p571, %p572
    %p574 = scmp.ne.s32.totalorder %s565, %s566
    %p575 = scmp.eq.s32.totalorder %s42, 0
    %p576 = por %p574, %p575
    %p577 = scmp.ne.s32.totalorder %s565, %s566
    %p578 = scmp.eq.s32.totalorder %s43, 3
    %p579 = por %p577, %p578
    %p581 = scmp.ne.s32.totalorder %s566, %s580
    %p582 = scmp.eq.s32.totalorder %s43, 0
    %p583 = por %p581, %p582
    %s585 = sadd.s32 %s584, 1
    %p588 = scmp.eq.s32.totalorder %s37, 3
    %p589 = scmp.ne.s32.totalorder %s584, %s586
    %p590 = scmp.eq.s32.totalorder %s37, 0
    %p591 = por %p589, %p590
    %p592 = scmp.ne.s32.totalorder %s584, %s586
    %p593 = scmp.eq.s32.totalorder %s42, 3
    %p594 = por %p592, %p593
    %p595 = scmp.ne.s32.totalorder %s586, %s587
    %p596 = scmp.eq.s32.totalorder %s42, 0
    %p597 = por %p595, %p596
    %p598 = scmp.ne.s32.totalorder %s586, %s587
    %p599 = scmp.eq.s32.totalorder %s43, 3
    %p600 = por %p598, %p599
    %p602 = scmp.ne.s32.totalorder %s587, %s601
    %p603 = scmp.eq.s32.totalorder %s43, 0
    %p604 = por %p602, %p603
    %s606 = sadd.s32 %s605, 1
    %p609 = scmp.eq.s32.totalorder %s37, 3
    %p610 = scmp.ne.s32.totalorder %s605, %s607
    %p611 = scmp.eq.s32.totalorder %s37, 0
    %p612 = por %p610, %p611
    %p613 = scmp.ne.s32.totalorder %s605, %s607
    %p614 = scmp.eq.s32.totalorder %s42, 3
    %p615 = por %p613, %p614
    %p616 = scmp.ne.s32.totalorder %s607, %s608
    %p617 = scmp.eq.s32.totalorder %s42, 0
    %p618 = por %p616, %p617
    %p619 = scmp.ne.s32.totalorder %s607, %s608
    %p620 = scmp.eq.s32.totalorder %s43, 3
    %p621 = por %p619, %p620
    %p623 = scmp.ne.s32.totalorder %s608, %s622
    %p624 = scmp.eq.s32.totalorder %s43, 0
    %p625 = por %p623, %p624
    %s627 = sadd.s32 %s626, 1
    %p630 = scmp.eq.s32.totalorder %s37, 3
    %p631 = scmp.ne.s32.totalorder %s626, %s628
    %p632 = scmp.eq.s32.totalorder %s37, 0
    %p633 = por %p631, %p632
    %p634 = scmp.ne.s32.totalorder %s626, %s628
    %p635 = scmp.eq.s32.totalorder %s42, 3
    %p636 = por %p634, %p635
    %p637 = scmp.ne.s32.totalorder %s628, %s629
    %p638 = scmp.eq.s32.totalorder %s42, 0
    %p639 = por %p637, %p638
    %p640 = scmp.ne.s32.totalorder %s628, %s629
    %p641 = scmp.eq.s32.totalorder %s43, 3
    %p642 = por %p640, %p641
    %p644 = scmp.ne.s32.totalorder %s629, %s643
    %p645 = scmp.eq.s32.totalorder %s43, 0
    %p646 = por %p644, %p645
    %s647 = ssub.s32 %s44, %s56
    %p648 = scmp.eq.s32.totalorder %s647, 0
    %s650 = sadd.s32 %s649, 1
    %s651 = scalar_select %p648, %s649, %s650
    %p654 = pneg %p648
    %p655 = scmp.eq.s32.totalorder %s37, 3
    %p656 = por %p654, %p655
    %p657 = scmp.ne.s32.totalorder %s649, %s652
    %p658 = scmp.eq.s32.totalorder %s37, 0
    %p659 = por %p657, %p658
    %p660 = scmp.ne.s32.totalorder %s649, %s652
    %p661 = scmp.eq.s32.totalorder %s42, 3
    %p662 = por %p660, %p661
    %p663 = scmp.ne.s32.totalorder %s652, %s653
    %p664 = scmp.eq.s32.totalorder %s42, 0
    %p665 = por %p663, %p664
    %p666 = scmp.ne.s32.totalorder %s652, %s653
    %p667 = scmp.eq.s32.totalorder %s43, 3
    %p668 = por %p666, %p667
    %p670 = scmp.ne.s32.totalorder %s653, %s669
    %p671 = scmp.eq.s32.totalorder %s43, 0
    %p672 = por %p670, %p671
    %p673 = scmp.le.s32.totalorder 1, %s37
    %p674 = scmp.lt.s32.totalorder %s37, 5
    %p675 = pnand %p673, %p674
    %p676 = pneg %p675
    // Predicated region
    $region9: #{market_transformer_forward.1} parent=5 // pred_check
      _
    $region10: #{market_transformer_forward.1} parent=5 // pred_check_branch
      %678 = sbr.rel (%p675) target = $region12
    $region11: #{market_transformer_forward.1} parent=5 // pred_region
      %s679 = ssub.s32 %s37, 1
      // Predicated region
      $region13: #{market_transformer_forward.1} parent=11 // pred_check
        %p680 = pneg %p408
      $region14: #{market_transformer_forward.1} parent=11 // pred_check_branch
        %682 = sbr.rel (%p680) target = $region16
      $region15: #{market_transformer_forward.1} parent=11 // pred_region
        _
      $region16: #{market_transformer_forward.1} parent=11 // pred_fallthru
        _
      // Predicated region
      $region17: #{market_transformer_forward.1} parent=11 // pred_check
        %p683 = pneg %p429
      $region18: #{market_transformer_forward.1} parent=11 // pred_check_branch
        %685 = sbr.rel (%p683) target = $region20
      $region19: #{market_transformer_forward.1} parent=11 // pred_region
        _
      $region20: #{market_transformer_forward.1} parent=11 // pred_fallthru
        _
      // Predicated region
      $region21: #{market_transformer_forward.1} parent=11 // pred_check
        %p686 = pneg %p450
      $region22: #{market_transformer_forward.1} parent=11 // pred_check_branch
        %688 = sbr.rel (%p686) target = $region24
      $region23: #{market_transformer_forward.1} parent=11 // pred_region
        _
      $region24: #{market_transformer_forward.1} parent=11 // pred_fallthru
        _
      // Predicated region
      $region25: #{market_transformer_forward.1} parent=11 // pred_check
        %p689 = pneg %p471
      $region26: #{market_transformer_forward.1} parent=11 // pred_check_branch
        %691 = sbr.rel (%p689) target = $region28
      $region27: #{market_transformer_forward.1} parent=11 // pred_region
        _
      $region28: #{market_transformer_forward.1} parent=11 // pred_fallthru
        _
      // Predicated region
      $region29: #{market_transformer_forward.1} parent=11 // pred_check
        %p692 = pneg %p492
      $region30: #{market_transformer_forward.1} parent=11 // pred_check_branch
        %694 = sbr.rel (%p692) target = $region32
      $region31: #{market_transformer_forward.1} parent=11 // pred_region
        _
      $region32: #{market_transformer_forward.1} parent=11 // pred_fallthru
        _
      // Predicated region
      $region33: #{market_transformer_forward.1} parent=11 // pred_check
        %p695 = pneg %p513
      $region34: #{market_transformer_forward.1} parent=11 // pred_check_branch
        %697 = sbr.rel (%p695) target = $region36
      $region35: #{market_transformer_forward.1} parent=11 // pred_region
        _
      $region36: #{market_transformer_forward.1} parent=11 // pred_fallthru
        _
      // Predicated region
      $region37: #{market_transformer_forward.1} parent=11 // pred_check
        %p698 = pneg %p534
      $region38: #{market_transformer_forward.1} parent=11 // pred_check_branch
        %700 = sbr.rel (%p698) target = $region40
      $region39: #{market_transformer_forward.1} parent=11 // pred_region
        _
      $region40: #{market_transformer_forward.1} parent=11 // pred_fallthru
        _
      // Predicated region
      $region41: #{market_transformer_forward.1} parent=11 // pred_check
        %p701 = pneg %p555
      $region42: #{market_transformer_forward.1} parent=11 // pred_check_branch
        %703 = sbr.rel (%p701) target = $region44
      $region43: #{market_transformer_forward.1} parent=11 // pred_region
        _
      $region44: #{market_transformer_forward.1} parent=11 // pred_fallthru
        _
      // Predicated region
      $region45: #{market_transformer_forward.1} parent=11 // pred_check
        %p704 = pneg %p576
      $region46: #{market_transformer_forward.1} parent=11 // pred_check_branch
        %706 = sbr.rel (%p704) target = $region48
      $region47: #{market_transformer_forward.1} parent=11 // pred_region
        _
      $region48: #{market_transformer_forward.1} parent=11 // pred_fallthru
        _
      // Predicated region
      $region49: #{market_transformer_forward.1} parent=11 // pred_check
        %p707 = pneg %p597
      $region50: #{market_transformer_forward.1} parent=11 // pred_check_branch
        %709 = sbr.rel (%p707) target = $region52
      $region51: #{market_transformer_forward.1} parent=11 // pred_region
        _
      $region52: #{market_transformer_forward.1} parent=11 // pred_fallthru
        _
      // Predicated region
      $region53: #{market_transformer_forward.1} parent=11 // pred_check
        %p710 = pneg %p618
      $region54: #{market_transformer_forward.1} parent=11 // pred_check_branch
        %712 = sbr.rel (%p710) target = $region56
      $region55: #{market_transformer_forward.1} parent=11 // pred_region
        _
      $region56: #{market_transformer_forward.1} parent=11 // pred_fallthru
        _
      // Predicated region
      $region57: #{market_transformer_forward.1} parent=11 // pred_check
        %p713 = pneg %p639
      $region58: #{market_transformer_forward.1} parent=11 // pred_check_branch
        %715 = sbr.rel (%p713) target = $region60
      $region59: #{market_transformer_forward.1} parent=11 // pred_region
        _
      $region60: #{market_transformer_forward.1} parent=11 // pred_fallthru
        _
    $region12: #{market_transformer_forward.1} parent=5 // pred_fallthru
      _
    %p716 = scmp.lt.s32.totalorder %s37, 4
    // Predicated region
    $region61: #{market_transformer_forward.1} parent=5 // pred_check
      %p717 = pneg %p716
    $region62: #{market_transformer_forward.1} parent=5 // pred_check_branch
      %719 = sbr.rel (%p717) target = $region64
    $region63: #{market_transformer_forward.1} parent=5 // pred_region
      // Predicated region
      $region65: #{market_transformer_forward.1} parent=63 // pred_check
        %p720 = pneg %p69
      $region66: #{market_transformer_forward.1} parent=63 // pred_check_branch
        %722 = sbr.rel (%p720) target = $region68
      $region67: #{market_transformer_forward.1} parent=63 // pred_region
        %s723 = smul.u32 4, %s44
        %p724 = scmp.lt.s32.totalorder %s723, 7
        %s725 = scalar_select %p724, %s723, 7
        %s726 = smul.addr %s725, 8
        %s727 = scalar_lea.vmem %s0, %s726
        %s728 = smul.u32 4, %s44
      $region68: #{market_transformer_forward.1} parent=63 // pred_fallthru
        _
      // Predicated region
      $region69: #{market_transformer_forward.1} parent=63 // pred_check
        %p729 = pneg %p95
      $region70: #{market_transformer_forward.1} parent=63 // pred_check_branch
        %731 = sbr.rel (%p729) target = $region72
      $region71: #{market_transformer_forward.1} parent=63 // pred_region
        %p732 = scmp.lt.s32.totalorder %s45, 1
        %s733 = scalar_select %p732, %s45, 1
        %s734 = smul.addr %s733, 4
        %s735 = smul.addr %s734, 4
        %s736 = scalar_lea.vmem %s1, %s735
      $region72: #{market_transformer_forward.1} parent=63 // pred_fallthru
        _
      // Predicated region
      $region73: #{market_transformer_forward.1} parent=63 // pred_check
        %p737 = pneg %p121
      $region74: #{market_transformer_forward.1} parent=63 // pred_check_branch
        %739 = sbr.rel (%p737) target = $region76
      $region75: #{market_transformer_forward.1} parent=63 // pred_region
        %p740 = scmp.lt.s32.totalorder %s45, 1
        %s741 = scalar_select %p740, %s45, 1
        %s742 = scalar_lea.vmem %s2, %s741
      $region76: #{market_transformer_forward.1} parent=63 // pred_fallthru
        _
      // Predicated region
      $region77: #{market_transformer_forward.1} parent=63 // pred_check
        %p743 = pneg %p147
      $region78: #{market_transformer_forward.1} parent=63 // pred_check_branch
        %745 = sbr.rel (%p743) target = $region80
      $region79: #{market_transformer_forward.1} parent=63 // pred_region
        %p746 = scmp.lt.s32.totalorder %s45, 1
        %s747 = scalar_select %p746, %s45, 1
        %s748 = smul.addr %s747, 4
        %s749 = smul.addr %s748, 4
        %s750 = scalar_lea.vmem %s3, %s749
      $region80: #{market_transformer_forward.1} parent=63 // pred_fallthru
        _
      // Predicated region
      $region81: #{market_transformer_forward.1} parent=63 // pred_check
        %p751 = pneg %p173
      $region82: #{market_transformer_forward.1} parent=63 // pred_check_branch
        %753 = sbr.rel (%p751) target = $region84
      $region83: #{market_transformer_forward.1} parent=63 // pred_region
        %p754 = scmp.lt.s32.totalorder %s45, 1
        %s755 = scalar_select %p754, %s45, 1
        %s756 = scalar_lea.vmem %s4, %s755
      $region84: #{market_transformer_forward.1} parent=63 // pred_fallthru
        _
      // Predicated region
      $region85: #{market_transformer_forward.1} parent=63 // pred_check
        %p757 = pneg %p199
      $region86: #{market_transformer_forward.1} parent=63 // pred_check_branch
        %759 = sbr.rel (%p757) target = $region88
      $region87: #{market_transformer_forward.1} parent=63 // pred_region
        %p760 = scmp.lt.s32.totalorder %s45, 1
        %s761 = scalar_select %p760, %s45, 1
        %s762 = scalar_lea.vmem %s5, %s761
      $region88: #{market_transformer_forward.1} parent=63 // pred_fallthru
        _
      // Predicated region
      $region89: #{market_transformer_forward.1} parent=63 // pred_check
        %p763 = pneg %p225
      $region90: #{market_transformer_forward.1} parent=63 // pred_check_branch
        %765 = sbr.rel (%p763) target = $region92
      $region91: #{market_transformer_forward.1} parent=63 // pred_region
        %p766 = scmp.lt.s32.totalorder %s45, 1
        %s767 = scalar_select %p766, %s45, 1
        %s768 = scalar_lea.vmem %s6, %s767
      $region92: #{market_transformer_forward.1} parent=63 // pred_fallthru
        _
      // Predicated region
      $region93: #{market_transformer_forward.1} parent=63 // pred_check
        %p769 = pneg %p251
      $region94: #{market_transformer_forward.1} parent=63 // pred_check_branch
        %771 = sbr.rel (%p769) target = $region96
      $region95: #{market_transformer_forward.1} parent=63 // pred_region
        %p772 = scmp.lt.s32.totalorder %s45, 1
        %s773 = scalar_select %p772, %s45, 1
        %s774 = smul.addr %s773, 4
        %s775 = smul.addr %s774, 4
        %s776 = scalar_lea.vmem %s7, %s775
      $region96: #{market_transformer_forward.1} parent=63 // pred_fallthru
        _
      // Predicated region
      $region97: #{market_transformer_forward.1} parent=63 // pred_check
        %p777 = pneg %p277
      $region98: #{market_transformer_forward.1} parent=63 // pred_check_branch
        %779 = sbr.rel (%p777) target = $region100
      $region99: #{market_transformer_forward.1} parent=63 // pred_region
        %p780 = scmp.lt.s32.totalorder %s45, 1
        %s781 = scalar_select %p780, %s45, 1
        %s782 = scalar_lea.vmem %s8, %s781
      $region100: #{market_transformer_forward.1} parent=63 // pred_fallthru
        _
      // Predicated region
      $region101: #{market_transformer_forward.1} parent=63 // pred_check
        %p783 = pneg %p303
      $region102: #{market_transformer_forward.1} parent=63 // pred_check_branch
        %785 = sbr.rel (%p783) target = $region104
      $region103: #{market_transformer_forward.1} parent=63 // pred_region
        %p786 = scmp.lt.s32.totalorder %s45, 1
        %s787 = scalar_select %p786, %s45, 1
        %s788 = smul.addr %s787, 8
        %s789 = smul.addr %s788, 4
        %s790 = scalar_lea.vmem %s9, %s789
      $region104: #{market_transformer_forward.1} parent=63 // pred_fallthru
        _
      // Predicated region
      $region105: #{market_transformer_forward.1} parent=63 // pred_check
        %p791 = pneg %p329
      $region106: #{market_transformer_forward.1} parent=63 // pred_check_branch
        %793 = sbr.rel (%p791) target = $region108
      $region107: #{market_transformer_forward.1} parent=63 // pred_region
        %p794 = scmp.lt.s32.totalorder %s45, 1
        %s795 = scalar_select %p794, %s45, 1
        %s796 = scalar_lea.vmem %s10, %s795
      $region108: #{market_transformer_forward.1} parent=63 // pred_fallthru
        _
      // Predicated region
      $region109: #{market_transformer_forward.1} parent=63 // pred_check
        %p797 = pneg %p355
      $region110: #{market_transformer_forward.1} parent=63 // pred_check_branch
        %799 = sbr.rel (%p797) target = $region112
      $region111: #{market_transformer_forward.1} parent=63 // pred_region
        %p800 = scmp.lt.s32.totalorder %s45, 1
        %s801 = scalar_select %p800, %s45, 1
        %s802 = scalar_lea.vmem %s11, %s801
      $region112: #{market_transformer_forward.1} parent=63 // pred_fallthru
        _
      // Predicated region
      $region113: #{market_transformer_forward.1} parent=63 // pred_check
        %p803 = pneg %p381
      $region114: #{market_transformer_forward.1} parent=63 // pred_check_branch
        %805 = sbr.rel (%p803) target = $region116
      $region115: #{market_transformer_forward.1} parent=63 // pred_region
        %p806 = scmp.lt.s32.totalorder %s45, 1
        %s807 = scalar_select %p806, %s45, 1
        %s808 = scalar_lea.vmem %s12, %s807
      $region116: #{market_transformer_forward.1} parent=63 // pred_fallthru
        _
    $region64: #{market_transformer_forward.1} parent=5 // pred_fallthru
      _
    %p809 = scmp.le.s32.totalorder 1, %s37
    %p810 = scmp.lt.s32.totalorder %s37, 5
    %p811 = pnand %p809, %p810
    %p812 = pneg %p811
    // Predicated region
    $region117: #{market_transformer_forward.1} parent=5 // pred_check
      _
    $region118: #{market_transformer_forward.1} parent=5 // pred_check_branch
      %814 = sbr.rel (%p811) target = $region120
    $region119: #{market_transformer_forward.1} parent=5 // pred_region
      %s815 = ssub.s32 %s37, 1
      %s816 = smul.u32 4, %s46
      %p817 = scmp.lt.s32.totalorder %s816, 7
      %s818 = scalar_select %p817, %s816, 7
      %s819 = smul.addr %s818, 8
      %s820 = scalar_lea.vmem %s0, %s819
      %p821 = pneg %p75
      %p822 = pneg %p72
      %p823 = scmp.lt.s32.totalorder %s47, 1
      %s824 = scalar_select %p823, %s47, 1
      %s825 = smul.addr %s824, 4
      %s826 = smul.addr %s825, 4
      %s827 = scalar_lea.vmem %s1, %s826
      %p828 = pneg %p101
      %p829 = pneg %p98
      %p830 = scmp.lt.s32.totalorder %s47, 1
      %s831 = scalar_select %p830, %s47, 1
      %s832 = scalar_lea.vmem %s2, %s831
      %p833 = pneg %p127
      %p834 = pneg %p124
      %p835 = scmp.lt.s32.totalorder %s47, 1
      %s836 = scalar_select %p835, %s47, 1
      %s837 = smul.addr %s836, 4
      %s838 = smul.addr %s837, 4
      %s839 = scalar_lea.vmem %s3, %s838
      %p840 = pneg %p153
      %p841 = pneg %p150
      %p842 = scmp.lt.s32.totalorder %s47, 1
      %s843 = scalar_select %p842, %s47, 1
      %s844 = scalar_lea.vmem %s4, %s843
      %p845 = pneg %p179
      %p846 = pneg %p176
      %p847 = scmp.lt.s32.totalorder %s47, 1
      %s848 = scalar_select %p847, %s47, 1
      %s849 = scalar_lea.vmem %s5, %s848
      %p850 = pneg %p205
      %p851 = pneg %p202
      %p852 = scmp.lt.s32.totalorder %s47, 1
      %s853 = scalar_select %p852, %s47, 1
      %s854 = scalar_lea.vmem %s6, %s853
      %p855 = pneg %p231
      %p856 = pneg %p228
      %p857 = scmp.lt.s32.totalorder %s47, 1
      %s858 = scalar_select %p857, %s47, 1
      %s859 = smul.addr %s858, 4
      %s860 = smul.addr %s859, 4
      %s861 = scalar_lea.vmem %s7, %s860
      %p862 = pneg %p257
      %p863 = pneg %p254
      %p864 = scmp.lt.s32.totalorder %s47, 1
      %s865 = scalar_select %p864, %s47, 1
      %s866 = scalar_lea.vmem %s8, %s865
      %p867 = pneg %p283
      %p868 = pneg %p280
      %p869 = scmp.lt.s32.totalorder %s47, 1
      %s870 = scalar_select %p869, %s47, 1
      %s871 = smul.addr %s870, 8
      %s872 = smul.addr %s871, 4
      %s873 = scalar_lea.vmem %s9, %s872
      %p874 = pneg %p309
      %p875 = pneg %p306
      %p876 = scmp.lt.s32.totalorder %s47, 1
      %s877 = scalar_select %p876, %s47, 1
      %s878 = scalar_lea.vmem %s10, %s877
      %p879 = pneg %p335
      %p880 = pneg %p332
      %p881 = scmp.lt.s32.totalorder %s47, 1
      %s882 = scalar_select %p881, %s47, 1
      %s883 = scalar_lea.vmem %s11, %s882
      %p884 = pneg %p361
      %p885 = pneg %p358
      %p886 = scmp.lt.s32.totalorder %s47, 1
      %s887 = scalar_select %p886, %s47, 1
      %s888 = scalar_lea.vmem %s12, %s887
      %p889 = pneg %p387
      %p890 = pneg %p384
      %p891 = pneg %p408
      %p892 = pneg %p405
      %p893 = pneg %p429
      %p894 = pneg %p426
      %p895 = pneg %p450
      %p896 = pneg %p447
      %p897 = pneg %p471
      %p898 = pneg %p468
      %p899 = pneg %p492
      %p900 = pneg %p489
      %p901 = pneg %p513
      %p902 = pneg %p510
      %p903 = pneg %p534
      %p904 = pneg %p531
      %p905 = pneg %p555
      %p906 = pneg %p552
      %p907 = pneg %p576
      %p908 = pneg %p573
      %p909 = pneg %p597
      %p910 = pneg %p594
      %p911 = pneg %p618
      %p912 = pneg %p615
      %p913 = pneg %p639
      %p914 = pneg %p636
      %p915 = pneg %p665
      %p916 = pneg %p662
      %s917 = smul.u32 4, %s46
      %p918 = scmp.lt.s32.totalorder %s917, 7
      %s919 = scalar_select %p918, %s917, 7
      %s920 = scalar_lea.vmem %s25, %s919
      %s921 = smul.u32 4, %s46
      %p922 = scmp.lt.s32.totalorder %s921, 7
      %s923 = scalar_select %p922, %s921, 7
      %s924 = smul.addr %s923, 8
      %s925 = scalar_lea.vmem %s0, %s924
      %s926 = smul.u32 4, %s46
      %p927 = scmp.lt.s32.totalorder %s47, 1
      %s928 = scalar_select %p927, %s47, 1
      %s929 = smul.addr %s928, 4
      %s930 = smul.addr %s929, 4
      %s931 = scalar_lea.vmem %s1, %s930
      %p932 = scmp.lt.s32.totalorder %s47, 1
      %s933 = scalar_select %p932, %s47, 1
      %s934 = scalar_lea.vmem %s2, %s933
      %p935 = scmp.lt.s32.totalorder %s47, 1
      %s936 = scalar_select %p935, %s47, 1
      %s937 = smul.addr %s936, 4
      %s938 = smul.addr %s937, 4
      %s939 = scalar_lea.vmem %s3, %s938
      %p940 = scmp.lt.s32.totalorder %s47, 1
      %s941 = scalar_select %p940, %s47, 1
      %s942 = scalar_lea.vmem %s4, %s941
      %p943 = scmp.lt.s32.totalorder %s47, 1
      %s944 = scalar_select %p943, %s47, 1
      %s945 = scalar_lea.vmem %s5, %s944
      %p946 = scmp.lt.s32.totalorder %s47, 1
      %s947 = scalar_select %p946, %s47, 1
      %s948 = scalar_lea.vmem %s6, %s947
      %p949 = scmp.lt.s32.totalorder %s47, 1
      %s950 = scalar_select %p949, %s47, 1
      %s951 = smul.addr %s950, 4
      %s952 = smul.addr %s951, 4
      %s953 = scalar_lea.vmem %s7, %s952
      %p954 = scmp.lt.s32.totalorder %s47, 1
      %s955 = scalar_select %p954, %s47, 1
      %s956 = scalar_lea.vmem %s8, %s955
      %p957 = scmp.lt.s32.totalorder %s47, 1
      %s958 = scalar_select %p957, %s47, 1
      %s959 = smul.addr %s958, 8
      %s960 = smul.addr %s959, 4
      %s961 = scalar_lea.vmem %s9, %s960
      %p962 = scmp.lt.s32.totalorder %s47, 1
      %s963 = scalar_select %p962, %s47, 1
      %s964 = scalar_lea.vmem %s10, %s963
      %p965 = scmp.lt.s32.totalorder %s47, 1
      %s966 = scalar_select %p965, %s47, 1
      %s967 = scalar_lea.vmem %s11, %s966
      %p968 = scmp.lt.s32.totalorder %s47, 1
      %s969 = scalar_select %p968, %s47, 1
      %s970 = scalar_lea.vmem %s12, %s969
      %s971 = smul.u32 4, %s46
      %p972 = scmp.lt.s32.totalorder %s971, 7
      %s973 = scalar_select %p972, %s971, 7
      %s974 = scalar_lea.vmem %s25, %s973
      %s975 = smul.u32 4, %s46
      %p977 = scmp.eq.s32.totalorder %s47, 0
      // Predicated region
      $region121: #{market_transformer_forward.1} parent=119 // pred_check
        %p978 = pneg %p977
      $region122: #{market_transformer_forward.1} parent=119 // pred_check_branch
        %980 = sbr.rel (%p978) target = $region124
      $region123: #{market_transformer_forward.1} parent=119 // pred_region
        %v981 = vld [vmem:[%s925] sm:$0xff]
        %v982 = vld [vmem:[%s925 + $0x8] sm:$0xff]
        %v983 = vld [vmem:[%s925 + $0x10] sm:$0xff]
        %v984 = vld [vmem:[%s925 + $0x18] sm:$0xff]
        %vm985 = vcmask 261120
        %986 = vst.msk [vmem:[#allocation2] sm:$0xff] %vm985, %v981
        %987 = vst.msk [vmem:[#allocation2 + $0x8] sm:$0xff] %vm985, %v982
        %988 = vst.msk [vmem:[#allocation2 + $0x10] sm:$0xff] %vm985, %v983
        %989 = vst.msk [vmem:[#allocation2 + $0x18] sm:$0xff] %vm985, %v984
      $region124: #{market_transformer_forward.1} parent=119 // pred_fallthru
        _
      %v990 = vld [vmem:[#allocation2] sm:$0xff]
      %v991 = vld [vmem:[#allocation2 + $0x8] sm:$0xff]
      %v992 = vld [vmem:[#allocation2 + $0x10] sm:$0xff]
      %v993 = vld [vmem:[#allocation2 + $0x18] sm:$0xff]
      %v994 = vld [vmem:[%s931] sm:$0xf]
      %v995 = vld [vmem:[%s931 + $0x4] sm:$0xf]
      %v996 = vld [vmem:[%s931 + $0x8] sm:$0xf]
      %v997 = vld [vmem:[%s931 + $0xc] sm:$0xf]
      %v998 = vld [vmem:[%s934] sm:$0x1]
      %v999 = vpack.c.bf16 %v991, %v990
      %v1000 = vpack.c.bf16 %v993, %v992
      %v1002 = vlaneseq
      %v1003 = vshrl.u32 %v1002, 7
      %v1004 = vsub.s32 0, %v1003
      %v1005 = vrot.slane %v998, %v1004
      %v1011 = vunpack.c.l.b16 %v994
      %v1012 = vunpack.c.l.b16 %v995
      %v1013 = vunpack.c.l.b16 %v996
      %v1014 = vunpack.c.l.b16 %v997
      %v1015 = vpack.c.b16 %v1012, %v1011
      %v1016 = vpack.c.b16 %v1014, %v1013
      %vm1019 = vcmask 261120
      %v1021 = vsel %vm1019, %v999, 0
      %v1024 = vsel %vm1019, %v1000, 0
      %1026 = vmatprep.subr.bf16.mxu0 0
      %1027 = vmatpush1.bf16.msra.mxu0 %v1015
      %1028 = vmatprep.subr.bf16.mxu0 0
      %1029 = vmatpush1.bf16.msra.mxu0 %v1016
      %1030 = vmatprep.subr.bf16.mxu0 0
      %1031 = vmatpush1.bf16.msra.mxu0 0
      %1032 = vmatprep.subr.bf16.mxu0 0
      %1033 = vmatpush1.bf16.msra.mxu0 0
      %1034 = vmatprep.subr.bf16.mxu0 0
      %1035 = vmatpush1.bf16.msra.mxu0 0
      %1036 = vmatprep.subr.bf16.mxu0 0
      %1037 = vmatpush1.bf16.msra.mxu0 0
      %1038 = vmatprep.subr.bf16.mxu0 0
      %1039 = vmatpush1.bf16.msra.mxu0 0
      %1040 = vmatprep.subr.bf16.mxu0 0
      %1041 = vmatpush1.bf16.msra.mxu0 0
      %1042 = vmatprep.subr.bf16.mxu0 0
      %1043 = vmatpush1.bf16.msra.mxu0 0
      %1044 = vmatprep.subr.bf16.mxu0 0
      %1045 = vmatpush1.bf16.msra.mxu0 0
      %1046 = vmatprep.subr.bf16.mxu0 0
      %1047 = vmatpush1.bf16.msra.mxu0 0
      %1048 = vmatprep.subr.bf16.mxu0 0
      %1049 = vmatpush1.bf16.msra.mxu0 0
      %1050 = vmatprep.subr.bf16.mxu0 0
      %1051 = vmatpush1.bf16.msra.mxu0 0
      %1052 = vmatprep.subr.bf16.mxu0 0
      %1053 = vmatpush1.bf16.msra.mxu0 0
      %1054 = vmatprep.subr.bf16.mxu0 0
      %1055 = vmatpush1.bf16.msra.mxu0 0
      %1056 = vmatprep.subr.bf16.mxu0 0
      %1057 = vmatpush1.bf16.msra.mxu0 0
      %1058 = vmatprep.mubr.bf16.mxu0 0
      %1059 = vmatmul.mubr.bf16.gmra.mrb[0].mxu0 %v1021
      %v1060 = vpop.f32.mrb[0].mxu0
      %v1061 = vadd.f32 %v1005, %v1060
      %v1062 = vpop.f32.mrb[0].mxu0
      %v1063 = vpop.f32.mrb[0].mxu0
      %v1064 = vadd.f32 %v1005, %v1063
      %v1065 = vpop.f32.mrb[0].mxu0
      %1066 = vmatprep.mubr.bf16.mxu0 0
      %1067 = vmatmul.mubr.bf16.gmra.mrb[0].mxu0 %v1024
      %v1068 = vpop.f32.mrb[0].mxu0
      %v1069 = vadd.f32 %v1005, %v1068
      %v1070 = vpop.f32.mrb[0].mxu0
      %v1071 = vpop.f32.mrb[0].mxu0
      %v1072 = vadd.f32 %v1005, %v1071
      %v1073 = vpop.f32.mrb[0].mxu0
      %1074 = vdwg.mxu0
      %v1075 = vpack.c.bf16 %v1061, %v1061
      %v1076 = vpack.c.bf16 %v1064, %v1064
      %v1077 = vpack.c.bf16 %v1069, %v1069
      %v1078 = vpack.c.bf16 %v1072, %v1072
      %1080 = vrot.lane.b32.xlu0 %v1075, 96
      %v1081 = vpop.permute.xlu0 %1080
      %vm1082 = vcmask 64512
      %v1084 = vsel %vm1082, %v1075, 0
      %v1087 = vsel %vm1082, %v1081, 0
      %1089 = vmatprep.subr.bf16.mxu0 0
      %1090 = vmatpush1.bf16.xpose.msra.mxu0 %v1087
      %1091 = vmatprep.subr.bf16.mxu0 0
      %1092 = vmatpush1.bf16.xpose.msra.mxu0 0
      %1093 = vmatprep.subr.bf16.mxu0 0
      %1094 = vmatpush1.bf16.xpose.msra.mxu0 0
      %1095 = vmatprep.subr.bf16.mxu0 0
      %1096 = vmatpush1.bf16.xpose.msra.mxu0 0
      %1097 = vmatprep.subr.bf16.mxu0 0
      %1098 = vmatpush1.bf16.xpose.msra.mxu0 0
      %1099 = vmatprep.subr.bf16.mxu0 0
      %1100 = vmatpush1.bf16.xpose.msra.mxu0 0
      %1101 = vmatprep.subr.bf16.mxu0 0
      %1102 = vmatpush1.bf16.xpose.msra.mxu0 0
      %1103 = vmatprep.subr.bf16.mxu0 0
      %1104 = vmatpush1.bf16.xpose.msra.mxu0 0
      %1105 = vmatprep.subr.bf16.mxu0 0
      %1106 = vmatpush1.bf16.xpose.msra.mxu0 0
      %1107 = vmatprep.subr.bf16.mxu0 0
      %1108 = vmatpush1.bf16.xpose.msra.mxu0 0
      %1109 = vmatprep.subr.bf16.mxu0 0
      %1110 = vmatpush1.bf16.xpose.msra.mxu0 0
      %1111 = vmatprep.subr.bf16.mxu0 0
      %1112 = vmatpush1.bf16.xpose.msra.mxu0 0
      %1113 = vmatprep.subr.bf16.mxu0 0
      %1114 = vmatpush1.bf16.xpose.msra.mxu0 0
      %1115 = vmatprep.subr.bf16.mxu0 0
      %1116 = vmatpush1.bf16.xpose.msra.mxu0 0
      %1117 = vmatprep.subr.bf16.mxu0 0
      %1118 = vmatpush1.bf16.xpose.msra.mxu0 0
      %1119 = vmatprep.subr.bf16.mxu0 0
      %1120 = vmatpush1.bf16.xpose.msra.mxu0 0
      %1121 = vmatprep.mubr.bf16.mxu0 0
      %1122 = vmatmul.mubr.bf16.gmra.mrb[0].mxu0 %v1084
      %v1123 = vpop.f32.mrb[0].mxu0
      %v1124 = vadd.f32 0.0, %v1123
      %v1125 = vpop.f32.mrb[0].mxu0
      %v1126 = vpop.f32.mrb[0].mxu0
      %v1127 = vpop.f32.mrb[0].mxu0
      %1128 = vdwg.mxu0
      %1130 = vrot.lane.b32.xlu0 %v1076, 96
      %v1131 = vpop.permute.xlu0 %1130
      %v1133 = vsel %vm1082, %v1076, 0
      %v1136 = vsel %vm1082, %v1131, 0
      %1138 = vmatprep.subr.bf16.mxu0 0
      %1139 = vmatpush1.bf16.xpose.msra.mxu0 %v1136
      %1140 = vmatprep.subr.bf16.mxu0 0
      %1141 = vmatpush1.bf16.xpose.msra.mxu0 0
      %1142 = vmatprep.subr.bf16.mxu0 0
      %1143 = vmatpush1.bf16.xpose.msra.mxu0 0
      %1144 = vmatprep.subr.bf16.mxu0 0
      %1145 = vmatpush1.bf16.xpose.msra.mxu0 0
      %1146 = vmatprep.subr.bf16.mxu0 0
      %1147 = vmatpush1.bf16.xpose.msra.mxu0 0
      %1148 = vmatprep.subr.bf16.mxu0 0
      %1149 = vmatpush1.bf16.xpose.msra.mxu0 0
      %1150 = vmatprep.subr.bf16.mxu0 0
      %1151 = vmatpush1.bf16.xpose.msra.mxu0 0
      %1152 = vmatprep.subr.bf16.mxu0 0
      %1153 = vmatpush1.bf16.xpose.msra.mxu0 0
      %1154 = vmatprep.subr.bf16.mxu0 0
      %1155 = vmatpush1.bf16.xpose.msra.mxu0 0
      %1156 = vmatprep.subr.bf16.mxu0 0
      %1157 = vmatpush1.bf16.xpose.msra.mxu0 0
      %1158 = vmatprep.subr.bf16.mxu0 0
      %1159 = vmatpush1.bf16.xpose.msra.mxu0 0
      %1160 = vmatprep.subr.bf16.mxu0 0
      %1161 = vmatpush1.bf16.xpose.msra.mxu0 0
      %1162 = vmatprep.subr.bf16.mxu0 0
      %1163 = vmatpush1.bf16.xpose.msra.mxu0 0
      %1164 = vmatprep.subr.bf16.mxu0 0
      %1165 = vmatpush1.bf16.xpose.msra.mxu0 0
      %1166 = vmatprep.subr.bf16.mxu0 0
      %1167 = vmatpush1.bf16.xpose.msra.mxu0 0
      %1168 = vmatprep.subr.bf16.mxu0 0
      %1169 = vmatpush1.bf16.xpose.msra.mxu0 0
      %1170 = vmatprep.mubr.bf16.mxu0 0
      %1171 = vmatmul.mubr.bf16.gmra.mrb[0].mxu0 %v1133
      %v1172 = vpop.f32.mrb[0].mxu0
      %v1173 = vadd.f32 0.0, %v1172
      %v1174 = vpop.f32.mrb[0].mxu0
      %v1175 = vpop.f32.mrb[0].mxu0
      %v1176 = vpop.f32.mrb[0].mxu0
      %1177 = vdwg.mxu0
      %1179 = vrot.lane.b32.xlu0 %v1077, 96
      %v1180 = vpop.permute.xlu0 %1179
      %v1182 = vsel %vm1082, %v1077, 0
      %v1185 = vsel %vm1082, %v1180, 0
      %1187 = vmatprep.subr.bf16.mxu0 0
      %1188 = vmatpush1.bf16.xpose.msra.mxu0 %v1185
      %1189 = vmatprep.subr.bf16.mxu0 0
      %1190 = vmatpush1.bf16.xpose.msra.mxu0 0
      %1191 = vmatprep.subr.bf16.mxu0 0
      %1192 = vmatpush1.bf16.xpose.msra.mxu0 0
      %1193 = vmatprep.subr.bf16.mxu0 0
      %1194 = vmatpush1.bf16.xpose.msra.mxu0 0
      %1195 = vmatprep.subr.bf16.mxu0 0
      %1196 = vmatpush1.bf16.xpose.msra.mxu0 0
      %1197 = vmatprep.subr.bf16.mxu0 0
      %1198 = vmatpush1.bf16.xpose.msra.mxu0 0
      %1199 = vmatprep.subr.bf16.mxu0 0
      %1200 = vmatpush1.bf16.xpose.msra.mxu0 0
      %1201 = vmatprep.subr.bf16.mxu0 0
      %1202 = vmatpush1.bf16.xpose.msra.mxu0 0
      %1203 = vmatprep.subr.bf16.mxu0 0
      %1204 = vmatpush1.bf16.xpose.msra.mxu0 0
      %1205 = vmatprep.subr.bf16.mxu0 0
      %1206 = vmatpush1.bf16.xpose.msra.mxu0 0
      %1207 = vmatprep.subr.bf16.mxu0 0
      %1208 = vmatpush1.bf16.xpose.msra.mxu0 0
      %1209 = vmatprep.subr.bf16.mxu0 0
      %1210 = vmatpush1.bf16.xpose.msra.mxu0 0
      %1211 = vmatprep.subr.bf16.mxu0 0
      %1212 = vmatpush1.bf16.xpose.msra.mxu0 0
      %1213 = vmatprep.subr.bf16.mxu0 0
      %1214 = vmatpush1.bf16.xpose.msra.mxu0 0
      %1215 = vmatprep.subr.bf16.mxu0 0
      %1216 = vmatpush1.bf16.xpose.msra.mxu0 0
      %1217 = vmatprep.subr.bf16.mxu0 0
      %1218 = vmatpush1.bf16.xpose.msra.mxu0 0
      %1219 = vmatprep.mubr.bf16.mxu0 0
      %1220 = vmatmul.mubr.bf16.gmra.mrb[0].mxu0 %v1182
      %v1221 = vpop.f32.mrb[0].mxu0
      %v1222 = vadd.f32 0.0, %v1221
      %v1223 = vpop.f32.mrb[0].mxu0
      %v1224 = vpop.f32.mrb[0].mxu0
      %v1225 = vpop.f32.mrb[0].mxu0
      %1226 = vdwg.mxu0
      %1228 = vrot.lane.b32.xlu0 %v1078, 96
      %v1229 = vpop.permute.xlu0 %1228
      %v1231 = vsel %vm1082, %v1078, 0
      %v1234 = vsel %vm1082, %v1229, 0
      %1236 = vmatprep.subr.bf16.mxu0 0
      %1237 = vmatpush1.bf16.xpose.msra.mxu0 %v1234
      %1238 = vmatprep.subr.bf16.mxu0 0
      %1239 = vmatpush1.bf16.xpose.msra.mxu0 0
      %1240 = vmatprep.subr.bf16.mxu0 0
      %1241 = vmatpush1.bf16.xpose.msra.mxu0 0
      %1242 = vmatprep.subr.bf16.mxu0 0
      %1243 = vmatpush1.bf16.xpose.msra.mxu0 0
      %1244 = vmatprep.subr.bf16.mxu0 0
      %1245 = vmatpush1.bf16.xpose.msra.mxu0 0
      %1246 = vmatprep.subr.bf16.mxu0 0
      %1247 = vmatpush1.bf16.xpose.msra.mxu0 0
      %1248 = vmatprep.subr.bf16.mxu0 0
      %1249 = vmatpush1.bf16.xpose.msra.mxu0 0
      %1250 = vmatprep.subr.bf16.mxu0 0
      %1251 = vmatpush1.bf16.xpose.msra.mxu0 0
      %1252 = vmatprep.subr.bf16.mxu0 0
      %1253 = vmatpush1.bf16.xpose.msra.mxu0 0
      %1254 = vmatprep.subr.bf16.mxu0 0
      %1255 = vmatpush1.bf16.xpose.msra.mxu0 0
      %1256 = vmatprep.subr.bf16.mxu0 0
      %1257 = vmatpush1.bf16.xpose.msra.mxu0 0
      %1258 = vmatprep.subr.bf16.mxu0 0
      %1259 = vmatpush1.bf16.xpose.msra.mxu0 0
      %1260 = vmatprep.subr.bf16.mxu0 0
      %1261 = vmatpush1.bf16.xpose.msra.mxu0 0
      %1262 = vmatprep.subr.bf16.mxu0 0
      %1263 = vmatpush1.bf16.xpose.msra.mxu0 0
      %1264 = vmatprep.subr.bf16.mxu0 0
      %1265 = vmatpush1.bf16.xpose.msra.mxu0 0
      %1266 = vmatprep.subr.bf16.mxu0 0
      %1267 = vmatpush1.bf16.xpose.msra.mxu0 0
      %1268 = vmatprep.mubr.bf16.mxu0 0
      %1269 = vmatmul.mubr.bf16.gmra.mrb[0].mxu0 %v1231
      %v1270 = vpop.f32.mrb[0].mxu0
      %v1271 = vadd.f32 0.0, %v1270
      %v1272 = vpop.f32.mrb[0].mxu0
      %v1273 = vpop.f32.mrb[0].mxu0
      %v1274 = vpop.f32.mrb[0].mxu0
      %1275 = vdwg.mxu0
      %v1276 = vmul.f32 %v1124, 0.35355338
      %v1277 = vmul.f32 %v1173, 0.35355338
      %v1278 = vmul.f32 %v1222, 0.35355338
      %v1279 = vmul.f32 %v1271, 0.35355338
      %v1280 = vsel %vm1082, %v1276, -inf
      %1281 = vmax.xlane.f32.xlu0 %v1280
      %v1282 = vpop.xlane.xlu0 %1281
      %v1283 = vsel %vm1082, %v1277, -inf
      %1284 = vmax.xlane.f32.xlu0 %v1283
      %v1285 = vpop.xlane.xlu0 %1284
      %v1286 = vsel %vm1082, %v1278, -inf
      %1287 = vmax.xlane.f32.xlu0 %v1286
      %v1288 = vpop.xlane.xlu0 %1287
      %v1289 = vsel %vm1082, %v1279, -inf
      %1290 = vmax.xlane.f32.xlu0 %v1289
      %v1291 = vpop.xlane.xlu0 %1290
      %v1292 = vsub.f32 %v1276, %v1282
      %v1293 = vsub.f32 %v1277, %v1285
      %v1294 = vsub.f32 %v1278, %v1288
      %v1295 = vsub.f32 %v1279, %v1291
      %v1296 = vmul.f32 %v1292, 1.442695
      %v1297 = vpow.pop %v1296
      %v1298 = vmul.f32 %v1293, 1.442695
      %v1299 = vpow.pop %v1298
      %v1300 = vmul.f32 %v1294, 1.442695
      %v1301 = vpow.pop %v1300
      %v1302 = vmul.f32 %v1295, 1.442695
      %v1303 = vpow.pop %v1302
      %v1304 = vsel %vm1082, %v1297, 0.0
      %1305 = vadd.xlane.f32.xlu0 %v1304
      %v1306 = vpop.xlane.xlu0 %1305
      %v1307 = vsel %vm1082, %v1299, 0.0
      %1308 = vadd.xlane.f32.xlu0 %v1307
      %v1309 = vpop.xlane.xlu0 %1308
      %v1310 = vsel %vm1082, %v1301, 0.0
      %1311 = vadd.xlane.f32.xlu0 %v1310
      %v1312 = vpop.xlane.xlu0 %1311
      %v1313 = vsel %vm1082, %v1303, 0.0
      %1314 = vadd.xlane.f32.xlu0 %v1313
      %v1315 = vpop.xlane.xlu0 %1314
      %v1316 = vrcp.pop %v1306
      %v1317 = vrcp.pop %v1309
      %v1318 = vrcp.pop %v1312
      %v1319 = vrcp.pop %v1315
      %v1320 = vmul.f32 %v1297, %v1316
      %v1321 = vmul.f32 %v1299, %v1317
      %v1322 = vmul.f32 %v1301, %v1318
      %v1323 = vmul.f32 %v1303, %v1319
      %v1324 = vpack.c.bf16 %v1320, %v1320
      %v1325 = vpack.c.bf16 %v1321, %v1321
      %v1326 = vpack.c.bf16 %v1322, %v1322
      %v1327 = vpack.c.bf16 %v1323, %v1323
      %1328 = vrot.lane.b32.xlu0 %v1075, 64
      %v1329 = vpop.permute.xlu0 %1328
      %v1331 = vsel %vm1082, %v1324, 0
      %vm1333 = vcmask 1043456
      %v1335 = vsel %vm1333, %v1329, 0
      %1337 = vmatprep.subr.bf16.mxu0 0
      %1338 = vmatpush1.bf16.msra.mxu0 %v1335
      %1339 = vmatprep.subr.bf16.mxu0 0
      %1340 = vmatpush1.bf16.msra.mxu0 0
      %1341 = vmatprep.subr.bf16.mxu0 0
      %1342 = vmatpush1.bf16.msra.mxu0 0
      %1343 = vmatprep.subr.bf16.mxu0 0
      %1344 = vmatpush1.bf16.msra.mxu0 0
      %1345 = vmatprep.subr.bf16.mxu0 0
      %1346 = vmatpush1.bf16.msra.mxu0 0
      %1347 = vmatprep.subr.bf16.mxu0 0
      %1348 = vmatpush1.bf16.msra.mxu0 0
      %1349 = vmatprep.subr.bf16.mxu0 0
      %1350 = vmatpush1.bf16.msra.mxu0 0
      %1351 = vmatprep.subr.bf16.mxu0 0
      %1352 = vmatpush1.bf16.msra.mxu0 0
      %1353 = vmatprep.subr.bf16.mxu0 0
      %1354 = vmatpush1.bf16.msra.mxu0 0
      %1355 = vmatprep.subr.bf16.mxu0 0
      %1356 = vmatpush1.bf16.msra.mxu0 0
      %1357 = vmatprep.subr.bf16.mxu0 0
      %1358 = vmatpush1.bf16.msra.mxu0 0
      %1359 = vmatprep.subr.bf16.mxu0 0
      %1360 = vmatpush1.bf16.msra.mxu0 0
      %1361 = vmatprep.subr.bf16.mxu0 0
      %1362 = vmatpush1.bf16.msra.mxu0 0
      %1363 = vmatprep.subr.bf16.mxu0 0
      %1364 = vmatpush1.bf16.msra.mxu0 0
      %1365 = vmatprep.subr.bf16.mxu0 0
      %1366 = vmatpush1.bf16.msra.mxu0 0
      %1367 = vmatprep.subr.bf16.mxu0 0
      %1368 = vmatpush1.bf16.msra.mxu0 0
      %1369 = vmatprep.mubr.bf16.mxu0 0
      %1370 = vmatmul.mubr.bf16.gmra.mrb[0].mxu0 %v1331
      %v1371 = vpop.f32.mrb[0].mxu0
      %v1372 = vadd.f32 0.0, %v1371
      %v1373 = vpop.f32.mrb[0].mxu0
      %v1374 = vpop.f32.mrb[0].mxu0
      %v1375 = vpop.f32.mrb[0].mxu0
      %1376 = vdwg.mxu0
      %1377 = vrot.lane.b32.xlu0 %v1076, 64
      %v1378 = vpop.permute.xlu0 %1377
      %v1380 = vsel %vm1082, %v1325, 0
      %v1383 = vsel %vm1333, %v1378, 0
      %1385 = vmatprep.subr.bf16.mxu0 0
      %1386 = vmatpush1.bf16.msra.mxu0 %v1383
      %1387 = vmatprep.subr.bf16.mxu0 0
      %1388 = vmatpush1.bf16.msra.mxu0 0
      %1389 = vmatprep.subr.bf16.mxu0 0
      %1390 = vmatpush1.bf16.msra.mxu0 0
      %1391 = vmatprep.subr.bf16.mxu0 0
      %1392 = vmatpush1.bf16.msra.mxu0 0
      %1393 = vmatprep.subr.bf16.mxu0 0
      %1394 = vmatpush1.bf16.msra.mxu0 0
      %1395 = vmatprep.subr.bf16.mxu0 0
      %1396 = vmatpush1.bf16.msra.mxu0 0
      %1397 = vmatprep.subr.bf16.mxu0 0
      %1398 = vmatpush1.bf16.msra.mxu0 0
      %1399 = vmatprep.subr.bf16.mxu0 0
      %1400 = vmatpush1.bf16.msra.mxu0 0
      %1401 = vmatprep.subr.bf16.mxu0 0
      %1402 = vmatpush1.bf16.msra.mxu0 0
      %1403 = vmatprep.subr.bf16.mxu0 0
      %1404 = vmatpush1.bf16.msra.mxu0 0
      %1405 = vmatprep.subr.bf16.mxu0 0
      %1406 = vmatpush1.bf16.msra.mxu0 0
      %1407 = vmatprep.subr.bf16.mxu0 0
      %1408 = vmatpush1.bf16.msra.mxu0 0
      %1409 = vmatprep.subr.bf16.mxu0 0
      %1410 = vmatpush1.bf16.msra.mxu0 0
      %1411 = vmatprep.subr.bf16.mxu0 0
      %1412 = vmatpush1.bf16.msra.mxu0 0
      %1413 = vmatprep.subr.bf16.mxu0 0
      %1414 = vmatpush1.bf16.msra.mxu0 0
      %1415 = vmatprep.subr.bf16.mxu0 0
      %1416 = vmatpush1.bf16.msra.mxu0 0
      %1417 = vmatprep.mubr.bf16.mxu0 0
      %1418 = vmatmul.mubr.bf16.gmra.mrb[0].mxu0 %v1380
      %v1419 = vpop.f32.mrb[0].mxu0
      %v1420 = vadd.f32 0.0, %v1419
      %v1421 = vpop.f32.mrb[0].mxu0
      %v1422 = vpop.f32.mrb[0].mxu0
      %v1423 = vpop.f32.mrb[0].mxu0
      %1424 = vdwg.mxu0
      %1425 = vrot.lane.b32.xlu0 %v1077, 64
      %v1426 = vpop.permute.xlu0 %1425
      %v1428 = vsel %vm1082, %v1326, 0
      %v1431 = vsel %vm1333, %v1426, 0
      %1433 = vmatprep.subr.bf16.mxu0 0
      %1434 = vmatpush1.bf16.msra.mxu0 %v1431
      %1435 = vmatprep.subr.bf16.mxu0 0
      %1436 = vmatpush1.bf16.msra.mxu0 0
      %1437 = vmatprep.subr.bf16.mxu0 0
      %1438 = vmatpush1.bf16.msra.mxu0 0
      %1439 = vmatprep.subr.bf16.mxu0 0
      %1440 = vmatpush1.bf16.msra.mxu0 0
      %1441 = vmatprep.subr.bf16.mxu0 0
      %1442 = vmatpush1.bf16.msra.mxu0 0
      %1443 = vmatprep.subr.bf16.mxu0 0
      %1444 = vmatpush1.bf16.msra.mxu0 0
      %1445 = vmatprep.subr.bf16.mxu0 0
      %1446 = vmatpush1.bf16.msra.mxu0 0
      %1447 = vmatprep.subr.bf16.mxu0 0
      %1448 = vmatpush1.bf16.msra.mxu0 0
      %1449 = vmatprep.subr.bf16.mxu0 0
      %1450 = vmatpush1.bf16.msra.mxu0 0
      %1451 = vmatprep.subr.bf16.mxu0 0
      %1452 = vmatpush1.bf16.msra.mxu0 0
      %1453 = vmatprep.subr.bf16.mxu0 0
      %1454 = vmatpush1.bf16.msra.mxu0 0
      %1455 = vmatprep.subr.bf16.mxu0 0
      %1456 = vmatpush1.bf16.msra.mxu0 0
      %1457 = vmatprep.subr.bf16.mxu0 0
      %1458 = vmatpush1.bf16.msra.mxu0 0
      %1459 = vmatprep.subr.bf16.mxu0 0
      %1460 = vmatpush1.bf16.msra.mxu0 0
      %1461 = vmatprep.subr.bf16.mxu0 0
      %1462 = vmatpush1.bf16.msra.mxu0 0
      %1463 = vmatprep.subr.bf16.mxu0 0
      %1464 = vmatpush1.bf16.msra.mxu0 0
      %1465 = vmatprep.mubr.bf16.mxu0 0
      %1466 = vmatmul.mubr.bf16.gmra.mrb[0].mxu0 %v1428
      %v1467 = vpop.f32.mrb[0].mxu0
      %v1468 = vadd.f32 0.0, %v1467
      %v1469 = vpop.f32.mrb[0].mxu0
      %v1470 = vpop.f32.mrb[0].mxu0
      %v1471 = vpop.f32.mrb[0].mxu0
      %1472 = vdwg.mxu0
      %1473 = vrot.lane.b32.xlu0 %v1078, 64
      %v1474 = vpop.permute.xlu0 %1473
      %v1476 = vsel %vm1082, %v1327, 0
      %v1479 = vsel %vm1333, %v1474, 0
      %1481 = vmatprep.subr.bf16.mxu0 0
      %1482 = vmatpush1.bf16.msra.mxu0 %v1479
      %1483 = vmatprep.subr.bf16.mxu0 0
      %1484 = vmatpush1.bf16.msra.mxu0 0
      %1485 = vmatprep.subr.bf16.mxu0 0
      %1486 = vmatpush1.bf16.msra.mxu0 0
      %1487 = vmatprep.subr.bf16.mxu0 0
      %1488 = vmatpush1.bf16.msra.mxu0 0
      %1489 = vmatprep.subr.bf16.mxu0 0
      %1490 = vmatpush1.bf16.msra.mxu0 0
      %1491 = vmatprep.subr.bf16.mxu0 0
      %1492 = vmatpush1.bf16.msra.mxu0 0
      %1493 = vmatprep.subr.bf16.mxu0 0
      %1494 = vmatpush1.bf16.msra.mxu0 0
      %1495 = vmatprep.subr.bf16.mxu0 0
      %1496 = vmatpush1.bf16.msra.mxu0 0
      %1497 = vmatprep.subr.bf16.mxu0 0
      %1498 = vmatpush1.bf16.msra.mxu0 0
      %1499 = vmatprep.subr.bf16.mxu0 0
      %1500 = vmatpush1.bf16.msra.mxu0 0
      %1501 = vmatprep.subr.bf16.mxu0 0
      %1502 = vmatpush1.bf16.msra.mxu0 0
      %1503 = vmatprep.subr.bf16.mxu0 0
      %1504 = vmatpush1.bf16.msra.mxu0 0
      %1505 = vmatprep.subr.bf16.mxu0 0
      %1506 = vmatpush1.bf16.msra.mxu0 0
      %1507 = vmatprep.subr.bf16.mxu0 0
      %1508 = vmatpush1.bf16.msra.mxu0 0
      %1509 = vmatprep.subr.bf16.mxu0 0
      %1510 = vmatpush1.bf16.msra.mxu0 0
      %1511 = vmatprep.subr.bf16.mxu0 0
      %1512 = vmatpush1.bf16.msra.mxu0 0
      %1513 = vmatprep.mubr.bf16.mxu0 0
      %1514 = vmatmul.mubr.bf16.gmra.mrb[0].mxu0 %v1476
      %v1515 = vpop.f32.mrb[0].mxu0
      %v1516 = vadd.f32 0.0, %v1515
      %v1517 = vpop.f32.mrb[0].mxu0
      %v1518 = vpop.f32.mrb[0].mxu0
      %v1519 = vpop.f32.mrb[0].mxu0
      %1520 = vdwg.mxu0
      %1521 = vrot.lane.b32.xlu0 %v1075, 120
      %v1522 = vpop.permute.xlu0 %1521
      %1523 = vrot.lane.b32.xlu0 %v1075, 88
      %v1524 = vpop.permute.xlu0 %1523
      %v1526 = vsel %vm1082, %v1522, 0
      %v1529 = vsel %vm1082, %v1524, 0
      %1531 = vmatprep.subr.bf16.mxu0 0
      %1532 = vmatpush1.bf16.xpose.msra.mxu0 %v1529
      %1533 = vmatprep.subr.bf16.mxu0 0
      %1534 = vmatpush1.bf16.xpose.msra.mxu0 0
      %1535 = vmatprep.subr.bf16.mxu0 0
      %1536 = vmatpush1.bf16.xpose.msra.mxu0 0
      %1537 = vmatprep.subr.bf16.mxu0 0
      %1538 = vmatpush1.bf16.xpose.msra.mxu0 0
      %1539 = vmatprep.subr.bf16.mxu0 0
      %1540 = vmatpush1.bf16.xpose.msra.mxu0 0
      %1541 = vmatprep.subr.bf16.mxu0 0
      %1542 = vmatpush1.bf16.xpose.msra.mxu0 0
      %1543 = vmatprep.subr.bf16.mxu0 0
      %1544 = vmatpush1.bf16.xpose.msra.mxu0 0
      %1545 = vmatprep.subr.bf16.mxu0 0
      %1546 = vmatpush1.bf16.xpose.msra.mxu0 0
      %1547 = vmatprep.subr.bf16.mxu0 0
      %1548 = vmatpush1.bf16.xpose.msra.mxu0 0
      %1549 = vmatprep.subr.bf16.mxu0 0
      %1550 = vmatpush1.bf16.xpose.msra.mxu0 0
      %1551 = vmatprep.subr.bf16.mxu0 0
      %1552 = vmatpush1.bf16.xpose.msra.mxu0 0
      %1553 = vmatprep.subr.bf16.mxu0 0
      %1554 = vmatpush1.bf16.xpose.msra.mxu0 0
      %1555 = vmatprep.subr.bf16.mxu0 0
      %1556 = vmatpush1.bf16.xpose.msra.mxu0 0
      %1557 = vmatprep.subr.bf16.mxu0 0
      %1558 = vmatpush1.bf16.xpose.msra.mxu0 0
      %1559 = vmatprep.subr.bf16.mxu0 0
      %1560 = vmatpush1.bf16.xpose.msra.mxu0 0
      %1561 = vmatprep.subr.bf16.mxu0 0
      %1562 = vmatpush1.bf16.xpose.msra.mxu0 0
      %1563 = vmatprep.mubr.bf16.mxu0 0
      %1564 = vmatmul.mubr.bf16.gmra.mrb[0].mxu0 %v1526
      %v1565 = vpop.f32.mrb[0].mxu0
      %v1566 = vadd.f32 0.0, %v1565
      %v1567 = vpop.f32.mrb[0].mxu0
      %v1568 = vpop.f32.mrb[0].mxu0
      %v1569 = vpop.f32.mrb[0].mxu0
      %1570 = vdwg.mxu0
      %1571 = vrot.lane.b32.xlu0 %v1076, 120
      %v1572 = vpop.permute.xlu0 %1571
      %1573 = vrot.lane.b32.xlu0 %v1076, 88
      %v1574 = vpop.permute.xlu0 %1573
      %v1576 = vsel %vm1082, %v1572, 0
      %v1579 = vsel %vm1082, %v1574, 0
      %1581 = vmatprep.subr.bf16.mxu0 0
      %1582 = vmatpush1.bf16.xpose.msra.mxu0 %v1579
      %1583 = vmatprep.subr.bf16.mxu0 0
      %1584 = vmatpush1.bf16.xpose.msra.mxu0 0
      %1585 = vmatprep.subr.bf16.mxu0 0
      %1586 = vmatpush1.bf16.xpose.msra.mxu0 0
      %1587 = vmatprep.subr.bf16.mxu0 0
      %1588 = vmatpush1.bf16.xpose.msra.mxu0 0
      %1589 = vmatprep.subr.bf16.mxu0 0
      %1590 = vmatpush1.bf16.xpose.msra.mxu0 0
      %1591 = vmatprep.subr.bf16.mxu0 0
      %1592 = vmatpush1.bf16.xpose.msra.mxu0 0
      %1593 = vmatprep.subr.bf16.mxu0 0
      %1594 = vmatpush1.bf16.xpose.msra.mxu0 0
      %1595 = vmatprep.subr.bf16.mxu0 0
      %1596 = vmatpush1.bf16.xpose.msra.mxu0 0
      %1597 = vmatprep.subr.bf16.mxu0 0
      %1598 = vmatpush1.bf16.xpose.msra.mxu0 0
      %1599 = vmatprep.subr.bf16.mxu0 0
      %1600 = vmatpush1.bf16.xpose.msra.mxu0 0
      %1601 = vmatprep.subr.bf16.mxu0 0
      %1602 = vmatpush1.bf16.xpose.msra.mxu0 0
      %1603 = vmatprep.subr.bf16.mxu0 0
      %1604 = vmatpush1.bf16.xpose.msra.mxu0 0
      %1605 = vmatprep.subr.bf16.mxu0 0
      %1606 = vmatpush1.bf16.xpose.msra.mxu0 0
      %1607 = vmatprep.subr.bf16.mxu0 0
      %1608 = vmatpush1.bf16.xpose.msra.mxu0 0
      %1609 = vmatprep.subr.bf16.mxu0 0
      %1610 = vmatpush1.bf16.xpose.msra.mxu0 0
      %1611 = vmatprep.subr.bf16.mxu0 0
      %1612 = vmatpush1.bf16.xpose.msra.mxu0 0
      %1613 = vmatprep.mubr.bf16.mxu0 0
      %1614 = vmatmul.mubr.bf16.gmra.mrb[0].mxu0 %v1576
      %v1615 = vpop.f32.mrb[0].mxu0
      %v1616 = vadd.f32 0.0, %v1615
      %v1617 = vpop.f32.mrb[0].mxu0
      %v1618 = vpop.f32.mrb[0].mxu0
      %v1619 = vpop.f32.mrb[0].mxu0
      %1620 = vdwg.mxu0
      %1621 = vrot.lane.b32.xlu0 %v1077, 120
      %v1622 = vpop.permute.xlu0 %1621
      %1623 = vrot.lane.b32.xlu0 %v1077, 88
      %v1624 = vpop.permute.xlu0 %1623
      %v1626 = vsel %vm1082, %v1622, 0
      %v1629 = vsel %vm1082, %v1624, 0
      %1631 = vmatprep.subr.bf16.mxu0 0
      %1632 = vmatpush1.bf16.xpose.msra.mxu0 %v1629
      %1633 = vmatprep.subr.bf16.mxu0 0
      %1634 = vmatpush1.bf16.xpose.msra.mxu0 0
      %1635 = vmatprep.subr.bf16.mxu0 0
      %1636 = vmatpush1.bf16.xpose.msra.mxu0 0
      %1637 = vmatprep.subr.bf16.mxu0 0
      %1638 = vmatpush1.bf16.xpose.msra.mxu0 0
      %1639 = vmatprep.subr.bf16.mxu0 0
      %1640 = vmatpush1.bf16.xpose.msra.mxu0 0
      %1641 = vmatprep.subr.bf16.mxu0 0
      %1642 = vmatpush1.bf16.xpose.msra.mxu0 0
      %1643 = vmatprep.subr.bf16.mxu0 0
      %1644 = vmatpush1.bf16.xpose.msra.mxu0 0
      %1645 = vmatprep.subr.bf16.mxu0 0
      %1646 = vmatpush1.bf16.xpose.msra.mxu0 0
      %1647 = vmatprep.subr.bf16.mxu0 0
      %1648 = vmatpush1.bf16.xpose.msra.mxu0 0
      %1649 = vmatprep.subr.bf16.mxu0 0
      %1650 = vmatpush1.bf16.xpose.msra.mxu0 0
      %1651 = vmatprep.subr.bf16.mxu0 0
      %1652 = vmatpush1.bf16.xpose.msra.mxu0 0
      %1653 = vmatprep.subr.bf16.mxu0 0
      %1654 = vmatpush1.bf16.xpose.msra.mxu0 0
      %1655 = vmatprep.subr.bf16.mxu0 0
      %1656 = vmatpush1.bf16.xpose.msra.mxu0 0
      %1657 = vmatprep.subr.bf16.mxu0 0
      %1658 = vmatpush1.bf16.xpose.msra.mxu0 0
      %1659 = vmatprep.subr.bf16.mxu0 0
      %1660 = vmatpush1.bf16.xpose.msra.mxu0 0
      %1661 = vmatprep.subr.bf16.mxu0 0
      %1662 = vmatpush1.bf16.xpose.msra.mxu0 0
      %1663 = vmatprep.mubr.bf16.mxu0 0
      %1664 = vmatmul.mubr.bf16.gmra.mrb[0].mxu0 %v1626
      %v1665 = vpop.f32.mrb[0].mxu0
      %v1666 = vadd.f32 0.0, %v1665
      %v1667 = vpop.f32.mrb[0].mxu0
      %v1668 = vpop.f32.mrb[0].mxu0
      %v1669 = vpop.f32.mrb[0].mxu0
      %1670 = vdwg.mxu0
      %1671 = vrot.lane.b32.xlu0 %v1078, 120
      %v1672 = vpop.permute.xlu0 %1671
      %1673 = vrot.lane.b32.xlu0 %v1078, 88
      %v1674 = vpop.permute.xlu0 %1673
      %v1676 = vsel %vm1082, %v1672, 0
      %v1679 = vsel %vm1082, %v1674, 0
      %1681 = vmatprep.subr.bf16.mxu0 0
      %1682 = vmatpush1.bf16.xpose.msra.mxu0 %v1679
      %1683 = vmatprep.subr.bf16.mxu0 0
      %1684 = vmatpush1.bf16.xpose.msra.mxu0 0
      %1685 = vmatprep.subr.bf16.mxu0 0
      %1686 = vmatpush1.bf16.xpose.msra.mxu0 0
      %1687 = vmatprep.subr.bf16.mxu0 0
      %1688 = vmatpush1.bf16.xpose.msra.mxu0 0
      %1689 = vmatprep.subr.bf16.mxu0 0
      %1690 = vmatpush1.bf16.xpose.msra.mxu0 0
      %1691 = vmatprep.subr.bf16.mxu0 0
      %1692 = vmatpush1.bf16.xpose.msra.mxu0 0
      %1693 = vmatprep.subr.bf16.mxu0 0
      %1694 = vmatpush1.bf16.xpose.msra.mxu0 0
      %1695 = vmatprep.subr.bf16.mxu0 0
      %1696 = vmatpush1.bf16.xpose.msra.mxu0 0
      %1697 = vmatprep.subr.bf16.mxu0 0
      %1698 = vmatpush1.bf16.xpose.msra.mxu0 0
      %1699 = vmatprep.subr.bf16.mxu0 0
      %1700 = vmatpush1.bf16.xpose.msra.mxu0 0
      %1701 = vmatprep.subr.bf16.mxu0 0
      %1702 = vmatpush1.bf16.xpose.msra.mxu0 0
      %1703 = vmatprep.subr.bf16.mxu0 0
      %1704 = vmatpush1.bf16.xpose.msra.mxu0 0
      %1705 = vmatprep.subr.bf16.mxu0 0
      %1706 = vmatpush1.bf16.xpose.msra.mxu0 0
      %1707 = vmatprep.subr.bf16.mxu0 0
      %1708 = vmatpush1.bf16.xpose.msra.mxu0 0
      %1709 = vmatprep.subr.bf16.mxu0 0
      %1710 = vmatpush1.bf16.xpose.msra.mxu0 0
      %1711 = vmatprep.subr.bf16.mxu0 0
      %1712 = vmatpush1.bf16.xpose.msra.mxu0 0
      %1713 = vmatprep.mubr.bf16.mxu0 0
      %1714 = vmatmul.mubr.bf16.gmra.mrb[0].mxu0 %v1676
      %v1715 = vpop.f32.mrb[0].mxu0
      %v1716 = vadd.f32 0.0, %v1715
      %v1717 = vpop.f32.mrb[0].mxu0
      %v1718 = vpop.f32.mrb[0].mxu0
      %v1719 = vpop.f32.mrb[0].mxu0
      %1720 = vdwg.mxu0
      %v1721 = vmul.f32 %v1566, 0.35355338
      %v1722 = vmul.f32 %v1616, 0.35355338
      %v1723 = vmul.f32 %v1666, 0.35355338
      %v1724 = vmul.f32 %v1716, 0.35355338
      %v1725 = vsel %vm1082, %v1721, -inf
      %1726 = vmax.xlane.f32.xlu0 %v1725
      %v1727 = vpop.xlane.xlu0 %1726
      %v1728 = vsel %vm1082, %v1722, -inf
      %1729 = vmax.xlane.f32.xlu0 %v1728
      %v1730 = vpop.xlane.xlu0 %1729
      %v1731 = vsel %vm1082, %v1723, -inf
      %1732 = vmax.xlane.f32.xlu0 %v1731
      %v1733 = vpop.xlane.xlu0 %1732
      %v1734 = vsel %vm1082, %v1724, -inf
      %1735 = vmax.xlane.f32.xlu0 %v1734
      %v1736 = vpop.xlane.xlu0 %1735
      %v1737 = vsub.f32 %v1721, %v1727
      %v1738 = vsub.f32 %v1722, %v1730
      %v1739 = vsub.f32 %v1723, %v1733
      %v1740 = vsub.f32 %v1724, %v1736
      %v1741 = vmul.f32 %v1737, 1.442695
      %v1742 = vpow.pop %v1741
      %v1743 = vmul.f32 %v1738, 1.442695
      %v1744 = vpow.pop %v1743
      %v1745 = vmul.f32 %v1739, 1.442695
      %v1746 = vpow.pop %v1745
      %v1747 = vmul.f32 %v1740, 1.442695
      %v1748 = vpow.pop %v1747
      %v1749 = vsel %vm1082, %v1742, 0.0
      %1750 = vadd.xlane.f32.xlu0 %v1749
      %v1751 = vpop.xlane.xlu0 %1750
      %v1752 = vsel %vm1082, %v1744, 0.0
      %1753 = vadd.xlane.f32.xlu0 %v1752
      %v1754 = vpop.xlane.xlu0 %1753
      %v1755 = vsel %vm1082, %v1746, 0.0
      %1756 = vadd.xlane.f32.xlu0 %v1755
      %v1757 = vpop.xlane.xlu0 %1756
      %v1758 = vsel %vm1082, %v1748, 0.0
      %1759 = vadd.xlane.f32.xlu0 %v1758
      %v1760 = vpop.xlane.xlu0 %1759
      %v1761 = vrcp.pop %v1751
      %v1762 = vrcp.pop %v1754
      %v1763 = vrcp.pop %v1757
      %v1764 = vrcp.pop %v1760
      %v1765 = vmul.f32 %v1742, %v1761
      %v1766 = vmul.f32 %v1744, %v1762
      %v1767 = vmul.f32 %v1746, %v1763
      %v1768 = vmul.f32 %v1748, %v1764
      %v1769 = vpack.c.bf16 %v1765, %v1765
      %v1770 = vpack.c.bf16 %v1766, %v1766
      %v1771 = vpack.c.bf16 %v1767, %v1767
      %v1772 = vpack.c.bf16 %v1768, %v1768
      %1773 = vrot.lane.b32.xlu0 %v1075, 56
      %v1774 = vpop.permute.xlu0 %1773
      %v1776 = vsel %vm1082, %v1769, 0
      %v1779 = vsel %vm1333, %v1774, 0
      %1781 = vmatprep.subr.bf16.mxu0 0
      %1782 = vmatpush1.bf16.msra.mxu0 %v1779
      %1783 = vmatprep.subr.bf16.mxu0 0
      %1784 = vmatpush1.bf16.msra.mxu0 0
      %1785 = vmatprep.subr.bf16.mxu0 0
      %1786 = vmatpush1.bf16.msra.mxu0 0
      %1787 = vmatprep.subr.bf16.mxu0 0
      %1788 = vmatpush1.bf16.msra.mxu0 0
      %1789 = vmatprep.subr.bf16.mxu0 0
      %1790 = vmatpush1.bf16.msra.mxu0 0
      %1791 = vmatprep.subr.bf16.mxu0 0
      %1792 = vmatpush1.bf16.msra.mxu0 0
      %1793 = vmatprep.subr.bf16.mxu0 0
      %1794 = vmatpush1.bf16.msra.mxu0 0
      %1795 = vmatprep.subr.bf16.mxu0 0
      %1796 = vmatpush1.bf16.msra.mxu0 0
      %1797 = vmatprep.subr.bf16.mxu0 0
      %1798 = vmatpush1.bf16.msra.mxu0 0
      %1799 = vmatprep.subr.bf16.mxu0 0
      %1800 = vmatpush1.bf16.msra.mxu0 0
      %1801 = vmatprep.subr.bf16.mxu0 0
      %1802 = vmatpush1.bf16.msra.mxu0 0
      %1803 = vmatprep.subr.bf16.mxu0 0
      %1804 = vmatpush1.bf16.msra.mxu0 0
      %1805 = vmatprep.subr.bf16.mxu0 0
      %1806 = vmatpush1.bf16.msra.mxu0 0
      %1807 = vmatprep.subr.bf16.mxu0 0
      %1808 = vmatpush1.bf16.msra.mxu0 0
      %1809 = vmatprep.subr.bf16.mxu0 0
      %1810 = vmatpush1.bf16.msra.mxu0 0
      %1811 = vmatprep.subr.bf16.mxu0 0
      %1812 = vmatpush1.bf16.msra.mxu0 0
      %1813 = vmatprep.mubr.bf16.mxu0 0
      %1814 = vmatmul.mubr.bf16.gmra.mrb[0].mxu0 %v1776
      %v1815 = vpop.f32.mrb[0].mxu0
      %v1816 = vadd.f32 0.0, %v1815
      %v1817 = vpop.f32.mrb[0].mxu0
      %v1818 = vpop.f32.mrb[0].mxu0
      %v1819 = vpop.f32.mrb[0].mxu0
      %1820 = vdwg.mxu0
      %1821 = vrot.lane.b32.xlu0 %v1076, 56
      %v1822 = vpop.permute.xlu0 %1821
      %v1824 = vsel %vm1082, %v1770, 0
      %v1827 = vsel %vm1333, %v1822, 0
      %1829 = vmatprep.subr.bf16.mxu0 0
      %1830 = vmatpush1.bf16.msra.mxu0 %v1827
      %1831 = vmatprep.subr.bf16.mxu0 0
      %1832 = vmatpush1.bf16.msra.mxu0 0
      %1833 = vmatprep.subr.bf16.mxu0 0
      %1834 = vmatpush1.bf16.msra.mxu0 0
      %1835 = vmatprep.subr.bf16.mxu0 0
      %1836 = vmatpush1.bf16.msra.mxu0 0
      %1837 = vmatprep.subr.bf16.mxu0 0
      %1838 = vmatpush1.bf16.msra.mxu0 0
      %1839 = vmatprep.subr.bf16.mxu0 0
      %1840 = vmatpush1.bf16.msra.mxu0 0
      %1841 = vmatprep.subr.bf16.mxu0 0
      %1842 = vmatpush1.bf16.msra.mxu0 0
      %1843 = vmatprep.subr.bf16.mxu0 0
      %1844 = vmatpush1.bf16.msra.mxu0 0
      %1845 = vmatprep.subr.bf16.mxu0 0
      %1846 = vmatpush1.bf16.msra.mxu0 0
      %1847 = vmatprep.subr.bf16.mxu0 0
      %1848 = vmatpush1.bf16.msra.mxu0 0
      %1849 = vmatprep.subr.bf16.mxu0 0
      %1850 = vmatpush1.bf16.msra.mxu0 0
      %1851 = vmatprep.subr.bf16.mxu0 0
      %1852 = vmatpush1.bf16.msra.mxu0 0
      %1853 = vmatprep.subr.bf16.mxu0 0
      %1854 = vmatpush1.bf16.msra.mxu0 0
      %1855 = vmatprep.subr.bf16.mxu0 0
      %1856 = vmatpush1.bf16.msra.mxu0 0
      %1857 = vmatprep.subr.bf16.mxu0 0
      %1858 = vmatpush1.bf16.msra.mxu0 0
      %1859 = vmatprep.subr.bf16.mxu0 0
      %1860 = vmatpush1.bf16.msra.mxu0 0
      %1861 = vmatprep.mubr.bf16.mxu0 0
      %1862 = vmatmul.mubr.bf16.gmra.mrb[0].mxu0 %v1824
      %v1863 = vpop.f32.mrb[0].mxu0
      %v1864 = vadd.f32 0.0, %v1863
      %v1865 = vpop.f32.mrb[0].mxu0
      %v1866 = vpop.f32.mrb[0].mxu0
      %v1867 = vpop.f32.mrb[0].mxu0
      %1868 = vdwg.mxu0
      %1869 = vrot.lane.b32.xlu0 %v1077, 56
      %v1870 = vpop.permute.xlu0 %1869
      %v1872 = vsel %vm1082, %v1771, 0
      %v1875 = vsel %vm1333, %v1870, 0
      %1877 = vmatprep.subr.bf16.mxu0 0
      %1878 = vmatpush1.bf16.msra.mxu0 %v1875
      %1879 = vmatprep.subr.bf16.mxu0 0
      %1880 = vmatpush1.bf16.msra.mxu0 0
      %1881 = vmatprep.subr.bf16.mxu0 0
      %1882 = vmatpush1.bf16.msra.mxu0 0
      %1883 = vmatprep.subr.bf16.mxu0 0
      %1884 = vmatpush1.bf16.msra.mxu0 0
      %1885 = vmatprep.subr.bf16.mxu0 0
      %1886 = vmatpush1.bf16.msra.mxu0 0
      %1887 = vmatprep.subr.bf16.mxu0 0
      %1888 = vmatpush1.bf16.msra.mxu0 0
      %1889 = vmatprep.subr.bf16.mxu0 0
      %1890 = vmatpush1.bf16.msra.mxu0 0
      %1891 = vmatprep.subr.bf16.mxu0 0
      %1892 = vmatpush1.bf16.msra.mxu0 0
      %1893 = vmatprep.subr.bf16.mxu0 0
      %1894 = vmatpush1.bf16.msra.mxu0 0
      %1895 = vmatprep.subr.bf16.mxu0 0
      %1896 = vmatpush1.bf16.msra.mxu0 0
      %1897 = vmatprep.subr.bf16.mxu0 0
      %1898 = vmatpush1.bf16.msra.mxu0 0
      %1899 = vmatprep.subr.bf16.mxu0 0
      %1900 = vmatpush1.bf16.msra.mxu0 0
      %1901 = vmatprep.subr.bf16.mxu0 0
      %1902 = vmatpush1.bf16.msra.mxu0 0
      %1903 = vmatprep.subr.bf16.mxu0 0
      %1904 = vmatpush1.bf16.msra.mxu0 0
      %1905 = vmatprep.subr.bf16.mxu0 0
      %1906 = vmatpush1.bf16.msra.mxu0 0
      %1907 = vmatprep.subr.bf16.mxu0 0
      %1908 = vmatpush1.bf16.msra.mxu0 0
      %1909 = vmatprep.mubr.bf16.mxu0 0
      %1910 = vmatmul.mubr.bf16.gmra.mrb[0].mxu0 %v1872
      %v1911 = vpop.f32.mrb[0].mxu0
      %v1912 = vadd.f32 0.0, %v1911
      %v1913 = vpop.f32.mrb[0].mxu0
      %v1914 = vpop.f32.mrb[0].mxu0
      %v1915 = vpop.f32.mrb[0].mxu0
      %1916 = vdwg.mxu0
      %1917 = vrot.lane.b32.xlu0 %v1078, 56
      %v1918 = vpop.permute.xlu0 %1917
      %v1920 = vsel %vm1082, %v1772, 0
      %v1923 = vsel %vm1333, %v1918, 0
      %1925 = vmatprep.subr.bf16.mxu0 0
      %1926 = vmatpush1.bf16.msra.mxu0 %v1923
      %1927 = vmatprep.subr.bf16.mxu0 0
      %1928 = vmatpush1.bf16.msra.mxu0 0
      %1929 = vmatprep.subr.bf16.mxu0 0
      %1930 = vmatpush1.bf16.msra.mxu0 0
      %1931 = vmatprep.subr.bf16.mxu0 0
      %1932 = vmatpush1.bf16.msra.mxu0 0
      %1933 = vmatprep.subr.bf16.mxu0 0
      %1934 = vmatpush1.bf16.msra.mxu0 0
      %1935 = vmatprep.subr.bf16.mxu0 0
      %1936 = vmatpush1.bf16.msra.mxu0 0
      %1937 = vmatprep.subr.bf16.mxu0 0
      %1938 = vmatpush1.bf16.msra.mxu0 0
      %1939 = vmatprep.subr.bf16.mxu0 0
      %1940 = vmatpush1.bf16.msra.mxu0 0
      %1941 = vmatprep.subr.bf16.mxu0 0
      %1942 = vmatpush1.bf16.msra.mxu0 0
      %1943 = vmatprep.subr.bf16.mxu0 0
      %1944 = vmatpush1.bf16.msra.mxu0 0
      %1945 = vmatprep.subr.bf16.mxu0 0
      %1946 = vmatpush1.bf16.msra.mxu0 0
      %1947 = vmatprep.subr.bf16.mxu0 0
      %1948 = vmatpush1.bf16.msra.mxu0 0
      %1949 = vmatprep.subr.bf16.mxu0 0
      %1950 = vmatpush1.bf16.msra.mxu0 0
      %1951 = vmatprep.subr.bf16.mxu0 0
      %1952 = vmatpush1.bf16.msra.mxu0 0
      %1953 = vmatprep.subr.bf16.mxu0 0
      %1954 = vmatpush1.bf16.msra.mxu0 0
      %1955 = vmatprep.subr.bf16.mxu0 0
      %1956 = vmatpush1.bf16.msra.mxu0 0
      %1957 = vmatprep.mubr.bf16.mxu0 0
      %1958 = vmatmul.mubr.bf16.gmra.mrb[0].mxu0 %v1920
      %v1959 = vpop.f32.mrb[0].mxu0
      %v1960 = vadd.f32 0.0, %v1959
      %v1961 = vpop.f32.mrb[0].mxu0
      %v1962 = vpop.f32.mrb[0].mxu0
      %v1963 = vpop.f32.mrb[0].mxu0
      %1964 = vdwg.mxu0
      %1965 = vrot.lane.b32.xlu0 %v1075, 112
      %v1966 = vpop.permute.xlu0 %1965
      %1967 = vrot.lane.b32.xlu0 %v1075, 80
      %v1968 = vpop.permute.xlu0 %1967
      %v1970 = vsel %vm1082, %v1966, 0
      %v1973 = vsel %vm1082, %v1968, 0
      %1975 = vmatprep.subr.bf16.mxu0 0
      %1976 = vmatpush1.bf16.xpose.msra.mxu0 %v1973
      %1977 = vmatprep.subr.bf16.mxu0 0
      %1978 = vmatpush1.bf16.xpose.msra.mxu0 0
      %1979 = vmatprep.subr.bf16.mxu0 0
      %1980 = vmatpush1.bf16.xpose.msra.mxu0 0
      %1981 = vmatprep.subr.bf16.mxu0 0
      %1982 = vmatpush1.bf16.xpose.msra.mxu0 0
      %1983 = vmatprep.subr.bf16.mxu0 0
      %1984 = vmatpush1.bf16.xpose.msra.mxu0 0
      %1985 = vmatprep.subr.bf16.mxu0 0
      %1986 = vmatpush1.bf16.xpose.msra.mxu0 0
      %1987 = vmatprep.subr.bf16.mxu0 0
      %1988 = vmatpush1.bf16.xpose.msra.mxu0 0
      %1989 = vmatprep.subr.bf16.mxu0 0
      %1990 = vmatpush1.bf16.xpose.msra.mxu0 0
      %1991 = vmatprep.subr.bf16.mxu0 0
      %1992 = vmatpush1.bf16.xpose.msra.mxu0 0
      %1993 = vmatprep.subr.bf16.mxu0 0
      %1994 = vmatpush1.bf16.xpose.msra.mxu0 0
      %1995 = vmatprep.subr.bf16.mxu0 0
      %1996 = vmatpush1.bf16.xpose.msra.mxu0 0
      %1997 = vmatprep.subr.bf16.mxu0 0
      %1998 = vmatpush1.bf16.xpose.msra.mxu0 0
      %1999 = vmatprep.subr.bf16.mxu0 0
      %2000 = vmatpush1.bf16.xpose.msra.mxu0 0
      %2001 = vmatprep.subr.bf16.mxu0 0
      %2002 = vmatpush1.bf16.xpose.msra.mxu0 0
      %2003 = vmatprep.subr.bf16.mxu0 0
      %2004 = vmatpush1.bf16.xpose.msra.mxu0 0
      %2005 = vmatprep.subr.bf16.mxu0 0
      %2006 = vmatpush1.bf16.xpose.msra.mxu0 0
      %2007 = vmatprep.mubr.bf16.mxu0 0
      %2008 = vmatmul.mubr.bf16.gmra.mrb[0].mxu0 %v1970
      %v2009 = vpop.f32.mrb[0].mxu0
      %v2010 = vadd.f32 0.0, %v2009
      %v2011 = vpop.f32.mrb[0].mxu0
      %v2012 = vpop.f32.mrb[0].mxu0
      %v2013 = vpop.f32.mrb[0].mxu0
      %2014 = vdwg.mxu0
      %2015 = vrot.lane.b32.xlu0 %v1076, 112
      %v2016 = vpop.permute.xlu0 %2015
      %2017 = vrot.lane.b32.xlu0 %v1076, 80
      %v2018 = vpop.permute.xlu0 %2017
      %v2020 = vsel %vm1082, %v2016, 0
      %v2023 = vsel %vm1082, %v2018, 0
      %2025 = vmatprep.subr.bf16.mxu0 0
      %2026 = vmatpush1.bf16.xpose.msra.mxu0 %v2023
      %2027 = vmatprep.subr.bf16.mxu0 0
      %2028 = vmatpush1.bf16.xpose.msra.mxu0 0
      %2029 = vmatprep.subr.bf16.mxu0 0
      %2030 = vmatpush1.bf16.xpose.msra.mxu0 0
      %2031 = vmatprep.subr.bf16.mxu0 0
      %2032 = vmatpush1.bf16.xpose.msra.mxu0 0
      %2033 = vmatprep.subr.bf16.mxu0 0
      %2034 = vmatpush1.bf16.xpose.msra.mxu0 0
      %2035 = vmatprep.subr.bf16.mxu0 0
      %2036 = vmatpush1.bf16.xpose.msra.mxu0 0
      %2037 = vmatprep.subr.bf16.mxu0 0
      %2038 = vmatpush1.bf16.xpose.msra.mxu0 0
      %2039 = vmatprep.subr.bf16.mxu0 0
      %2040 = vmatpush1.bf16.xpose.msra.mxu0 0
      %2041 = vmatprep.subr.bf16.mxu0 0
      %2042 = vmatpush1.bf16.xpose.msra.mxu0 0
      %2043 = vmatprep.subr.bf16.mxu0 0
      %2044 = vmatpush1.bf16.xpose.msra.mxu0 0
      %2045 = vmatprep.subr.bf16.mxu0 0
      %2046 = vmatpush1.bf16.xpose.msra.mxu0 0
      %2047 = vmatprep.subr.bf16.mxu0 0
      %2048 = vmatpush1.bf16.xpose.msra.mxu0 0
      %2049 = vmatprep.subr.bf16.mxu0 0
      %2050 = vmatpush1.bf16.xpose.msra.mxu0 0
      %2051 = vmatprep.subr.bf16.mxu0 0
      %2052 = vmatpush1.bf16.xpose.msra.mxu0 0
      %2053 = vmatprep.subr.bf16.mxu0 0
      %2054 = vmatpush1.bf16.xpose.msra.mxu0 0
      %2055 = vmatprep.subr.bf16.mxu0 0
      %2056 = vmatpush1.bf16.xpose.msra.mxu0 0
      %2057 = vmatprep.mubr.bf16.mxu0 0
      %2058 = vmatmul.mubr.bf16.gmra.mrb[0].mxu0 %v2020
      %v2059 = vpop.f32.mrb[0].mxu0
      %v2060 = vadd.f32 0.0, %v2059
      %v2061 = vpop.f32.mrb[0].mxu0
      %v2062 = vpop.f32.mrb[0].mxu0
      %v2063 = vpop.f32.mrb[0].mxu0
      %2064 = vdwg.mxu0
      %2065 = vrot.lane.b32.xlu0 %v1077, 112
      %v2066 = vpop.permute.xlu0 %2065
      %2067 = vrot.lane.b32.xlu0 %v1077, 80
      %v2068 = vpop.permute.xlu0 %2067
      %v2070 = vsel %vm1082, %v2066, 0
      %v2073 = vsel %vm1082, %v2068, 0
      %2075 = vmatprep.subr.bf16.mxu0 0
      %2076 = vmatpush1.bf16.xpose.msra.mxu0 %v2073
      %2077 = vmatprep.subr.bf16.mxu0 0
      %2078 = vmatpush1.bf16.xpose.msra.mxu0 0
      %2079 = vmatprep.subr.bf16.mxu0 0
      %2080 = vmatpush1.bf16.xpose.msra.mxu0 0
      %2081 = vmatprep.subr.bf16.mxu0 0
      %2082 = vmatpush1.bf16.xpose.msra.mxu0 0
      %2083 = vmatprep.subr.bf16.mxu0 0
      %2084 = vmatpush1.bf16.xpose.msra.mxu0 0
      %2085 = vmatprep.subr.bf16.mxu0 0
      %2086 = vmatpush1.bf16.xpose.msra.mxu0 0
      %2087 = vmatprep.subr.bf16.mxu0 0
      %2088 = vmatpush1.bf16.xpose.msra.mxu0 0
      %2089 = vmatprep.subr.bf16.mxu0 0
      %2090 = vmatpush1.bf16.xpose.msra.mxu0 0
      %2091 = vmatprep.subr.bf16.mxu0 0
      %2092 = vmatpush1.bf16.xpose.msra.mxu0 0
      %2093 = vmatprep.subr.bf16.mxu0 0
      %2094 = vmatpush1.bf16.xpose.msra.mxu0 0
      %2095 = vmatprep.subr.bf16.mxu0 0
      %2096 = vmatpush1.bf16.xpose.msra.mxu0 0
      %2097 = vmatprep.subr.bf16.mxu0 0
      %2098 = vmatpush1.bf16.xpose.msra.mxu0 0
      %2099 = vmatprep.subr.bf16.mxu0 0
      %2100 = vmatpush1.bf16.xpose.msra.mxu0 0
      %2101 = vmatprep.subr.bf16.mxu0 0
      %2102 = vmatpush1.bf16.xpose.msra.mxu0 0
      %2103 = vmatprep.subr.bf16.mxu0 0
      %2104 = vmatpush1.bf16.xpose.msra.mxu0 0
      %2105 = vmatprep.subr.bf16.mxu0 0
      %2106 = vmatpush1.bf16.xpose.msra.mxu0 0
      %2107 = vmatprep.mubr.bf16.mxu0 0
      %2108 = vmatmul.mubr.bf16.gmra.mrb[0].mxu0 %v2070
      %v2109 = vpop.f32.mrb[0].mxu0
      %v2110 = vadd.f32 0.0, %v2109
      %v2111 = vpop.f32.mrb[0].mxu0
      %v2112 = vpop.f32.mrb[0].mxu0
      %v2113 = vpop.f32.mrb[0].mxu0
      %2114 = vdwg.mxu0
      %2115 = vrot.lane.b32.xlu0 %v1078, 112
      %v2116 = vpop.permute.xlu0 %2115
      %2117 = vrot.lane.b32.xlu0 %v1078, 80
      %v2118 = vpop.permute.xlu0 %2117
      %v2120 = vsel %vm1082, %v2116, 0
      %v2123 = vsel %vm1082, %v2118, 0
      %2125 = vmatprep.subr.bf16.mxu0 0
      %2126 = vmatpush1.bf16.xpose.msra.mxu0 %v2123
      %2127 = vmatprep.subr.bf16.mxu0 0
      %2128 = vmatpush1.bf16.xpose.msra.mxu0 0
      %2129 = vmatprep.subr.bf16.mxu0 0
      %2130 = vmatpush1.bf16.xpose.msra.mxu0 0
      %2131 = vmatprep.subr.bf16.mxu0 0
      %2132 = vmatpush1.bf16.xpose.msra.mxu0 0
      %2133 = vmatprep.subr.bf16.mxu0 0
      %2134 = vmatpush1.bf16.xpose.msra.mxu0 0
      %2135 = vmatprep.subr.bf16.mxu0 0
      %2136 = vmatpush1.bf16.xpose.msra.mxu0 0
      %2137 = vmatprep.subr.bf16.mxu0 0
      %2138 = vmatpush1.bf16.xpose.msra.mxu0 0
      %2139 = vmatprep.subr.bf16.mxu0 0
      %2140 = vmatpush1.bf16.xpose.msra.mxu0 0
      %2141 = vmatprep.subr.bf16.mxu0 0
      %2142 = vmatpush1.bf16.xpose.msra.mxu0 0
      %2143 = vmatprep.subr.bf16.mxu0 0
      %2144 = vmatpush1.bf16.xpose.msra.mxu0 0
      %2145 = vmatprep.subr.bf16.mxu0 0
      %2146 = vmatpush1.bf16.xpose.msra.mxu0 0
      %2147 = vmatprep.subr.bf16.mxu0 0
      %2148 = vmatpush1.bf16.xpose.msra.mxu0 0
      %2149 = vmatprep.subr.bf16.mxu0 0
      %2150 = vmatpush1.bf16.xpose.msra.mxu0 0
      %2151 = vmatprep.subr.bf16.mxu0 0
      %2152 = vmatpush1.bf16.xpose.msra.mxu0 0
      %2153 = vmatprep.subr.bf16.mxu0 0
      %2154 = vmatpush1.bf16.xpose.msra.mxu0 0
      %2155 = vmatprep.subr.bf16.mxu0 0
      %2156 = vmatpush1.bf16.xpose.msra.mxu0 0
      %2157 = vmatprep.mubr.bf16.mxu0 0
      %2158 = vmatmul.mubr.bf16.gmra.mrb[0].mxu0 %v2120
      %v2159 = vpop.f32.mrb[0].mxu0
      %v2160 = vadd.f32 0.0, %v2159
      %v2161 = vpop.f32.mrb[0].mxu0
      %v2162 = vpop.f32.mrb[0].mxu0
      %v2163 = vpop.f32.mrb[0].mxu0
      %2164 = vdwg.mxu0
      %v2165 = vmul.f32 %v2010, 0.35355338
      %v2166 = vmul.f32 %v2060, 0.35355338
      %v2167 = vmul.f32 %v2110, 0.35355338
      %v2168 = vmul.f32 %v2160, 0.35355338
      %v2169 = vsel %vm1082, %v2165, -inf
      %2170 = vmax.xlane.f32.xlu0 %v2169
      %v2171 = vpop.xlane.xlu0 %2170
      %v2172 = vsel %vm1082, %v2166, -inf
      %2173 = vmax.xlane.f32.xlu0 %v2172
      %v2174 = vpop.xlane.xlu0 %2173
      %v2175 = vsel %vm1082, %v2167, -inf
      %2176 = vmax.xlane.f32.xlu0 %v2175
      %v2177 = vpop.xlane.xlu0 %2176
      %v2178 = vsel %vm1082, %v2168, -inf
      %2179 = vmax.xlane.f32.xlu0 %v2178
      %v2180 = vpop.xlane.xlu0 %2179
      %v2181 = vsub.f32 %v2165, %v2171
      %v2182 = vsub.f32 %v2166, %v2174
      %v2183 = vsub.f32 %v2167, %v2177
      %v2184 = vsub.f32 %v2168, %v2180
      %v2185 = vmul.f32 %v2181, 1.442695
      %v2186 = vpow.pop %v2185
      %v2187 = vmul.f32 %v2182, 1.442695
      %v2188 = vpow.pop %v2187
      %v2189 = vmul.f32 %v2183, 1.442695
      %v2190 = vpow.pop %v2189
      %v2191 = vmul.f32 %v2184, 1.442695
      %v2192 = vpow.pop %v2191
      %v2193 = vsel %vm1082, %v2186, 0.0
      %2194 = vadd.xlane.f32.xlu0 %v2193
      %v2195 = vpop.xlane.xlu0 %2194
      %v2196 = vsel %vm1082, %v2188, 0.0
      %2197 = vadd.xlane.f32.xlu0 %v2196
      %v2198 = vpop.xlane.xlu0 %2197
      %v2199 = vsel %vm1082, %v2190, 0.0
      %2200 = vadd.xlane.f32.xlu0 %v2199
      %v2201 = vpop.xlane.xlu0 %2200
      %v2202 = vsel %vm1082, %v2192, 0.0
      %2203 = vadd.xlane.f32.xlu0 %v2202
      %v2204 = vpop.xlane.xlu0 %2203
      %v2205 = vrcp.pop %v2195
      %v2206 = vrcp.pop %v2198
      %v2207 = vrcp.pop %v2201
      %v2208 = vrcp.pop %v2204
      %v2209 = vmul.f32 %v2186, %v2205
      %v2210 = vmul.f32 %v2188, %v2206
      %v2211 = vmul.f32 %v2190, %v2207
      %v2212 = vmul.f32 %v2192, %v2208
      %v2213 = vpack.c.bf16 %v2209, %v2209
      %v2214 = vpack.c.bf16 %v2210, %v2210
      %v2215 = vpack.c.bf16 %v2211, %v2211
      %v2216 = vpack.c.bf16 %v2212, %v2212
      %2217 = vrot.lane.b32.xlu0 %v1075, 48
      %v2218 = vpop.permute.xlu0 %2217
      %v2220 = vsel %vm1082, %v2213, 0
      %v2223 = vsel %vm1333, %v2218, 0
      %2225 = vmatprep.subr.bf16.mxu0 0
      %2226 = vmatpush1.bf16.msra.mxu0 %v2223
      %2227 = vmatprep.subr.bf16.mxu0 0
      %2228 = vmatpush1.bf16.msra.mxu0 0
      %2229 = vmatprep.subr.bf16.mxu0 0
      %2230 = vmatpush1.bf16.msra.mxu0 0
      %2231 = vmatprep.subr.bf16.mxu0 0
      %2232 = vmatpush1.bf16.msra.mxu0 0
      %2233 = vmatprep.subr.bf16.mxu0 0
      %2234 = vmatpush1.bf16.msra.mxu0 0
      %2235 = vmatprep.subr.bf16.mxu0 0
      %2236 = vmatpush1.bf16.msra.mxu0 0
      %2237 = vmatprep.subr.bf16.mxu0 0
      %2238 = vmatpush1.bf16.msra.mxu0 0
      %2239 = vmatprep.subr.bf16.mxu0 0
      %2240 = vmatpush1.bf16.msra.mxu0 0
      %2241 = vmatprep.subr.bf16.mxu0 0
      %2242 = vmatpush1.bf16.msra.mxu0 0
      %2243 = vmatprep.subr.bf16.mxu0 0
      %2244 = vmatpush1.bf16.msra.mxu0 0
      %2245 = vmatprep.subr.bf16.mxu0 0
      %2246 = vmatpush1.bf16.msra.mxu0 0
      %2247 = vmatprep.subr.bf16.mxu0 0
      %2248 = vmatpush1.bf16.msra.mxu0 0
      %2249 = vmatprep.subr.bf16.mxu0 0
      %2250 = vmatpush1.bf16.msra.mxu0 0
      %2251 = vmatprep.subr.bf16.mxu0 0
      %2252 = vmatpush1.bf16.msra.mxu0 0
      %2253 = vmatprep.subr.bf16.mxu0 0
      %2254 = vmatpush1.bf16.msra.mxu0 0
      %2255 = vmatprep.subr.bf16.mxu0 0
      %2256 = vmatpush1.bf16.msra.mxu0 0
      %2257 = vmatprep.mubr.bf16.mxu0 0
      %2258 = vmatmul.mubr.bf16.gmra.mrb[0].mxu0 %v2220
      %v2259 = vpop.f32.mrb[0].mxu0
      %v2260 = vadd.f32 0.0, %v2259
      %v2261 = vpop.f32.mrb[0].mxu0
      %v2262 = vpop.f32.mrb[0].mxu0
      %v2263 = vpop.f32.mrb[0].mxu0
      %2264 = vdwg.mxu0
      %2265 = vrot.lane.b32.xlu0 %v1076, 48
      %v2266 = vpop.permute.xlu0 %2265
      %v2268 = vsel %vm1082, %v2214, 0
      %v2271 = vsel %vm1333, %v2266, 0
      %2273 = vmatprep.subr.bf16.mxu0 0
      %2274 = vmatpush1.bf16.msra.mxu0 %v2271
      %2275 = vmatprep.subr.bf16.mxu0 0
      %2276 = vmatpush1.bf16.msra.mxu0 0
      %2277 = vmatprep.subr.bf16.mxu0 0
      %2278 = vmatpush1.bf16.msra.mxu0 0
      %2279 = vmatprep.subr.bf16.mxu0 0
      %2280 = vmatpush1.bf16.msra.mxu0 0
      %2281 = vmatprep.subr.bf16.mxu0 0
      %2282 = vmatpush1.bf16.msra.mxu0 0
      %2283 = vmatprep.subr.bf16.mxu0 0
      %2284 = vmatpush1.bf16.msra.mxu0 0
      %2285 = vmatprep.subr.bf16.mxu0 0
      %2286 = vmatpush1.bf16.msra.mxu0 0
      %2287 = vmatprep.subr.bf16.mxu0 0
      %2288 = vmatpush1.bf16.msra.mxu0 0
      %2289 = vmatprep.subr.bf16.mxu0 0
      %2290 = vmatpush1.bf16.msra.mxu0 0
      %2291 = vmatprep.subr.bf16.mxu0 0
      %2292 = vmatpush1.bf16.msra.mxu0 0
      %2293 = vmatprep.subr.bf16.mxu0 0
      %2294 = vmatpush1.bf16.msra.mxu0 0
      %2295 = vmatprep.subr.bf16.mxu0 0
      %2296 = vmatpush1.bf16.msra.mxu0 0
      %2297 = vmatprep.subr.bf16.mxu0 0
      %2298 = vmatpush1.bf16.msra.mxu0 0
      %2299 = vmatprep.subr.bf16.mxu0 0
      %2300 = vmatpush1.bf16.msra.mxu0 0
      %2301 = vmatprep.subr.bf16.mxu0 0
      %2302 = vmatpush1.bf16.msra.mxu0 0
      %2303 = vmatprep.subr.bf16.mxu0 0
      %2304 = vmatpush1.bf16.msra.mxu0 0
      %2305 = vmatprep.mubr.bf16.mxu0 0
      %2306 = vmatmul.mubr.bf16.gmra.mrb[0].mxu0 %v2268
      %v2307 = vpop.f32.mrb[0].mxu0
      %v2308 = vadd.f32 0.0, %v2307
      %v2309 = vpop.f32.mrb[0].mxu0
      %v2310 = vpop.f32.mrb[0].mxu0
      %v2311 = vpop.f32.mrb[0].mxu0
      %2312 = vdwg.mxu0
      %2313 = vrot.lane.b32.xlu0 %v1077, 48
      %v2314 = vpop.permute.xlu0 %2313
      %v2316 = vsel %vm1082, %v2215, 0
      %v2319 = vsel %vm1333, %v2314, 0
      %2321 = vmatprep.subr.bf16.mxu0 0
      %2322 = vmatpush1.bf16.msra.mxu0 %v2319
      %2323 = vmatprep.subr.bf16.mxu0 0
      %2324 = vmatpush1.bf16.msra.mxu0 0
      %2325 = vmatprep.subr.bf16.mxu0 0
      %2326 = vmatpush1.bf16.msra.mxu0 0
      %2327 = vmatprep.subr.bf16.mxu0 0
      %2328 = vmatpush1.bf16.msra.mxu0 0
      %2329 = vmatprep.subr.bf16.mxu0 0
      %2330 = vmatpush1.bf16.msra.mxu0 0
      %2331 = vmatprep.subr.bf16.mxu0 0
      %2332 = vmatpush1.bf16.msra.mxu0 0
      %2333 = vmatprep.subr.bf16.mxu0 0
      %2334 = vmatpush1.bf16.msra.mxu0 0
      %2335 = vmatprep.subr.bf16.mxu0 0
      %2336 = vmatpush1.bf16.msra.mxu0 0
      %2337 = vmatprep.subr.bf16.mxu0 0
      %2338 = vmatpush1.bf16.msra.mxu0 0
      %2339 = vmatprep.subr.bf16.mxu0 0
      %2340 = vmatpush1.bf16.msra.mxu0 0
      %2341 = vmatprep.subr.bf16.mxu0 0
      %2342 = vmatpush1.bf16.msra.mxu0 0
      %2343 = vmatprep.subr.bf16.mxu0 0
      %2344 = vmatpush1.bf16.msra.mxu0 0
      %2345 = vmatprep.subr.bf16.mxu0 0
      %2346 = vmatpush1.bf16.msra.mxu0 0
      %2347 = vmatprep.subr.bf16.mxu0 0
      %2348 = vmatpush1.bf16.msra.mxu0 0
      %2349 = vmatprep.subr.bf16.mxu0 0
      %2350 = vmatpush1.bf16.msra.mxu0 0
      %2351 = vmatprep.subr.bf16.mxu0 0
      %2352 = vmatpush1.bf16.msra.mxu0 0
      %2353 = vmatprep.mubr.bf16.mxu0 0
      %2354 = vmatmul.mubr.bf16.gmra.mrb[0].mxu0 %v2316
      %v2355 = vpop.f32.mrb[0].mxu0
      %v2356 = vadd.f32 0.0, %v2355
      %v2357 = vpop.f32.mrb[0].mxu0
      %v2358 = vpop.f32.mrb[0].mxu0
      %v2359 = vpop.f32.mrb[0].mxu0
      %2360 = vdwg.mxu0
      %2361 = vrot.lane.b32.xlu0 %v1078, 48
      %v2362 = vpop.permute.xlu0 %2361
      %v2364 = vsel %vm1082, %v2216, 0
      %v2367 = vsel %vm1333, %v2362, 0
      %2369 = vmatprep.subr.bf16.mxu0 0
      %2370 = vmatpush1.bf16.msra.mxu0 %v2367
      %2371 = vmatprep.subr.bf16.mxu0 0
      %2372 = vmatpush1.bf16.msra.mxu0 0
      %2373 = vmatprep.subr.bf16.mxu0 0
      %2374 = vmatpush1.bf16.msra.mxu0 0
      %2375 = vmatprep.subr.bf16.mxu0 0
      %2376 = vmatpush1.bf16.msra.mxu0 0
      %2377 = vmatprep.subr.bf16.mxu0 0
      %2378 = vmatpush1.bf16.msra.mxu0 0
      %2379 = vmatprep.subr.bf16.mxu0 0
      %2380 = vmatpush1.bf16.msra.mxu0 0
      %2381 = vmatprep.subr.bf16.mxu0 0
      %2382 = vmatpush1.bf16.msra.mxu0 0
      %2383 = vmatprep.subr.bf16.mxu0 0
      %2384 = vmatpush1.bf16.msra.mxu0 0
      %2385 = vmatprep.subr.bf16.mxu0 0
      %2386 = vmatpush1.bf16.msra.mxu0 0
      %2387 = vmatprep.subr.bf16.mxu0 0
      %2388 = vmatpush1.bf16.msra.mxu0 0
      %2389 = vmatprep.subr.bf16.mxu0 0
      %2390 = vmatpush1.bf16.msra.mxu0 0
      %2391 = vmatprep.subr.bf16.mxu0 0
      %2392 = vmatpush1.bf16.msra.mxu0 0
      %2393 = vmatprep.subr.bf16.mxu0 0
      %2394 = vmatpush1.bf16.msra.mxu0 0
      %2395 = vmatprep.subr.bf16.mxu0 0
      %2396 = vmatpush1.bf16.msra.mxu0 0
      %2397 = vmatprep.subr.bf16.mxu0 0
      %2398 = vmatpush1.bf16.msra.mxu0 0
      %2399 = vmatprep.subr.bf16.mxu0 0
      %2400 = vmatpush1.bf16.msra.mxu0 0
      %2401 = vmatprep.mubr.bf16.mxu0 0
      %2402 = vmatmul.mubr.bf16.gmra.mrb[0].mxu0 %v2364
      %v2403 = vpop.f32.mrb[0].mxu0
      %v2404 = vadd.f32 0.0, %v2403
      %v2405 = vpop.f32.mrb[0].mxu0
      %v2406 = vpop.f32.mrb[0].mxu0
      %v2407 = vpop.f32.mrb[0].mxu0
      %2408 = vdwg.mxu0
      %2409 = vrot.lane.b32.xlu0 %v1075, 104
      %v2410 = vpop.permute.xlu0 %2409
      %2411 = vrot.lane.b32.xlu0 %v1075, 72
      %v2412 = vpop.permute.xlu0 %2411
      %v2414 = vsel %vm1082, %v2410, 0
      %v2417 = vsel %vm1082, %v2412, 0
      %2419 = vmatprep.subr.bf16.mxu0 0
      %2420 = vmatpush1.bf16.xpose.msra.mxu0 %v2417
      %2421 = vmatprep.subr.bf16.mxu0 0
      %2422 = vmatpush1.bf16.xpose.msra.mxu0 0
      %2423 = vmatprep.subr.bf16.mxu0 0
      %2424 = vmatpush1.bf16.xpose.msra.mxu0 0
      %2425 = vmatprep.subr.bf16.mxu0 0
      %2426 = vmatpush1.bf16.xpose.msra.mxu0 0
      %2427 = vmatprep.subr.bf16.mxu0 0
      %2428 = vmatpush1.bf16.xpose.msra.mxu0 0
      %2429 = vmatprep.subr.bf16.mxu0 0
      %2430 = vmatpush1.bf16.xpose.msra.mxu0 0
      %2431 = vmatprep.subr.bf16.mxu0 0
      %2432 = vmatpush1.bf16.xpose.msra.mxu0 0
      %2433 = vmatprep.subr.bf16.mxu0 0
      %2434 = vmatpush1.bf16.xpose.msra.mxu0 0
      %2435 = vmatprep.subr.bf16.mxu0 0
      %2436 = vmatpush1.bf16.xpose.msra.mxu0 0
      %2437 = vmatprep.subr.bf16.mxu0 0
      %2438 = vmatpush1.bf16.xpose.msra.mxu0 0
      %2439 = vmatprep.subr.bf16.mxu0 0
      %2440 = vmatpush1.bf16.xpose.msra.mxu0 0
      %2441 = vmatprep.subr.bf16.mxu0 0
      %2442 = vmatpush1.bf16.xpose.msra.mxu0 0
      %2443 = vmatprep.subr.bf16.mxu0 0
      %2444 = vmatpush1.bf16.xpose.msra.mxu0 0
      %2445 = vmatprep.subr.bf16.mxu0 0
      %2446 = vmatpush1.bf16.xpose.msra.mxu0 0
      %2447 = vmatprep.subr.bf16.mxu0 0
      %2448 = vmatpush1.bf16.xpose.msra.mxu0 0
      %2449 = vmatprep.subr.bf16.mxu0 0
      %2450 = vmatpush1.bf16.xpose.msra.mxu0 0
      %2451 = vmatprep.mubr.bf16.mxu0 0
      %2452 = vmatmul.mubr.bf16.gmra.mrb[0].mxu0 %v2414
      %v2453 = vpop.f32.mrb[0].mxu0
      %v2454 = vadd.f32 0.0, %v2453
      %v2455 = vpop.f32.mrb[0].mxu0
      %v2456 = vpop.f32.mrb[0].mxu0
      %v2457 = vpop.f32.mrb[0].mxu0
      %2458 = vdwg.mxu0
      %2459 = vrot.lane.b32.xlu0 %v1076, 104
      %v2460 = vpop.permute.xlu0 %2459
      %2461 = vrot.lane.b32.xlu0 %v1076, 72
      %v2462 = vpop.permute.xlu0 %2461
      %v2464 = vsel %vm1082, %v2460, 0
      %v2467 = vsel %vm1082, %v2462, 0
      %2469 = vmatprep.subr.bf16.mxu0 0
      %2470 = vmatpush1.bf16.xpose.msra.mxu0 %v2467
      %2471 = vmatprep.subr.bf16.mxu0 0
      %2472 = vmatpush1.bf16.xpose.msra.mxu0 0
      %2473 = vmatprep.subr.bf16.mxu0 0
      %2474 = vmatpush1.bf16.xpose.msra.mxu0 0
      %2475 = vmatprep.subr.bf16.mxu0 0
      %2476 = vmatpush1.bf16.xpose.msra.mxu0 0
      %2477 = vmatprep.subr.bf16.mxu0 0
      %2478 = vmatpush1.bf16.xpose.msra.mxu0 0
      %2479 = vmatprep.subr.bf16.mxu0 0
      %2480 = vmatpush1.bf16.xpose.msra.mxu0 0
      %2481 = vmatprep.subr.bf16.mxu0 0
      %2482 = vmatpush1.bf16.xpose.msra.mxu0 0
      %2483 = vmatprep.subr.bf16.mxu0 0
      %2484 = vmatpush1.bf16.xpose.msra.mxu0 0
      %2485 = vmatprep.subr.bf16.mxu0 0
      %2486 = vmatpush1.bf16.xpose.msra.mxu0 0
      %2487 = vmatprep.subr.bf16.mxu0 0
      %2488 = vmatpush1.bf16.xpose.msra.mxu0 0
      %2489 = vmatprep.subr.bf16.mxu0 0
      %2490 = vmatpush1.bf16.xpose.msra.mxu0 0
      %2491 = vmatprep.subr.bf16.mxu0 0
      %2492 = vmatpush1.bf16.xpose.msra.mxu0 0
      %2493 = vmatprep.subr.bf16.mxu0 0
      %2494 = vmatpush1.bf16.xpose.msra.mxu0 0
      %2495 = vmatprep.subr.bf16.mxu0 0
      %2496 = vmatpush1.bf16.xpose.msra.mxu0 0
      %2497 = vmatprep.subr.bf16.mxu0 0
      %2498 = vmatpush1.bf16.xpose.msra.mxu0 0
      %2499 = vmatprep.subr.bf16.mxu0 0
      %2500 = vmatpush1.bf16.xpose.msra.mxu0 0
      %2501 = vmatprep.mubr.bf16.mxu0 0
      %2502 = vmatmul.mubr.bf16.gmra.mrb[0].mxu0 %v2464
      %v2503 = vpop.f32.mrb[0].mxu0
      %v2504 = vadd.f32 0.0, %v2503
      %v2505 = vpop.f32.mrb[0].mxu0
      %v2506 = vpop.f32.mrb[0].mxu0
      %v2507 = vpop.f32.mrb[0].mxu0
      %2508 = vdwg.mxu0
      %2509 = vrot.lane.b32.xlu0 %v1077, 104
      %v2510 = vpop.permute.xlu0 %2509
      %2511 = vrot.lane.b32.xlu0 %v1077, 72
      %v2512 = vpop.permute.xlu0 %2511
      %v2514 = vsel %vm1082, %v2510, 0
      %v2517 = vsel %vm1082, %v2512, 0
      %2519 = vmatprep.subr.bf16.mxu0 0
      %2520 = vmatpush1.bf16.xpose.msra.mxu0 %v2517
      %2521 = vmatprep.subr.bf16.mxu0 0
      %2522 = vmatpush1.bf16.xpose.msra.mxu0 0
      %2523 = vmatprep.subr.bf16.mxu0 0
      %2524 = vmatpush1.bf16.xpose.msra.mxu0 0
      %2525 = vmatprep.subr.bf16.mxu0 0
      %2526 = vmatpush1.bf16.xpose.msra.mxu0 0
      %2527 = vmatprep.subr.bf16.mxu0 0
      %2528 = vmatpush1.bf16.xpose.msra.mxu0 0
      %2529 = vmatprep.subr.bf16.mxu0 0
      %2530 = vmatpush1.bf16.xpose.msra.mxu0 0
      %2531 = vmatprep.subr.bf16.mxu0 0
      %2532 = vmatpush1.bf16.xpose.msra.mxu0 0
      %2533 = vmatprep.subr.bf16.mxu0 0
      %2534 = vmatpush1.bf16.xpose.msra.mxu0 0
      %2535 = vmatprep.subr.bf16.mxu0 0
      %2536 = vmatpush1.bf16.xpose.msra.mxu0 0
      %2537 = vmatprep.subr.bf16.mxu0 0
      %2538 = vmatpush1.bf16.xpose.msra.mxu0 0
      %2539 = vmatprep.subr.bf16.mxu0 0
      %2540 = vmatpush1.bf16.xpose.msra.mxu0 0
      %2541 = vmatprep.subr.bf16.mxu0 0
      %2542 = vmatpush1.bf16.xpose.msra.mxu0 0
      %2543 = vmatprep.subr.bf16.mxu0 0
      %2544 = vmatpush1.bf16.xpose.msra.mxu0 0
      %2545 = vmatprep.subr.bf16.mxu0 0
      %2546 = vmatpush1.bf16.xpose.msra.mxu0 0
      %2547 = vmatprep.subr.bf16.mxu0 0
      %2548 = vmatpush1.bf16.xpose.msra.mxu0 0
      %2549 = vmatprep.subr.bf16.mxu0 0
      %2550 = vmatpush1.bf16.xpose.msra.mxu0 0
      %2551 = vmatprep.mubr.bf16.mxu0 0
      %2552 = vmatmul.mubr.bf16.gmra.mrb[0].mxu0 %v2514
      %v2553 = vpop.f32.mrb[0].mxu0
      %v2554 = vadd.f32 0.0, %v2553
      %v2555 = vpop.f32.mrb[0].mxu0
      %v2556 = vpop.f32.mrb[0].mxu0
      %v2557 = vpop.f32.mrb[0].mxu0
      %2558 = vdwg.mxu0
      %2559 = vrot.lane.b32.xlu0 %v1078, 104
      %v2560 = vpop.permute.xlu0 %2559
      %2561 = vrot.lane.b32.xlu0 %v1078, 72
      %v2562 = vpop.permute.xlu0 %2561
      %v2564 = vsel %vm1082, %v2560, 0
      %v2567 = vsel %vm1082, %v2562, 0
      %2569 = vmatprep.subr.bf16.mxu0 0
      %2570 = vmatpush1.bf16.xpose.msra.mxu0 %v2567
      %2571 = vmatprep.subr.bf16.mxu0 0
      %2572 = vmatpush1.bf16.xpose.msra.mxu0 0
      %2573 = vmatprep.subr.bf16.mxu0 0
      %2574 = vmatpush1.bf16.xpose.msra.mxu0 0
      %2575 = vmatprep.subr.bf16.mxu0 0
      %2576 = vmatpush1.bf16.xpose.msra.mxu0 0
      %2577 = vmatprep.subr.bf16.mxu0 0
      %2578 = vmatpush1.bf16.xpose.msra.mxu0 0
      %2579 = vmatprep.subr.bf16.mxu0 0
      %2580 = vmatpush1.bf16.xpose.msra.mxu0 0
      %2581 = vmatprep.subr.bf16.mxu0 0
      %2582 = vmatpush1.bf16.xpose.msra.mxu0 0
      %2583 = vmatprep.subr.bf16.mxu0 0
      %2584 = vmatpush1.bf16.xpose.msra.mxu0 0
      %2585 = vmatprep.subr.bf16.mxu0 0
      %2586 = vmatpush1.bf16.xpose.msra.mxu0 0
      %2587 = vmatprep.subr.bf16.mxu0 0
      %2588 = vmatpush1.bf16.xpose.msra.mxu0 0
      %2589 = vmatprep.subr.bf16.mxu0 0
      %2590 = vmatpush1.bf16.xpose.msra.mxu0 0
      %2591 = vmatprep.subr.bf16.mxu0 0
      %2592 = vmatpush1.bf16.xpose.msra.mxu0 0
      %2593 = vmatprep.subr.bf16.mxu0 0
      %2594 = vmatpush1.bf16.xpose.msra.mxu0 0
      %2595 = vmatprep.subr.bf16.mxu0 0
      %2596 = vmatpush1.bf16.xpose.msra.mxu0 0
      %2597 = vmatprep.subr.bf16.mxu0 0
      %2598 = vmatpush1.bf16.xpose.msra.mxu0 0
      %2599 = vmatprep.subr.bf16.mxu0 0
      %2600 = vmatpush1.bf16.xpose.msra.mxu0 0
      %2601 = vmatprep.mubr.bf16.mxu0 0
      %2602 = vmatmul.mubr.bf16.gmra.mrb[0].mxu0 %v2564
      %v2603 = vpop.f32.mrb[0].mxu0
      %v2604 = vadd.f32 0.0, %v2603
      %v2605 = vpop.f32.mrb[0].mxu0
      %v2606 = vpop.f32.mrb[0].mxu0
      %v2607 = vpop.f32.mrb[0].mxu0
      %2608 = vdwg.mxu0
      %v2609 = vmul.f32 %v2454, 0.35355338
      %v2610 = vmul.f32 %v2504, 0.35355338
      %v2611 = vmul.f32 %v2554, 0.35355338
      %v2612 = vmul.f32 %v2604, 0.35355338
      %v2613 = vsel %vm1082, %v2609, -inf
      %2614 = vmax.xlane.f32.xlu0 %v2613
      %v2615 = vpop.xlane.xlu0 %2614
      %v2616 = vsel %vm1082, %v2610, -inf
      %2617 = vmax.xlane.f32.xlu0 %v2616
      %v2618 = vpop.xlane.xlu0 %2617
      %v2619 = vsel %vm1082, %v2611, -inf
      %2620 = vmax.xlane.f32.xlu0 %v2619
      %v2621 = vpop.xlane.xlu0 %2620
      %v2622 = vsel %vm1082, %v2612, -inf
      %2623 = vmax.xlane.f32.xlu0 %v2622
      %v2624 = vpop.xlane.xlu0 %2623
      %v2625 = vsub.f32 %v2609, %v2615
      %v2626 = vsub.f32 %v2610, %v2618
      %v2627 = vsub.f32 %v2611, %v2621
      %v2628 = vsub.f32 %v2612, %v2624
      %v2629 = vmul.f32 %v2625, 1.442695
      %v2630 = vpow.pop %v2629
      %v2631 = vmul.f32 %v2626, 1.442695
      %v2632 = vpow.pop %v2631
      %v2633 = vmul.f32 %v2627, 1.442695
      %v2634 = vpow.pop %v2633
      %v2635 = vmul.f32 %v2628, 1.442695
      %v2636 = vpow.pop %v2635
      %v2637 = vsel %vm1082, %v2630, 0.0
      %2638 = vadd.xlane.f32.xlu0 %v2637
      %v2639 = vpop.xlane.xlu0 %2638
      %v2640 = vsel %vm1082, %v2632, 0.0
      %2641 = vadd.xlane.f32.xlu0 %v2640
      %v2642 = vpop.xlane.xlu0 %2641
      %v2643 = vsel %vm1082, %v2634, 0.0
      %2644 = vadd.xlane.f32.xlu0 %v2643
      %v2645 = vpop.xlane.xlu0 %2644
      %v2646 = vsel %vm1082, %v2636, 0.0
      %2647 = vadd.xlane.f32.xlu0 %v2646
      %v2648 = vpop.xlane.xlu0 %2647
      %v2649 = vrcp.pop %v2639
      %v2650 = vrcp.pop %v2642
      %v2651 = vrcp.pop %v2645
      %v2652 = vrcp.pop %v2648
      %v2653 = vmul.f32 %v2630, %v2649
      %v2654 = vmul.f32 %v2632, %v2650
      %v2655 = vmul.f32 %v2634, %v2651
      %v2656 = vmul.f32 %v2636, %v2652
      %v2657 = vpack.c.bf16 %v2653, %v2653
      %v2658 = vpack.c.bf16 %v2654, %v2654
      %v2659 = vpack.c.bf16 %v2655, %v2655
      %v2660 = vpack.c.bf16 %v2656, %v2656
      %2661 = vrot.lane.b32.xlu0 %v1075, 40
      %v2662 = vpop.permute.xlu0 %2661
      %v2664 = vsel %vm1082, %v2657, 0
      %v2667 = vsel %vm1333, %v2662, 0
      %2669 = vmatprep.subr.bf16.mxu0 0
      %2670 = vmatpush1.bf16.msra.mxu0 %v2667
      %2671 = vmatprep.subr.bf16.mxu0 0
      %2672 = vmatpush1.bf16.msra.mxu0 0
      %2673 = vmatprep.subr.bf16.mxu0 0
      %2674 = vmatpush1.bf16.msra.mxu0 0
      %2675 = vmatprep.subr.bf16.mxu0 0
      %2676 = vmatpush1.bf16.msra.mxu0 0
      %2677 = vmatprep.subr.bf16.mxu0 0
      %2678 = vmatpush1.bf16.msra.mxu0 0
      %2679 = vmatprep.subr.bf16.mxu0 0
      %2680 = vmatpush1.bf16.msra.mxu0 0
      %2681 = vmatprep.subr.bf16.mxu0 0
      %2682 = vmatpush1.bf16.msra.mxu0 0
      %2683 = vmatprep.subr.bf16.mxu0 0
      %2684 = vmatpush1.bf16.msra.mxu0 0
      %2685 = vmatprep.subr.bf16.mxu0 0
      %2686 = vmatpush1.bf16.msra.mxu0 0
      %2687 = vmatprep.subr.bf16.mxu0 0
      %2688 = vmatpush1.bf16.msra.mxu0 0
      %2689 = vmatprep.subr.bf16.mxu0 0
      %2690 = vmatpush1.bf16.msra.mxu0 0
      %2691 = vmatprep.subr.bf16.mxu0 0
      %2692 = vmatpush1.bf16.msra.mxu0 0
      %2693 = vmatprep.subr.bf16.mxu0 0
      %2694 = vmatpush1.bf16.msra.mxu0 0
      %2695 = vmatprep.subr.bf16.mxu0 0
      %2696 = vmatpush1.bf16.msra.mxu0 0
      %2697 = vmatprep.subr.bf16.mxu0 0
      %2698 = vmatpush1.bf16.msra.mxu0 0
      %2699 = vmatprep.subr.bf16.mxu0 0
      %2700 = vmatpush1.bf16.msra.mxu0 0
      %2701 = vmatprep.mubr.bf16.mxu0 0
      %2702 = vmatmul.mubr.bf16.gmra.mrb[0].mxu0 %v2664
      %v2703 = vpop.f32.mrb[0].mxu0
      %v2704 = vadd.f32 0.0, %v2703
      %v2705 = vpop.f32.mrb[0].mxu0
      %v2706 = vpop.f32.mrb[0].mxu0
      %v2707 = vpop.f32.mrb[0].mxu0
      %2708 = vdwg.mxu0
      %2709 = vrot.lane.b32.xlu0 %v1076, 40
      %v2710 = vpop.permute.xlu0 %2709
      %v2712 = vsel %vm1082, %v2658, 0
      %v2715 = vsel %vm1333, %v2710, 0
      %2717 = vmatprep.subr.bf16.mxu0 0
      %2718 = vmatpush1.bf16.msra.mxu0 %v2715
      %2719 = vmatprep.subr.bf16.mxu0 0
      %2720 = vmatpush1.bf16.msra.mxu0 0
      %2721 = vmatprep.subr.bf16.mxu0 0
      %2722 = vmatpush1.bf16.msra.mxu0 0
      %2723 = vmatprep.subr.bf16.mxu0 0
      %2724 = vmatpush1.bf16.msra.mxu0 0
      %2725 = vmatprep.subr.bf16.mxu0 0
      %2726 = vmatpush1.bf16.msra.mxu0 0
      %2727 = vmatprep.subr.bf16.mxu0 0
      %2728 = vmatpush1.bf16.msra.mxu0 0
      %2729 = vmatprep.subr.bf16.mxu0 0
      %2730 = vmatpush1.bf16.msra.mxu0 0
      %2731 = vmatprep.subr.bf16.mxu0 0
      %2732 = vmatpush1.bf16.msra.mxu0 0
      %2733 = vmatprep.subr.bf16.mxu0 0
      %2734 = vmatpush1.bf16.msra.mxu0 0
      %2735 = vmatprep.subr.bf16.mxu0 0
      %2736 = vmatpush1.bf16.msra.mxu0 0
      %2737 = vmatprep.subr.bf16.mxu0 0
      %2738 = vmatpush1.bf16.msra.mxu0 0
      %2739 = vmatprep.subr.bf16.mxu0 0
      %2740 = vmatpush1.bf16.msra.mxu0 0
      %2741 = vmatprep.subr.bf16.mxu0 0
      %2742 = vmatpush1.bf16.msra.mxu0 0
      %2743 = vmatprep.subr.bf16.mxu0 0
      %2744 = vmatpush1.bf16.msra.mxu0 0
      %2745 = vmatprep.subr.bf16.mxu0 0
      %2746 = vmatpush1.bf16.msra.mxu0 0
      %2747 = vmatprep.subr.bf16.mxu0 0
      %2748 = vmatpush1.bf16.msra.mxu0 0
      %2749 = vmatprep.mubr.bf16.mxu0 0
      %2750 = vmatmul.mubr.bf16.gmra.mrb[0].mxu0 %v2712
      %v2751 = vpop.f32.mrb[0].mxu0
      %v2752 = vadd.f32 0.0, %v2751
      %v2753 = vpop.f32.mrb[0].mxu0
      %v2754 = vpop.f32.mrb[0].mxu0
      %v2755 = vpop.f32.mrb[0].mxu0
      %2756 = vdwg.mxu0
      %2757 = vrot.lane.b32.xlu0 %v1077, 40
      %v2758 = vpop.permute.xlu0 %2757
      %v2760 = vsel %vm1082, %v2659, 0
      %v2763 = vsel %vm1333, %v2758, 0
      %2765 = vmatprep.subr.bf16.mxu0 0
      %2766 = vmatpush1.bf16.msra.mxu0 %v2763
      %2767 = vmatprep.subr.bf16.mxu0 0
      %2768 = vmatpush1.bf16.msra.mxu0 0
      %2769 = vmatprep.subr.bf16.mxu0 0
      %2770 = vmatpush1.bf16.msra.mxu0 0
      %2771 = vmatprep.subr.bf16.mxu0 0
      %2772 = vmatpush1.bf16.msra.mxu0 0
      %2773 = vmatprep.subr.bf16.mxu0 0
      %2774 = vmatpush1.bf16.msra.mxu0 0
      %2775 = vmatprep.subr.bf16.mxu0 0
      %2776 = vmatpush1.bf16.msra.mxu0 0
      %2777 = vmatprep.subr.bf16.mxu0 0
      %2778 = vmatpush1.bf16.msra.mxu0 0
      %2779 = vmatprep.subr.bf16.mxu0 0
      %2780 = vmatpush1.bf16.msra.mxu0 0
      %2781 = vmatprep.subr.bf16.mxu0 0
      %2782 = vmatpush1.bf16.msra.mxu0 0
      %2783 = vmatprep.subr.bf16.mxu0 0
      %2784 = vmatpush1.bf16.msra.mxu0 0
      %2785 = vmatprep.subr.bf16.mxu0 0
      %2786 = vmatpush1.bf16.msra.mxu0 0
      %2787 = vmatprep.subr.bf16.mxu0 0
      %2788 = vmatpush1.bf16.msra.mxu0 0
      %2789 = vmatprep.subr.bf16.mxu0 0
      %2790 = vmatpush1.bf16.msra.mxu0 0
      %2791 = vmatprep.subr.bf16.mxu0 0
      %2792 = vmatpush1.bf16.msra.mxu0 0
      %2793 = vmatprep.subr.bf16.mxu0 0
      %2794 = vmatpush1.bf16.msra.mxu0 0
      %2795 = vmatprep.subr.bf16.mxu0 0
      %2796 = vmatpush1.bf16.msra.mxu0 0
      %2797 = vmatprep.mubr.bf16.mxu0 0
      %2798 = vmatmul.mubr.bf16.gmra.mrb[0].mxu0 %v2760
      %v2799 = vpop.f32.mrb[0].mxu0
      %v2800 = vadd.f32 0.0, %v2799
      %v2801 = vpop.f32.mrb[0].mxu0
      %v2802 = vpop.f32.mrb[0].mxu0
      %v2803 = vpop.f32.mrb[0].mxu0
      %2804 = vdwg.mxu0
      %2805 = vrot.lane.b32.xlu0 %v1078, 40
      %v2806 = vpop.permute.xlu0 %2805
      %v2808 = vsel %vm1082, %v2660, 0
      %v2811 = vsel %vm1333, %v2806, 0
      %2813 = vmatprep.subr.bf16.mxu0 0
      %2814 = vmatpush1.bf16.msra.mxu0 %v2811
      %2815 = vmatprep.subr.bf16.mxu0 0
      %2816 = vmatpush1.bf16.msra.mxu0 0
      %2817 = vmatprep.subr.bf16.mxu0 0
      %2818 = vmatpush1.bf16.msra.mxu0 0
      %2819 = vmatprep.subr.bf16.mxu0 0
      %2820 = vmatpush1.bf16.msra.mxu0 0
      %2821 = vmatprep.subr.bf16.mxu0 0
      %2822 = vmatpush1.bf16.msra.mxu0 0
      %2823 = vmatprep.subr.bf16.mxu0 0
      %2824 = vmatpush1.bf16.msra.mxu0 0
      %2825 = vmatprep.subr.bf16.mxu0 0
      %2826 = vmatpush1.bf16.msra.mxu0 0
      %2827 = vmatprep.subr.bf16.mxu0 0
      %2828 = vmatpush1.bf16.msra.mxu0 0
      %2829 = vmatprep.subr.bf16.mxu0 0
      %2830 = vmatpush1.bf16.msra.mxu0 0
      %2831 = vmatprep.subr.bf16.mxu0 0
      %2832 = vmatpush1.bf16.msra.mxu0 0
      %2833 = vmatprep.subr.bf16.mxu0 0
      %2834 = vmatpush1.bf16.msra.mxu0 0
      %2835 = vmatprep.subr.bf16.mxu0 0
      %2836 = vmatpush1.bf16.msra.mxu0 0
      %2837 = vmatprep.subr.bf16.mxu0 0
      %2838 = vmatpush1.bf16.msra.mxu0 0
      %2839 = vmatprep.subr.bf16.mxu0 0
      %2840 = vmatpush1.bf16.msra.mxu0 0
      %2841 = vmatprep.subr.bf16.mxu0 0
      %2842 = vmatpush1.bf16.msra.mxu0 0
      %2843 = vmatprep.subr.bf16.mxu0 0
      %2844 = vmatpush1.bf16.msra.mxu0 0
      %2845 = vmatprep.mubr.bf16.mxu0 0
      %2846 = vmatmul.mubr.bf16.gmra.mrb[0].mxu0 %v2808
      %v2847 = vpop.f32.mrb[0].mxu0
      %v2848 = vadd.f32 0.0, %v2847
      %v2849 = vpop.f32.mrb[0].mxu0
      %v2850 = vpop.f32.mrb[0].mxu0
      %v2851 = vpop.f32.mrb[0].mxu0
      %2852 = vdwg.mxu0
      %2857 = vrot.lane.b32.xlu0 %v1816, 8
      %v2858 = vpop.permute.xlu0 %2857
      %2859 = vrot.lane.b32.xlu0 %v1864, 8
      %v2860 = vpop.permute.xlu0 %2859
      %2861 = vrot.lane.b32.xlu0 %v1912, 8
      %v2862 = vpop.permute.xlu0 %2861
      %2863 = vrot.lane.b32.xlu0 %v1960, 8
      %v2864 = vpop.permute.xlu0 %2863
      %2873 = vrot.lane.b32.xlu0 %v2260, 16
      %v2874 = vpop.permute.xlu0 %2873
      %2875 = vrot.lane.b32.xlu0 %v2308, 16
      %v2876 = vpop.permute.xlu0 %2875
      %2877 = vrot.lane.b32.xlu0 %v2356, 16
      %v2878 = vpop.permute.xlu0 %2877
      %2879 = vrot.lane.b32.xlu0 %v2404, 16
      %v2880 = vpop.permute.xlu0 %2879
      %2889 = vrot.lane.b32.xlu0 %v2704, 24
      %v2890 = vpop.permute.xlu0 %2889
      %2891 = vrot.lane.b32.xlu0 %v2752, 24
      %v2892 = vpop.permute.xlu0 %2891
      %2893 = vrot.lane.b32.xlu0 %v2800, 24
      %v2894 = vpop.permute.xlu0 %2893
      %2895 = vrot.lane.b32.xlu0 %v2848, 24
      %v2896 = vpop.permute.xlu0 %2895
      %v2901 = vsel %vm1082, %v1372, %v2858
      %v2902 = vsel %vm1082, %v1420, %v2860
      %v2903 = vsel %vm1082, %v1468, %v2862
      %v2904 = vsel %vm1082, %v1516, %v2864
      %vm2905 = vcmask 130048
      %v2906 = vsel %vm2905, %v2901, %v2874
      %v2907 = vsel %vm2905, %v2902, %v2876
      %v2908 = vsel %vm2905, %v2903, %v2878
      %v2909 = vsel %vm2905, %v2904, %v2880
      %vm2910 = vcmask 195584
      %v2911 = vsel %vm2910, %v2906, %v2890
      %v2912 = vsel %vm2910, %v2907, %v2892
      %v2913 = vsel %vm2910, %v2908, %v2894
      %v2914 = vsel %vm2910, %v2909, %v2896
      %v2915 = vld [vmem:[%s939] sm:$0xf]
      %v2916 = vld [vmem:[%s939 + $0x4] sm:$0xf]
      %v2917 = vld [vmem:[%s939 + $0x8] sm:$0xf]
      %v2918 = vld [vmem:[%s939 + $0xc] sm:$0xf]
      %v2919 = vld [vmem:[%s942] sm:$0x1]
      %v2920 = vpack.c.bf16 %v2912, %v2911
      %v2921 = vpack.c.bf16 %v2914, %v2913
      %v2923 = vlaneseq
      %v2924 = vshrl.u32 %v2923, 7
      %v2925 = vsub.s32 0, %v2924
      %v2926 = vrot.slane %v2919, %v2925
      %v2932 = vunpack.c.l.b16 %v2915
      %v2933 = vunpack.c.l.b16 %v2916
      %v2934 = vunpack.c.l.b16 %v2917
      %v2935 = vunpack.c.l.b16 %v2918
      %v2936 = vpack.c.b16 %v2933, %v2932
      %v2937 = vpack.c.b16 %v2935, %v2934
      %v2941 = vsel %vm1019, %v2920, 0
      %v2944 = vsel %vm1019, %v2921, 0
      %2946 = vmatprep.subr.bf16.mxu0 0
      %2947 = vmatpush1.bf16.msra.mxu0 %v2936
      %2948 = vmatprep.subr.bf16.mxu0 0
      %2949 = vmatpush1.bf16.msra.mxu0 %v2937
      %2950 = vmatprep.subr.bf16.mxu0 0
      %2951 = vmatpush1.bf16.msra.mxu0 0
      %2952 = vmatprep.subr.bf16.mxu0 0
      %2953 = vmatpush1.bf16.msra.mxu0 0
      %2954 = vmatprep.subr.bf16.mxu0 0
      %2955 = vmatpush1.bf16.msra.mxu0 0
      %2956 = vmatprep.subr.bf16.mxu0 0
      %2957 = vmatpush1.bf16.msra.mxu0 0
      %2958 = vmatprep.subr.bf16.mxu0 0
      %2959 = vmatpush1.bf16.msra.mxu0 0
      %2960 = vmatprep.subr.bf16.mxu0 0
      %2961 = vmatpush1.bf16.msra.mxu0 0
      %2962 = vmatprep.subr.bf16.mxu0 0
      %2963 = vmatpush1.bf16.msra.mxu0 0
      %2964 = vmatprep.subr.bf16.mxu0 0
      %2965 = vmatpush1.bf16.msra.mxu0 0
      %2966 = vmatprep.subr.bf16.mxu0 0
      %2967 = vmatpush1.bf16.msra.mxu0 0
      %2968 = vmatprep.subr.bf16.mxu0 0
      %2969 = vmatpush1.bf16.msra.mxu0 0
      %2970 = vmatprep.subr.bf16.mxu0 0
      %2971 = vmatpush1.bf16.msra.mxu0 0
      %2972 = vmatprep.subr.bf16.mxu0 0
      %2973 = vmatpush1.bf16.msra.mxu0 0
      %2974 = vmatprep.subr.bf16.mxu0 0
      %2975 = vmatpush1.bf16.msra.mxu0 0
      %2976 = vmatprep.subr.bf16.mxu0 0
      %2977 = vmatpush1.bf16.msra.mxu0 0
      %2978 = vmatprep.mubr.bf16.mxu0 0
      %2979 = vmatmul.mubr.bf16.gmra.mrb[0].mxu0 %v2941
      %v2980 = vpop.f32.mrb[0].mxu0
      %v2981 = vadd.f32 %v2926, %v2980
      %v2982 = vpop.f32.mrb[0].mxu0
      %v2983 = vpop.f32.mrb[0].mxu0
      %v2984 = vadd.f32 %v2926, %v2983
      %v2985 = vpop.f32.mrb[0].mxu0
      %2986 = vmatprep.mubr.bf16.mxu0 0
      %2987 = vmatmul.mubr.bf16.gmra.mrb[0].mxu0 %v2944
      %v2988 = vpop.f32.mrb[0].mxu0
      %v2989 = vadd.f32 %v2926, %v2988
      %v2990 = vpop.f32.mrb[0].mxu0
      %v2991 = vpop.f32.mrb[0].mxu0
      %v2992 = vadd.f32 %v2926, %v2991
      %v2993 = vpop.f32.mrb[0].mxu0
      %2994 = vdwg.mxu0
      %v2995 = vadd.f32 %v990, %v2981
      %v2996 = vadd.f32 %v991, %v2984
      %v2997 = vadd.f32 %v992, %v2989
      %v2998 = vadd.f32 %v993, %v2992
      %v2999 = vld [vmem:[%s945] sm:$0x1]
      %v3000 = vld [vmem:[%s948] sm:$0x1]
      %v3001 = vsel %vm1019, %v2995, 0.0
      %3002 = vadd.xlane.f32.xlu0 %v3001
      %v3003 = vpop.xlane.xlu0 %3002
      %v3004 = vsel %vm1019, %v2996, 0.0
      %3005 = vadd.xlane.f32.xlu0 %v3004
      %v3006 = vpop.xlane.xlu0 %3005
      %v3007 = vsel %vm1019, %v2997, 0.0
      %3008 = vadd.xlane.f32.xlu0 %v3007
      %v3009 = vpop.xlane.xlu0 %3008
      %v3010 = vsel %vm1019, %v2998, 0.0
      %3011 = vadd.xlane.f32.xlu0 %v3010
      %v3012 = vpop.xlane.xlu0 %3011
      %v3013 = vrcp.pop 32.0
      %v3014 = vmul.f32 %v3003, %v3013
      %v3015 = vmul.f32 %v3006, %v3013
      %v3016 = vmul.f32 %v3009, %v3013
      %v3017 = vmul.f32 %v3012, %v3013
      %v3018 = vsub.f32 %v2995, %v3014
      %v3019 = vsub.f32 %v2996, %v3015
      %v3020 = vsub.f32 %v2997, %v3016
      %v3021 = vsub.f32 %v2998, %v3017
      %v3022 = vmul.f32 %v3018, %v3018
      %v3023 = vmul.f32 %v3019, %v3019
      %v3024 = vmul.f32 %v3020, %v3020
      %v3025 = vmul.f32 %v3021, %v3021
      %v3026 = vsel %vm1019, %v3022, 0.0
      %3027 = vadd.xlane.f32.xlu0 %v3026
      %v3028 = vpop.xlane.xlu0 %3027
      %v3029 = vsel %vm1019, %v3023, 0.0
      %3030 = vadd.xlane.f32.xlu0 %v3029
      %v3031 = vpop.xlane.xlu0 %3030
      %v3032 = vsel %vm1019, %v3024, 0.0
      %3033 = vadd.xlane.f32.xlu0 %v3032
      %v3034 = vpop.xlane.xlu0 %3033
      %v3035 = vsel %vm1019, %v3025, 0.0
      %3036 = vadd.xlane.f32.xlu0 %v3035
      %v3037 = vpop.xlane.xlu0 %3036
      %v3038 = vmul.f32 %v3028, %v3013
      %v3039 = vmul.f32 %v3031, %v3013
      %v3040 = vmul.f32 %v3034, %v3013
      %v3041 = vmul.f32 %v3037, %v3013
      %v3042 = vadd.f32 %v3038, 1e-05
      %v3043 = vadd.f32 %v3039, 1e-05
      %v3044 = vadd.f32 %v3040, 1e-05
      %v3045 = vadd.f32 %v3041, 1e-05
      %v3046 = vrsqrt.pop %v3042
      %v3047 = vrsqrt.pop %v3043
      %v3048 = vrsqrt.pop %v3044
      %v3049 = vrsqrt.pop %v3045
      %v3050 = vmul.f32 %v3018, %v3046
      %v3051 = vmul.f32 %v3019, %v3047
      %v3052 = vmul.f32 %v3020, %v3048
      %v3053 = vmul.f32 %v3021, %v3049
      %v3055 = vlaneseq
      %v3056 = vshrl.u32 %v3055, 7
      %v3057 = vsub.s32 0, %v3056
      %v3058 = vrot.slane %v2999, %v3057
      %v3060 = vmul.f32 %v3050, %v3058
      %v3061 = vmul.f32 %v3051, %v3058
      %v3062 = vmul.f32 %v3052, %v3058
      %v3063 = vmul.f32 %v3053, %v3058
      %v3065 = vlaneseq
      %v3066 = vshrl.u32 %v3065, 7
      %v3067 = vsub.s32 0, %v3066
      %v3068 = vrot.slane %v3000, %v3067
      %v3070 = vadd.f32 %v3060, %v3068
      %v3071 = vadd.f32 %v3061, %v3068
      %v3072 = vadd.f32 %v3062, %v3068
      %v3073 = vadd.f32 %v3063, %v3068
      %v3074 = vld [vmem:[%s953] sm:$0xf]
      %v3075 = vld [vmem:[%s953 + $0x4] sm:$0xf]
      %v3076 = vld [vmem:[%s953 + $0x8] sm:$0xf]
      %v3077 = vld [vmem:[%s953 + $0xc] sm:$0xf]
      %v3078 = vld [vmem:[%s956] sm:$0x1]
      %v3079 = vpack.c.bf16 %v3071, %v3070
      %v3080 = vpack.c.bf16 %v3073, %v3072
      %v3082 = vlaneseq
      %v3083 = vshrl.u32 %v3082, 7
      %v3084 = vsub.s32 0, %v3083
      %v3085 = vrot.slane %v3078, %v3084
      %v3091 = vunpack.c.l.b16 %v3074
      %v3092 = vunpack.c.l.b16 %v3075
      %v3093 = vunpack.c.l.b16 %v3076
      %v3094 = vunpack.c.l.b16 %v3077
      %v3095 = vpack.c.b16 %v3092, %v3091
      %v3096 = vpack.c.b16 %v3094, %v3093
      %v3100 = vsel %vm1019, %v3079, 0
      %v3103 = vsel %vm1019, %v3080, 0
      %3105 = vmatprep.subr.bf16.mxu0 0
      %3106 = vmatpush1.bf16.msra.mxu0 %v3095
      %3107 = vmatprep.subr.bf16.mxu0 0
      %3108 = vmatpush1.bf16.msra.mxu0 %v3096
      %3109 = vmatprep.subr.bf16.mxu0 0
      %3110 = vmatpush1.bf16.msra.mxu0 0
      %3111 = vmatprep.subr.bf16.mxu0 0
      %3112 = vmatpush1.bf16.msra.mxu0 0
      %3113 = vmatprep.subr.bf16.mxu0 0
      %3114 = vmatpush1.bf16.msra.mxu0 0
      %3115 = vmatprep.subr.bf16.mxu0 0
      %3116 = vmatpush1.bf16.msra.mxu0 0
      %3117 = vmatprep.subr.bf16.mxu0 0
      %3118 = vmatpush1.bf16.msra.mxu0 0
      %3119 = vmatprep.subr.bf16.mxu0 0
      %3120 = vmatpush1.bf16.msra.mxu0 0
      %3121 = vmatprep.subr.bf16.mxu0 0
      %3122 = vmatpush1.bf16.msra.mxu0 0
      %3123 = vmatprep.subr.bf16.mxu0 0
      %3124 = vmatpush1.bf16.msra.mxu0 0
      %3125 = vmatprep.subr.bf16.mxu0 0
      %3126 = vmatpush1.bf16.msra.mxu0 0
      %3127 = vmatprep.subr.bf16.mxu0 0
      %3128 = vmatpush1.bf16.msra.mxu0 0
      %3129 = vmatprep.subr.bf16.mxu0 0
      %3130 = vmatpush1.bf16.msra.mxu0 0
      %3131 = vmatprep.subr.bf16.mxu0 0
      %3132 = vmatpush1.bf16.msra.mxu0 0
      %3133 = vmatprep.subr.bf16.mxu0 0
      %3134 = vmatpush1.bf16.msra.mxu0 0
      %3135 = vmatprep.subr.bf16.mxu0 0
      %3136 = vmatpush1.bf16.msra.mxu0 0
      %3137 = vmatprep.mubr.bf16.mxu0 0
      %3138 = vmatmul.mubr.bf16.gmra.mrb[0].mxu0 %v3100
      %v3139 = vpop.f32.mrb[0].mxu0
      %v3140 = vadd.f32 %v3085, %v3139
      %v3141 = vpop.f32.mrb[0].mxu0
      %v3142 = vpop.f32.mrb[0].mxu0
      %v3143 = vadd.f32 %v3085, %v3142
      %v3144 = vpop.f32.mrb[0].mxu0
      %3145 = vmatprep.mubr.bf16.mxu0 0
      %3146 = vmatmul.mubr.bf16.gmra.mrb[0].mxu0 %v3103
      %v3147 = vpop.f32.mrb[0].mxu0
      %v3148 = vadd.f32 %v3085, %v3147
      %v3149 = vpop.f32.mrb[0].mxu0
      %v3150 = vpop.f32.mrb[0].mxu0
      %v3151 = vadd.f32 %v3085, %v3150
      %v3152 = vpop.f32.mrb[0].mxu0
      %3153 = vdwg.mxu0
      %v3154 = vmax.f32 %v3140, 0.0
      %v3155 = vmax.f32 %v3143, 0.0
      %v3156 = vmax.f32 %v3148, 0.0
      %v3157 = vmax.f32 %v3151, 0.0
      %v3158 = vld [vmem:[%s961] sm:$0xf]
      %v3159 = vld [vmem:[%s961 + $0x4] sm:$0xf]
      %v3160 = vld [vmem:[%s961 + $0x8] sm:$0xf]
      %v3161 = vld [vmem:[%s961 + $0xc] sm:$0xf]
      %v3162 = vld [vmem:[%s961 + $0x10] sm:$0xf]
      %v3163 = vld [vmem:[%s961 + $0x14] sm:$0xf]
      %v3164 = vld [vmem:[%s961 + $0x18] sm:$0xf]
      %v3165 = vld [vmem:[%s961 + $0x1c] sm:$0xf]
      %v3166 = vld [vmem:[%s964] sm:$0x1]
      %v3167 = vpack.c.bf16 %v3155, %v3154
      %v3168 = vpack.c.bf16 %v3157, %v3156
      %v3170 = vlaneseq
      %v3171 = vshrl.u32 %v3170, 7
      %v3172 = vsub.s32 0, %v3171
      %v3173 = vrot.slane %v3166, %v3172
      %v3183 = vunpack.c.l.b16 %v3158
      %v3184 = vunpack.c.l.b16 %v3159
      %v3185 = vunpack.c.l.b16 %v3160
      %v3186 = vunpack.c.l.b16 %v3161
      %v3187 = vunpack.c.l.b16 %v3162
      %v3188 = vunpack.c.l.b16 %v3163
      %v3189 = vunpack.c.l.b16 %v3164
      %v3190 = vunpack.c.l.b16 %v3165
      %v3191 = vpack.c.b16 %v3184, %v3183
      %v3192 = vpack.c.b16 %v3186, %v3185
      %v3193 = vpack.c.b16 %v3188, %v3187
      %v3194 = vpack.c.b16 %v3190, %v3189
      %vm3199 = vcmask 523264
      %v3201 = vsel %vm3199, %v3167, 0
      %v3204 = vsel %vm3199, %v3168, 0
      %3206 = vmatprep.subr.bf16.mxu0 0
      %3207 = vmatpush1.bf16.msra.mxu0 %v3191
      %3208 = vmatprep.subr.bf16.mxu0 0
      %3209 = vmatpush1.bf16.msra.mxu0 %v3192
      %3210 = vmatprep.subr.bf16.mxu0 0
      %3211 = vmatpush1.bf16.msra.mxu0 %v3193
      %3212 = vmatprep.subr.bf16.mxu0 0
      %3213 = vmatpush1.bf16.msra.mxu0 %v3194
      %3214 = vmatprep.subr.bf16.mxu0 0
      %3215 = vmatpush1.bf16.msra.mxu0 0
      %3216 = vmatprep.subr.bf16.mxu0 0
      %3217 = vmatpush1.bf16.msra.mxu0 0
      %3218 = vmatprep.subr.bf16.mxu0 0
      %3219 = vmatpush1.bf16.msra.mxu0 0
      %3220 = vmatprep.subr.bf16.mxu0 0
      %3221 = vmatpush1.bf16.msra.mxu0 0
      %3222 = vmatprep.subr.bf16.mxu0 0
      %3223 = vmatpush1.bf16.msra.mxu0 0
      %3224 = vmatprep.subr.bf16.mxu0 0
      %3225 = vmatpush1.bf16.msra.mxu0 0
      %3226 = vmatprep.subr.bf16.mxu0 0
      %3227 = vmatpush1.bf16.msra.mxu0 0
      %3228 = vmatprep.subr.bf16.mxu0 0
      %3229 = vmatpush1.bf16.msra.mxu0 0
      %3230 = vmatprep.subr.bf16.mxu0 0
      %3231 = vmatpush1.bf16.msra.mxu0 0
      %3232 = vmatprep.subr.bf16.mxu0 0
      %3233 = vmatpush1.bf16.msra.mxu0 0
      %3234 = vmatprep.subr.bf16.mxu0 0
      %3235 = vmatpush1.bf16.msra.mxu0 0
      %3236 = vmatprep.subr.bf16.mxu0 0
      %3237 = vmatpush1.bf16.msra.mxu0 0
      %3238 = vmatprep.mubr.bf16.mxu0 0
      %3239 = vmatmul.mubr.bf16.gmra.mrb[0].mxu0 %v3201
      %v3240 = vpop.f32.mrb[0].mxu0
      %v3241 = vadd.f32 %v3173, %v3240
      %v3242 = vpop.f32.mrb[0].mxu0
      %v3243 = vpop.f32.mrb[0].mxu0
      %v3244 = vadd.f32 %v3173, %v3243
      %v3245 = vpop.f32.mrb[0].mxu0
      %3246 = vmatprep.mubr.bf16.mxu0 0
      %3247 = vmatmul.mubr.bf16.gmra.mrb[0].mxu0 %v3204
      %v3248 = vpop.f32.mrb[0].mxu0
      %v3249 = vadd.f32 %v3173, %v3248
      %v3250 = vpop.f32.mrb[0].mxu0
      %v3251 = vpop.f32.mrb[0].mxu0
      %v3252 = vadd.f32 %v3173, %v3251
      %v3253 = vpop.f32.mrb[0].mxu0
      %3254 = vdwg.mxu0
      %v3255 = vadd.f32 %v3070, %v3241
      %v3256 = vadd.f32 %v3071, %v3244
      %v3257 = vadd.f32 %v3072, %v3249
      %v3258 = vadd.f32 %v3073, %v3252
      %v3259 = vld [vmem:[%s967] sm:$0x1]
      %v3260 = vld [vmem:[%s970] sm:$0x1]
      %v3261 = vsel %vm1019, %v3255, 0.0
      %3262 = vadd.xlane.f32.xlu0 %v3261
      %v3263 = vpop.xlane.xlu0 %3262
      %v3264 = vsel %vm1019, %v3256, 0.0
      %3265 = vadd.xlane.f32.xlu0 %v3264
      %v3266 = vpop.xlane.xlu0 %3265
      %v3267 = vsel %vm1019, %v3257, 0.0
      %3268 = vadd.xlane.f32.xlu0 %v3267
      %v3269 = vpop.xlane.xlu0 %3268
      %v3270 = vsel %vm1019, %v3258, 0.0
      %3271 = vadd.xlane.f32.xlu0 %v3270
      %v3272 = vpop.xlane.xlu0 %3271
      %v3273 = vmul.f32 %v3263, %v3013
      %v3274 = vmul.f32 %v3266, %v3013
      %v3275 = vmul.f32 %v3269, %v3013
      %v3276 = vmul.f32 %v3272, %v3013
      %v3277 = vsub.f32 %v3255, %v3273
      %v3278 = vsub.f32 %v3256, %v3274
      %v3279 = vsub.f32 %v3257, %v3275
      %v3280 = vsub.f32 %v3258, %v3276
      %v3281 = vmul.f32 %v3277, %v3277
      %v3282 = vmul.f32 %v3278, %v3278
      %v3283 = vmul.f32 %v3279, %v3279
      %v3284 = vmul.f32 %v3280, %v3280
      %v3285 = vsel %vm1019, %v3281, 0.0
      %3286 = vadd.xlane.f32.xlu0 %v3285
      %v3287 = vpop.xlane.xlu0 %3286
      %v3288 = vsel %vm1019, %v3282, 0.0
      %3289 = vadd.xlane.f32.xlu0 %v3288
      %v3290 = vpop.xlane.xlu0 %3289
      %v3291 = vsel %vm1019, %v3283, 0.0
      %3292 = vadd.xlane.f32.xlu0 %v3291
      %v3293 = vpop.xlane.xlu0 %3292
      %v3294 = vsel %vm1019, %v3284, 0.0
      %3295 = vadd.xlane.f32.xlu0 %v3294
      %v3296 = vpop.xlane.xlu0 %3295
      %v3297 = vmul.f32 %v3287, %v3013
      %v3298 = vmul.f32 %v3290, %v3013
      %v3299 = vmul.f32 %v3293, %v3013
      %v3300 = vmul.f32 %v3296, %v3013
      %v3301 = vadd.f32 %v3297, 1e-05
      %v3302 = vadd.f32 %v3298, 1e-05
      %v3303 = vadd.f32 %v3299, 1e-05
      %v3304 = vadd.f32 %v3300, 1e-05
      %v3305 = vrsqrt.pop %v3301
      %v3306 = vrsqrt.pop %v3302
      %v3307 = vrsqrt.pop %v3303
      %v3308 = vrsqrt.pop %v3304
      %v3309 = vmul.f32 %v3277, %v3305
      %v3310 = vmul.f32 %v3278, %v3306
      %v3311 = vmul.f32 %v3279, %v3307
      %v3312 = vmul.f32 %v3280, %v3308
      %v3314 = vlaneseq
      %v3315 = vshrl.u32 %v3314, 7
      %v3316 = vsub.s32 0, %v3315
      %v3317 = vrot.slane %v3259, %v3316
      %v3319 = vmul.f32 %v3309, %v3317
      %v3320 = vmul.f32 %v3310, %v3317
      %v3321 = vmul.f32 %v3311, %v3317
      %v3322 = vmul.f32 %v3312, %v3317
      %v3324 = vlaneseq
      %v3325 = vshrl.u32 %v3324, 7
      %v3326 = vsub.s32 0, %v3325
      %v3327 = vrot.slane %v3260, %v3326
      %v3329 = vadd.f32 %v3319, %v3327
      %v3330 = vadd.f32 %v3320, %v3327
      %v3331 = vadd.f32 %v3321, %v3327
      %v3332 = vadd.f32 %v3322, %v3327
      %3333 = vst.msk [vmem:[#allocation2] sm:$0xff] %vm1019, %v3329
      %3334 = vst.msk [vmem:[#allocation2 + $0x8] sm:$0xff] %vm1019, %v3330
      %3335 = vst.msk [vmem:[#allocation2 + $0x10] sm:$0xff] %vm1019, %v3331
      %3336 = vst.msk [vmem:[#allocation2 + $0x18] sm:$0xff] %vm1019, %v3332
      %p3337 = scmp.eq.s32.totalorder %s47, 1
      // Predicated region
      $region125: #{market_transformer_forward.1} parent=119 // pred_check
        %p3338 = pneg %p3337
      $region126: #{market_transformer_forward.1} parent=119 // pred_check_branch
        %3340 = sbr.rel (%p3338) target = $region128
      $region127: #{market_transformer_forward.1} parent=119 // pred_region
        %v3341 = vsel %vm1019, %v3329, 0.0
        %v3342 = vrot.slane %v3341, 4
        %v3343 = vadd.f32 %v3341, %v3342
        %v3344 = vrot.slane %v3343, 2
        %v3345 = vadd.f32 %v3343, %v3344
        %v3346 = vrot.slane %v3345, 1
        %v3347 = vadd.f32 %v3345, %v3346
        %v3348 = vsel %vm1019, %v3330, 0.0
        %v3349 = vrot.slane %v3348, 4
        %v3350 = vadd.f32 %v3348, %v3349
        %v3351 = vrot.slane %v3350, 2
        %v3352 = vadd.f32 %v3350, %v3351
        %v3353 = vrot.slane %v3352, 1
        %v3354 = vadd.f32 %v3352, %v3353
        %v3355 = vsel %vm1019, %v3331, 0.0
        %v3356 = vrot.slane %v3355, 4
        %v3357 = vadd.f32 %v3355, %v3356
        %v3358 = vrot.slane %v3357, 2
        %v3359 = vadd.f32 %v3357, %v3358
        %v3360 = vrot.slane %v3359, 1
        %v3361 = vadd.f32 %v3359, %v3360
        %v3362 = vsel %vm1019, %v3332, 0.0
        %v3363 = vrot.slane %v3362, 4
        %v3364 = vadd.f32 %v3362, %v3363
        %v3365 = vrot.slane %v3364, 2
        %v3366 = vadd.f32 %v3364, %v3365
        %v3367 = vrot.slane %v3366, 1
        %v3368 = vadd.f32 %v3366, %v3367
        %v3369 = vrcp.pop 8.0
        %v3370 = vmul.f32 %v3347, %v3369
        %v3371 = vmul.f32 %v3354, %v3369
        %v3372 = vmul.f32 %v3361, %v3369
        %v3373 = vmul.f32 %v3368, %v3369
        %v3374 = vld [vmem:[%s13] sm:$0xf]
        %v3375 = vld [vmem:[%s13 + $0x4] sm:$0xf]
        %v3376 = vld [vmem:[%s13 + $0x8] sm:$0xf]
        %v3377 = vld [vmem:[%s13 + $0xc] sm:$0xf]
        %v3378 = vld [vmem:[%s14] sm:$0x1]
        %v3379 = vpack.c.bf16 %v3370, %v3370
        %v3380 = vpack.c.bf16 %v3371, %v3371
        %v3381 = vpack.c.bf16 %v3372, %v3372
        %v3382 = vpack.c.bf16 %v3373, %v3373
        %v3384 = vlaneseq
        %v3385 = vshrl.u32 %v3384, 7
        %v3386 = vsub.s32 0, %v3385
        %v3387 = vrot.slane %v3378, %v3386
        %v3393 = vunpack.c.l.b16 %v3379
        %v3394 = vunpack.c.l.b16 %v3380
        %v3395 = vunpack.c.l.b16 %v3381
        %v3396 = vunpack.c.l.b16 %v3382
        %vm3397 = vcmask 1041409
        %v3398 = vsel %vm3397, %v3394, %v3393
        %vm3399 = vcmask 1042434
        %v3400 = vsel %vm3399, %v3395, %v3398
        %vm3401 = vcmask 1043459
        %v3402 = vsel %vm3401, %v3396, %v3400
        %v3403 = vpack.c.b16 %v3402, %v3402
        %v3408 = vunpack.c.l.b16 %v3374
        %v3409 = vunpack.c.l.b16 %v3375
        %v3410 = vunpack.c.l.b16 %v3376
        %v3411 = vunpack.c.l.b16 %v3377
        %v3412 = vpack.c.b16 %v3409, %v3408
        %v3413 = vpack.c.b16 %v3411, %v3410
        %v3417 = vsel %vm1019, %v3403, 0
        %3419 = vmatprep.subr.bf16.mxu0 0
        %3420 = vmatpush1.bf16.msra.mxu0 %v3412
        %3421 = vmatprep.subr.bf16.mxu0 0
        %3422 = vmatpush1.bf16.msra.mxu0 %v3413
        %3423 = vmatprep.subr.bf16.mxu0 0
        %3424 = vmatpush1.bf16.msra.mxu0 0
        %3425 = vmatprep.subr.bf16.mxu0 0
        %3426 = vmatpush1.bf16.msra.mxu0 0
        %3427 = vmatprep.subr.bf16.mxu0 0
        %3428 = vmatpush1.bf16.msra.mxu0 0
        %3429 = vmatprep.subr.bf16.mxu0 0
        %3430 = vmatpush1.bf16.msra.mxu0 0
        %3431 = vmatprep.subr.bf16.mxu0 0
        %3432 = vmatpush1.bf16.msra.mxu0 0
        %3433 = vmatprep.subr.bf16.mxu0 0
        %3434 = vmatpush1.bf16.msra.mxu0 0
        %3435 = vmatprep.subr.bf16.mxu0 0
        %3436 = vmatpush1.bf16.msra.mxu0 0
        %3437 = vmatprep.subr.bf16.mxu0 0
        %3438 = vmatpush1.bf16.msra.mxu0 0
        %3439 = vmatprep.subr.bf16.mxu0 0
        %3440 = vmatpush1.bf16.msra.mxu0 0
        %3441 = vmatprep.subr.bf16.mxu0 0
        %3442 = vmatpush1.bf16.msra.mxu0 0
        %3443 = vmatprep.subr.bf16.mxu0 0
        %3444 = vmatpush1.bf16.msra.mxu0 0
        %3445 = vmatprep.subr.bf16.mxu0 0
        %3446 = vmatpush1.bf16.msra.mxu0 0
        %3447 = vmatprep.subr.bf16.mxu0 0
        %3448 = vmatpush1.bf16.msra.mxu0 0
        %3449 = vmatprep.subr.bf16.mxu0 0
        %3450 = vmatpush1.bf16.msra.mxu0 0
        %3451 = vmatprep.mubr.bf16.mxu0 0
        %3452 = vmatmul.mubr.bf16.gmra.mrb[0].mxu0 %v3417
        %v3453 = vpop.f32.mrb[0].mxu0
        %v3454 = vadd.f32 %v3387, %v3453
        %v3455 = vpop.f32.mrb[0].mxu0
        %v3456 = vpop.f32.mrb[0].mxu0
        %v3457 = vpop.f32.mrb[0].mxu0
        %3458 = vdwg.mxu0
        %v3459 = vmax.f32 %v3454, 0.0
        %v3460 = vld [vmem:[%s15] sm:$0xf]
        %v3461 = vld [vmem:[%s15 + $0x4] sm:$0xf]
        %v3462 = vld [vmem:[#allocation3] sm:$0x1]
        %v3463 = vpack.c.bf16 %v3459, %v3459
        %v3465 = vlaneseq
        %v3466 = vshrl.u32 %v3465, 7
        %v3467 = vsub.s32 0, %v3466
        %v3468 = vrot.slane %v3462, %v3467
        %v3472 = vunpack.c.l.b16 %v3460
        %v3473 = vunpack.c.l.b16 %v3461
        %v3474 = vpack.c.b16 %v3473, %v3472
        %v3477 = vsel %vm2905, %v3463, 0
        %3479 = vmatprep.subr.bf16.mxu0 0
        %3480 = vmatpush1.bf16.msra.mxu0 %v3474
        %3481 = vmatprep.subr.bf16.mxu0 0
        %3482 = vmatpush1.bf16.msra.mxu0 0
        %3483 = vmatprep.subr.bf16.mxu0 0
        %3484 = vmatpush1.bf16.msra.mxu0 0
        %3485 = vmatprep.subr.bf16.mxu0 0
        %3486 = vmatpush1.bf16.msra.mxu0 0
        %3487 = vmatprep.subr.bf16.mxu0 0
        %3488 = vmatpush1.bf16.msra.mxu0 0
        %3489 = vmatprep.subr.bf16.mxu0 0
        %3490 = vmatpush1.bf16.msra.mxu0 0
        %3491 = vmatprep.subr.bf16.mxu0 0
        %3492 = vmatpush1.bf16.msra.mxu0 0
        %3493 = vmatprep.subr.bf16.mxu0 0
        %3494 = vmatpush1.bf16.msra.mxu0 0
        %3495 = vmatprep.subr.bf16.mxu0 0
        %3496 = vmatpush1.bf16.msra.mxu0 0
        %3497 = vmatprep.subr.bf16.mxu0 0
        %3498 = vmatpush1.bf16.msra.mxu0 0
        %3499 = vmatprep.subr.bf16.mxu0 0
        %3500 = vmatpush1.bf16.msra.mxu0 0
        %3501 = vmatprep.subr.bf16.mxu0 0
        %3502 = vmatpush1.bf16.msra.mxu0 0
        %3503 = vmatprep.subr.bf16.mxu0 0
        %3504 = vmatpush1.bf16.msra.mxu0 0
        %3505 = vmatprep.subr.bf16.mxu0 0
        %3506 = vmatpush1.bf16.msra.mxu0 0
        %3507 = vmatprep.subr.bf16.mxu0 0
        %3508 = vmatpush1.bf16.msra.mxu0 0
        %3509 = vmatprep.subr.bf16.mxu0 0
        %3510 = vmatpush1.bf16.msra.mxu0 0
        %3511 = vmatprep.mubr.bf16.mxu0 0
        %3512 = vmatmul.mubr.bf16.gmra.mrb[0].mxu0 %v3477
        %v3513 = vpop.f32.mrb[0].mxu0
        %v3514 = vadd.f32 %v3468, %v3513
        %v3515 = vpop.f32.mrb[0].mxu0
        %v3516 = vpop.f32.mrb[0].mxu0
        %v3517 = vpop.f32.mrb[0].mxu0
        %3518 = vdwg.mxu0
        %v3519 = vld [vmem:[%s17] sm:$0xf]
        %v3520 = vld [vmem:[%s17 + $0x4] sm:$0xf]
        %v3521 = vld [vmem:[%s17 + $0x8] sm:$0xf]
        %v3522 = vld [vmem:[%s17 + $0xc] sm:$0xf]
        %v3523 = vld [vmem:[%s18] sm:$0x1]
        %v3525 = vlaneseq
        %v3526 = vshrl.u32 %v3525, 7
        %v3527 = vsub.s32 0, %v3526
        %v3528 = vrot.slane %v3523, %v3527
        %v3534 = vunpack.c.l.b16 %v3519
        %v3535 = vunpack.c.l.b16 %v3520
        %v3536 = vunpack.c.l.b16 %v3521
        %v3537 = vunpack.c.l.b16 %v3522
        %v3538 = vpack.c.b16 %v3535, %v3534
        %v3539 = vpack.c.b16 %v3537, %v3536
        %3542 = vmatprep.subr.bf16.mxu0 0
        %3543 = vmatpush1.bf16.msra.mxu0 %v3538
        %3544 = vmatprep.subr.bf16.mxu0 0
        %3545 = vmatpush1.bf16.msra.mxu0 %v3539
        %3546 = vmatprep.subr.bf16.mxu0 0
        %3547 = vmatpush1.bf16.msra.mxu0 0
        %3548 = vmatprep.subr.bf16.mxu0 0
        %3549 = vmatpush1.bf16.msra.mxu0 0
        %3550 = vmatprep.subr.bf16.mxu0 0
        %3551 = vmatpush1.bf16.msra.mxu0 0
        %3552 = vmatprep.subr.bf16.mxu0 0
        %3553 = vmatpush1.bf16.msra.mxu0 0
        %3554 = vmatprep.subr.bf16.mxu0 0
        %3555 = vmatpush1.bf16.msra.mxu0 0
        %3556 = vmatprep.subr.bf16.mxu0 0
        %3557 = vmatpush1.bf16.msra.mxu0 0
        %3558 = vmatprep.subr.bf16.mxu0 0
        %3559 = vmatpush1.bf16.msra.mxu0 0
        %3560 = vmatprep.subr.bf16.mxu0 0
        %3561 = vmatpush1.bf16.msra.mxu0 0
        %3562 = vmatprep.subr.bf16.mxu0 0
        %3563 = vmatpush1.bf16.msra.mxu0 0
        %3564 = vmatprep.subr.bf16.mxu0 0
        %3565 = vmatpush1.bf16.msra.mxu0 0
        %3566 = vmatprep.subr.bf16.mxu0 0
        %3567 = vmatpush1.bf16.msra.mxu0 0
        %3568 = vmatprep.subr.bf16.mxu0 0
        %3569 = vmatpush1.bf16.msra.mxu0 0
        %3570 = vmatprep.subr.bf16.mxu0 0
        %3571 = vmatpush1.bf16.msra.mxu0 0
        %3572 = vmatprep.subr.bf16.mxu0 0
        %3573 = vmatpush1.bf16.msra.mxu0 0
        %3574 = vmatprep.mubr.bf16.mxu0 0
        %3575 = vmatmul.mubr.bf16.gmra.mrb[0].mxu0 %v3417
        %v3576 = vpop.f32.mrb[0].mxu0
        %v3577 = vadd.f32 %v3528, %v3576
        %v3578 = vpop.f32.mrb[0].mxu0
        %v3579 = vpop.f32.mrb[0].mxu0
        %v3580 = vpop.f32.mrb[0].mxu0
        %3581 = vdwg.mxu0
        %v3582 = vmax.f32 %v3577, 0.0
        %v3583 = vld [vmem:[%s19] sm:$0xf]
        %v3584 = vld [vmem:[%s19 + $0x4] sm:$0xf]
        %v3585 = vld [vmem:[#allocation4] sm:$0x1]
        %v3586 = vpack.c.bf16 %v3582, %v3582
        %v3588 = vlaneseq
        %v3589 = vshrl.u32 %v3588, 7
        %v3590 = vsub.s32 0, %v3589
        %v3591 = vrot.slane %v3585, %v3590
        %v3595 = vunpack.c.l.b16 %v3583
        %v3596 = vunpack.c.l.b16 %v3584
        %v3597 = vpack.c.b16 %v3596, %v3595
        %v3600 = vsel %vm2905, %v3586, 0
        %3602 = vmatprep.subr.bf16.mxu0 0
        %3603 = vmatpush1.bf16.msra.mxu0 %v3597
        %3604 = vmatprep.subr.bf16.mxu0 0
        %3605 = vmatpush1.bf16.msra.mxu0 0
        %3606 = vmatprep.subr.bf16.mxu0 0
        %3607 = vmatpush1.bf16.msra.mxu0 0
        %3608 = vmatprep.subr.bf16.mxu0 0
        %3609 = vmatpush1.bf16.msra.mxu0 0
        %3610 = vmatprep.subr.bf16.mxu0 0
        %3611 = vmatpush1.bf16.msra.mxu0 0
        %3612 = vmatprep.subr.bf16.mxu0 0
        %3613 = vmatpush1.bf16.msra.mxu0 0
        %3614 = vmatprep.subr.bf16.mxu0 0
        %3615 = vmatpush1.bf16.msra.mxu0 0
        %3616 = vmatprep.subr.bf16.mxu0 0
        %3617 = vmatpush1.bf16.msra.mxu0 0
        %3618 = vmatprep.subr.bf16.mxu0 0
        %3619 = vmatpush1.bf16.msra.mxu0 0
        %3620 = vmatprep.subr.bf16.mxu0 0
        %3621 = vmatpush1.bf16.msra.mxu0 0
        %3622 = vmatprep.subr.bf16.mxu0 0
        %3623 = vmatpush1.bf16.msra.mxu0 0
        %3624 = vmatprep.subr.bf16.mxu0 0
        %3625 = vmatpush1.bf16.msra.mxu0 0
        %3626 = vmatprep.subr.bf16.mxu0 0
        %3627 = vmatpush1.bf16.msra.mxu0 0
        %3628 = vmatprep.subr.bf16.mxu0 0
        %3629 = vmatpush1.bf16.msra.mxu0 0
        %3630 = vmatprep.subr.bf16.mxu0 0
        %3631 = vmatpush1.bf16.msra.mxu0 0
        %3632 = vmatprep.subr.bf16.mxu0 0
        %3633 = vmatpush1.bf16.msra.mxu0 0
        %3634 = vmatprep.mubr.bf16.mxu0 0
        %3635 = vmatmul.mubr.bf16.gmra.mrb[0].mxu0 %v3600
        %v3636 = vpop.f32.mrb[0].mxu0
        %v3637 = vadd.f32 %v3591, %v3636
        %v3638 = vpop.f32.mrb[0].mxu0
        %v3639 = vpop.f32.mrb[0].mxu0
        %v3640 = vpop.f32.mrb[0].mxu0
        %3641 = vdwg.mxu0
        %vm3642 = vcmp.gt.f32.partialorder %v3637, 20.0
        %v3643 = vmin.f32 %v3637, 20.0
        %v3644 = vmul.f32 %v3643, 1.442695
        %v3645 = vpow.pop %v3644
        %v3646 = vadd.f32 %v3645, 1.0
        %v3647 = vlog2.pop %v3646
        %v3648 = vmul.f32 %v3647, 0.6931472
        %v3649 = vsel %vm3642, %v3637, %v3648
        %v3650 = vld [vmem:[%s21] sm:$0xf]
        %v3651 = vld [vmem:[%s21 + $0x4] sm:$0xf]
        %v3652 = vld [vmem:[%s21 + $0x8] sm:$0xf]
        %v3653 = vld [vmem:[%s21 + $0xc] sm:$0xf]
        %v3654 = vld [vmem:[%s22] sm:$0x1]
        %v3656 = vlaneseq
        %v3657 = vshrl.u32 %v3656, 7
        %v3658 = vsub.s32 0, %v3657
        %v3659 = vrot.slane %v3654, %v3658
        %v3665 = vunpack.c.l.b16 %v3650
        %v3666 = vunpack.c.l.b16 %v3651
        %v3667 = vunpack.c.l.b16 %v3652
        %v3668 = vunpack.c.l.b16 %v3653
        %v3669 = vpack.c.b16 %v3666, %v3665
        %v3670 = vpack.c.b16 %v3668, %v3667
        %3673 = vmatprep.subr.bf16.mxu0 0
        %3674 = vmatpush1.bf16.msra.mxu0 %v3669
        %3675 = vmatprep.subr.bf16.mxu0 0
        %3676 = vmatpush1.bf16.msra.mxu0 %v3670
        %3677 = vmatprep.subr.bf16.mxu0 0
        %3678 = vmatpush1.bf16.msra.mxu0 0
        %3679 = vmatprep.subr.bf16.mxu0 0
        %3680 = vmatpush1.bf16.msra.mxu0 0
        %3681 = vmatprep.subr.bf16.mxu0 0
        %3682 = vmatpush1.bf16.msra.mxu0 0
        %3683 = vmatprep.subr.bf16.mxu0 0
        %3684 = vmatpush1.bf16.msra.mxu0 0
        %3685 = vmatprep.subr.bf16.mxu0 0
        %3686 = vmatpush1.bf16.msra.mxu0 0
        %3687 = vmatprep.subr.bf16.mxu0 0
        %3688 = vmatpush1.bf16.msra.mxu0 0
        %3689 = vmatprep.subr.bf16.mxu0 0
        %3690 = vmatpush1.bf16.msra.mxu0 0
        %3691 = vmatprep.subr.bf16.mxu0 0
        %3692 = vmatpush1.bf16.msra.mxu0 0
        %3693 = vmatprep.subr.bf16.mxu0 0
        %3694 = vmatpush1.bf16.msra.mxu0 0
        %3695 = vmatprep.subr.bf16.mxu0 0
        %3696 = vmatpush1.bf16.msra.mxu0 0
        %3697 = vmatprep.subr.bf16.mxu0 0
        %3698 = vmatpush1.bf16.msra.mxu0 0
        %3699 = vmatprep.subr.bf16.mxu0 0
        %3700 = vmatpush1.bf16.msra.mxu0 0
        %3701 = vmatprep.subr.bf16.mxu0 0
        %3702 = vmatpush1.bf16.msra.mxu0 0
        %3703 = vmatprep.subr.bf16.mxu0 0
        %3704 = vmatpush1.bf16.msra.mxu0 0
        %3705 = vmatprep.mubr.bf16.mxu0 0
        %3706 = vmatmul.mubr.bf16.gmra.mrb[0].mxu0 %v3417
        %v3707 = vpop.f32.mrb[0].mxu0
        %v3708 = vadd.f32 %v3659, %v3707
        %v3709 = vpop.f32.mrb[0].mxu0
        %v3710 = vpop.f32.mrb[0].mxu0
        %v3711 = vpop.f32.mrb[0].mxu0
        %3712 = vdwg.mxu0
        %v3713 = vmax.f32 %v3708, 0.0
        %v3714 = vld [vmem:[%s23] sm:$0xf]
        %v3715 = vld [vmem:[#allocation5] sm:$0x1]
        %v3716 = vpack.c.bf16 %v3713, %v3713
        %v3718 = vlaneseq
        %v3719 = vshrl.u32 %v3718, 7
        %v3720 = vsub.s32 0, %v3719
        %v3721 = vrot.slane %v3715, %v3720
        %v3724 = vsel %vm1082, %v3716, 0
        %v3727 = vsel %vm1333, %v3714, 0
        %3729 = vmatprep.subr.bf16.mxu0 0
        %3730 = vmatpush1.bf16.msra.mxu0 %v3727
        %3731 = vmatprep.subr.bf16.mxu0 0
        %3732 = vmatpush1.bf16.msra.mxu0 0
        %3733 = vmatprep.subr.bf16.mxu0 0
        %3734 = vmatpush1.bf16.msra.mxu0 0
        %3735 = vmatprep.subr.bf16.mxu0 0
        %3736 = vmatpush1.bf16.msra.mxu0 0
        %3737 = vmatprep.subr.bf16.mxu0 0
        %3738 = vmatpush1.bf16.msra.mxu0 0
        %3739 = vmatprep.subr.bf16.mxu0 0
        %3740 = vmatpush1.bf16.msra.mxu0 0
        %3741 = vmatprep.subr.bf16.mxu0 0
        %3742 = vmatpush1.bf16.msra.mxu0 0
        %3743 = vmatprep.subr.bf16.mxu0 0
        %3744 = vmatpush1.bf16.msra.mxu0 0
        %3745 = vmatprep.subr.bf16.mxu0 0
        %3746 = vmatpush1.bf16.msra.mxu0 0
        %3747 = vmatprep.subr.bf16.mxu0 0
        %3748 = vmatpush1.bf16.msra.mxu0 0
        %3749 = vmatprep.subr.bf16.mxu0 0
        %3750 = vmatpush1.bf16.msra.mxu0 0
        %3751 = vmatprep.subr.bf16.mxu0 0
        %3752 = vmatpush1.bf16.msra.mxu0 0
        %3753 = vmatprep.subr.bf16.mxu0 0
        %3754 = vmatpush1.bf16.msra.mxu0 0
        %3755 = vmatprep.subr.bf16.mxu0 0
        %3756 = vmatpush1.bf16.msra.mxu0 0
        %3757 = vmatprep.subr.bf16.mxu0 0
        %3758 = vmatpush1.bf16.msra.mxu0 0
        %3759 = vmatprep.subr.bf16.mxu0 0
        %3760 = vmatpush1.bf16.msra.mxu0 0
        %3761 = vmatprep.mubr.bf16.mxu0 0
        %3762 = vmatmul.mubr.bf16.gmra.mrb[0].mxu0 %v3724
        %v3763 = vpop.f32.mrb[0].mxu0
        %v3764 = vadd.f32 %v3721, %v3763
        %v3765 = vpop.f32.mrb[0].mxu0
        %v3766 = vpop.f32.mrb[0].mxu0
        %v3767 = vpop.f32.mrb[0].mxu0
        %3768 = vdwg.mxu0
        %v3769 = vsub.f32 0.0, %v3764
        %v3770 = vmul.f32 %v3769, 1.442695
        %v3771 = vpow.pop %v3770
        %v3772 = vadd.f32 %v3771, 1.0
        %v3773 = vrcp.pop %v3772
        %v3774 = vmul.f32 1.0, %v3773
        %3776 = vrot.lane.b32.xlu0 %v3649, 1
        %v3777 = vpop.permute.xlu0 %3776
        %3780 = vrot.lane.b32.xlu0 %v3774, 2
        %v3781 = vpop.permute.xlu0 %3780
        %vm3783 = vcmask 7168
        %v3784 = vsel %vm3783, %v3514, %v3777
        %vm3785 = vcmask 15360
        %v3786 = vsel %vm3785, %v3784, %v3781
        %vm3787 = vcmask 23552
        %v3788 = vsel %vm3787, %v3786, 0.0
        %v3791 = vunpack.c.l.s4 1966171168
        %v3792 = vunpack.c.0.s8 %v3791
        %v3793 = vlaneseq
        %v3794 = vshrl.u32 %v3793, 7
        %v3795 = vsub.s32 %v3792, %v3794
        %v3796 = vrot.slane %v3788, %v3795
        %v3797 = vcombine.high %v3796, %v3796
        %v3799 = vunpack.c.l.s4 1966171168
        %v3800 = vunpack.c.0.s8 %v3799
        %v3801 = vlaneseq
        %v3802 = vshrl.u32 %v3801, 7
        %v3803 = vsub.s32 %v3800, %v3802
        %v3804 = vrot.slane %v3796, %v3803
        %v3806 = vunpack.c.l.s4 1966171168
        %v3807 = vunpack.c.0.s8 %v3806
        %v3808 = vlaneseq
        %v3809 = vshrl.u32 %v3808, 7
        %v3810 = vsub.s32 %v3807, %v3809
        %v3811 = vrot.slane %v3797, %v3810
        %v3812 = vcombine.high %v3804, %v3804
        %v3813 = vcombine.high %v3811, %v3811
        %3818 = vst [vmem:[%s974] sm:$0x1] %v3804
        %3819 = vst [vmem:[%s974 + $0x1] sm:$0x1] %v3811
        %3820 = vst [vmem:[%s974 + $0x2] sm:$0x1] %v3812
        %3821 = vst [vmem:[%s974 + $0x3] sm:$0x1] %v3813
      $region128: #{market_transformer_forward.1} parent=119 // pred_fallthru
        _
      %s3822 = smul.u32 4, %s46
      %p3823 = scmp.lt.s32.totalorder %s3822, 7
      %s3824 = scalar_select %p3823, %s3822, 7
      %s3825 = scalar_lea.vmem %s25, %s3824
      // Predicated region
      $region129: #{market_transformer_forward.1} parent=119 // pred_check
        %p3826 = pneg %p662
      $region130: #{market_transformer_forward.1} parent=119 // pred_check_branch
        %3828 = sbr.rel (%p3826) target = $region132
      $region131: #{market_transformer_forward.1} parent=119 // pred_region
        %s3829 = smul.u32 4, %s46
      $region132: #{market_transformer_forward.1} parent=119 // pred_fallthru
        _
    $region120: #{market_transformer_forward.1} parent=5 // pred_fallthru
      _
    %p3830 = scmp.le.s32.totalorder 2, %s37
    // Predicated region
    $region133: #{market_transformer_forward.1} parent=5 // pred_check
      %p3831 = pneg %p3830
    $region134: #{market_transformer_forward.1} parent=5 // pred_check_branch
      %3833 = sbr.rel (%p3831) target = $region136
    $region135: #{market_transformer_forward.1} parent=5 // pred_region
      %s3834 = ssub.s32 %s37, 2
      // Predicated region
      $region137: #{market_transformer_forward.1} parent=135 // pred_check
        %p3835 = pneg %p668
      $region138: #{market_transformer_forward.1} parent=135 // pred_check_branch
        %3837 = sbr.rel (%p3835) target = $region140
      $region139: #{market_transformer_forward.1} parent=135 // pred_region
        %s3838 = smul.u32 4, %s48
        %p3839 = scmp.lt.s32.totalorder %s3838, 7
        %s3840 = scalar_select %p3839, %s3838, 7
        %s3841 = scalar_lea.vmem %s25, %s3840
      $region140: #{market_transformer_forward.1} parent=135 // pred_fallthru
        _
    $region136: #{market_transformer_forward.1} parent=5 // pred_fallthru
      _
  $region6: #{market_transformer_forward.1} parent=0 // loop_footer
    %s41 = sadd.s32 1, %s37
  $region7: #{market_transformer_forward.1} parent=0 // loop_footer_branch
    %36 = sbr.rel target = $region3
  $region8: #{market_transformer_forward.1} parent=0 // loop_exit
    _

</llo_original>
